<compile_context>
chip_gen: v5e
topology: v5e:2x2
jax: 0.10.0
libtpu: 0.0.40
codegen_flags: <defaults>
</compile_context>

<pallas_src>
import numpy as np
import jax
import jax.numpy as jnp
from jax.experimental import pallas as pl
from jax.experimental.pallas import tpu as pltpu

EPS = 1e-5  # PyTorch BatchNorm2d default eps


# ----------------------------------------------------------------------------
# Pallas kernels
# ----------------------------------------------------------------------------
def _mm_bias_silu_kernel(x_ref, w_ref, b_ref, o_ref):
    """Fused conv-as-matmul (+ folded BN) + SiLU:  o = silu(x @ w + b)."""
    acc = jnp.dot(x_ref[...], w_ref[...], preferred_element_type=jnp.float32)
    acc = acc + b_ref[...]
    o_ref[...] = (acc * jax.nn.sigmoid(acc)).astype(o_ref.dtype)


def _dual_mm_bias_silu_kernel(x_ref, w1_ref, b1_ref, w2_ref, b2_ref,
                              o1_ref, o2_ref):
    """cv1+cv2 fused: read x once, produce two SiLU(BN(conv1x1)) outputs."""
    xv = x_ref[...]
    a1 = jnp.dot(xv, w1_ref[...], preferred_element_type=jnp.float32)
    a1 = a1 + b1_ref[...]
    o1_ref[...] = (a1 * jax.nn.sigmoid(a1)).astype(o1_ref.dtype)
    a2 = jnp.dot(xv, w2_ref[...], preferred_element_type=jnp.float32)
    a2 = a2 + b2_ref[...]
    o2_ref[...] = (a2 * jax.nn.sigmoid(a2)).astype(o2_ref.dtype)


def _concat4_mm_bias_silu_kernel(x1_ref, x2_ref, x3_ref, x4_ref,
                                 w1_ref, w2_ref, w3_ref, w4_ref,
                                 b_ref, o_ref):
    """Fused concat([x1..x4], C) + 1x1 conv + BN + SiLU (concat never built)."""
    acc = jnp.dot(x1_ref[...], w1_ref[...], preferred_element_type=jnp.float32)
    acc = acc + jnp.dot(x2_ref[...], w2_ref[...],
                        preferred_element_type=jnp.float32)
    acc = acc + jnp.dot(x3_ref[...], w3_ref[...],
                        preferred_element_type=jnp.float32)
    acc = acc + jnp.dot(x4_ref[...], w4_ref[...],
                        preferred_element_type=jnp.float32)
    acc = acc + b_ref[...]
    o_ref[...] = (acc * jax.nn.sigmoid(acc)).astype(o_ref.dtype)


# ----------------------------------------------------------------------------
# Pallas call wrappers (row-tiled, parallel grid)
# ----------------------------------------------------------------------------
def _pick_row_tile(m):
    """Largest row tile (mult of 8) that divides M and yields >=2 grid steps."""
    for t in (2048, 1024, 512, 256, 128, 64, 32, 16, 8):
        if m % t == 0 and m // t >= 2:
            return t
    return m


_PARALLEL_1D = pltpu.CompilerParams(dimension_semantics=("parallel",))


def matmul_bias_silu(x_flat, w, b):
    """x_flat: (M, K), w: (K, Cout), b: (1, Cout) -> (M, Cout)."""
    M, K = x_flat.shape
    Cout = w.shape[1]
    tm = _pick_row_tile(M)
    return pl.pallas_call(
        _mm_bias_silu_kernel,
        out_shape=jax.ShapeDtypeStruct((M, Cout), x_flat.dtype),
        grid=(M // tm,),
        in_specs=[
            pl.BlockSpec((tm, K), lambda i: (i, 0)),
            pl.BlockSpec((K, Cout), lambda i: (0, 0)),
            pl.BlockSpec((1, Cout), lambda i: (0, 0)),
        ],
        out_specs=pl.BlockSpec((tm, Cout), lambda i: (i, 0)),
        compiler_params=_PARALLEL_1D,
    )(x_flat, w, b)


def dual_conv1x1_bn_silu(x_flat, w1, b1, w2, b2):
    """cv1 + cv2 fused: one pallas_call, two outputs."""
    M, K = x_flat.shape
    c1, c2 = w1.shape[1], w2.shape[1]
    tm = _pick_row_tile(M)
    return pl.pallas_call(
        _dual_mm_bias_silu_kernel,
        out_shape=(jax.ShapeDtypeStruct((M, c1), x_flat.dtype),
                   jax.ShapeDtypeStruct((M, c2), x_flat.dtype)),
        grid=(M // tm,),
        in_specs=[
            pl.BlockSpec((tm, K), lambda i: (i, 0)),
            pl.BlockSpec((K, c1), lambda i: (0, 0)),
            pl.BlockSpec((1, c1), lambda i: (0, 0)),
            pl.BlockSpec((K, c2), lambda i: (0, 0)),
            pl.BlockSpec((1, c2), lambda i: (0, 0)),
        ],
        out_specs=(pl.BlockSpec((tm, c1), lambda i: (i, 0)),
                   pl.BlockSpec((tm, c2), lambda i: (i, 0))),
        compiler_params=_PARALLEL_1D,
    )(x_flat, w1, b1, w2, b2)


def concat4_conv1x1_bn_silu(xs, ws, b):
    """silu(x1@w1 + x2@w2 + x3@w3 + x4@w4 + b) without building the concat."""
    M, ind = xs[0].shape
    Cout = ws[0].shape[1]
    tm = _pick_row_tile(M)
    x_spec = pl.BlockSpec((tm, ind), lambda i: (i, 0))
    w_spec = pl.BlockSpec((ind, Cout), lambda i: (0, 0))
    return pl.pallas_call(
        _concat4_mm_bias_silu_kernel,
        out_shape=jax.ShapeDtypeStruct((M, Cout), xs[0].dtype),
        grid=(M // tm,),
        in_specs=[x_spec, x_spec, x_spec, x_spec,
                  w_spec, w_spec, w_spec, w_spec,
                  pl.BlockSpec((1, Cout), lambda i: (0, 0))],
        out_specs=pl.BlockSpec((tm, Cout), lambda i: (i, 0)),
        compiler_params=_PARALLEL_1D,
    )(*xs, *ws, b)


# ----------------------------------------------------------------------------
# 3x3 conv = im2col (XLA data rearrangement) + one fused Pallas matmul
# ----------------------------------------------------------------------------
def _im2col_3x3(x_nhwc):
    """(N,H,W,C) -> (N*H*W, 9*C) with tap order (ky*3+kx), zero padding 1."""
    N, H, W, C = x_nhwc.shape
    xp = jnp.pad(x_nhwc, ((0, 0), (1, 1), (1, 1), (0, 0)))
    taps = [xp[:, ky:ky + H, kx:kx + W, :]
            for ky in range(3) for kx in range(3)]
    cols = jnp.concatenate(taps, axis=-1)          # (N, H, W, 9*C)
    return cols.reshape(N * H * W, 9 * C)


def conv3x3_bn_silu(x_nhwc, w_mat, b):
    """x_nhwc: (N,H,W,Cin), w_mat: (9*Cin, Cout), b: (1, Cout)."""
    N, H, W, _ = x_nhwc.shape
    cols = _im2col_3x3(x_nhwc)                     # K = 9*Cin
    y = matmul_bias_silu(cols, w_mat, b)
    return y.reshape(N, H, W, -1)


# ----------------------------------------------------------------------------
# Parameter construction (deterministic, synthetic) + BN folding
# ----------------------------------------------------------------------------
def make_conv_block_params(key, c1, c2, k):
    kw, kg, kb, km, kv = jax.random.split(key, 5)
    return {
        "w": 0.1 * jax.random.normal(kw, (c2, c1, k, k), jnp.float32),
        "gamma": 1.0 + 0.1 * jax.random.normal(kg, (c2,), jnp.float32),
        "beta": 0.1 * jax.random.normal(kb, (c2,), jnp.float32),
        "mean": 0.1 * jax.random.normal(km, (c2,), jnp.float32),
        "var": 1.0 + 0.1 * jnp.abs(jax.random.normal(kv, (c2,), jnp.float32)),
    }


def fold_1x1(p):
    scale = p["gamma"] / jnp.sqrt(p["var"] + EPS)
    w = (p["w"][:, :, 0, 0] * scale[:, None]).T          # (Cin, Cout)
    b = (p["beta"] - p["mean"] * scale)[None, :]         # (1, Cout)
    return w, b


def fold_3x3(p):
    scale = p["gamma"] / jnp.sqrt(p["var"] + EPS)
    wf = p["w"] * scale[:, None, None, None]             # (Cout, Cin, 3, 3)
    cout, cin = wf.shape[0], wf.shape[1]
    # row index = (ky*3 + kx)*Cin + cin, matching _im2col_3x3 tap order.
    w_mat = jnp.transpose(wf, (2, 3, 1, 0)).reshape(9 * cin, cout)
    b = (p["beta"] - p["mean"] * scale)[None, :]
    return w_mat, b


# ----------------------------------------------------------------------------
# ELANB forward (Pallas path)
# ----------------------------------------------------------------------------
def elanb_forward(x_nchw, raw_params):
    x = jnp.transpose(x_nchw, (0, 2, 3, 1))               # NCHW -> NHWC
    N, H, W, _ = x.shape
    M = N * H * W

    cv1_w, cv1_b = fold_1x1(raw_params["cv1"])
    cv2_w, cv2_b = fold_1x1(raw_params["cv2"])

    x_flat = x.reshape(M, -1)
    x1, x2 = dual_conv1x1_bn_silu(x_flat, cv1_w, cv1_b, cv2_w, cv2_b)
    ind = x1.shape[-1]

    y1 = x2.reshape(N, H, W, ind)
    for i in range(2):
        w_mat, b = fold_3x3(raw_params[f"cv3_{i}"])
        y1 = conv3x3_bn_silu(y1, w_mat, b)

    y2 = y1
    for i in range(2):
        w_mat, b = fold_3x3(raw_params[f"cv4_{i}"])
        y2 = conv3x3_bn_silu(y2, w_mat, b)

    out_w, out_b = fold_1x1(raw_params["out"])            # (4*ind, Cout)
    w_parts = [out_w[j * ind:(j + 1) * ind, :] for j in range(4)]
    out = concat4_conv1x1_bn_silu(
        [x1, x2, y1.reshape(M, ind), y2.reshape(M, ind)], w_parts, out_b)
    out = out.reshape(N, H, W, -1)
    return jnp.transpose(out, (0, 3, 1, 2))                # NHWC -> NCHW


# ----------------------------------------------------------------------------
# Pure-JAX reference (eval-mode BN), for correctness check
# ----------------------------------------------------------------------------
def _ref_conv_block(x, p):
    k = p["w"].shape[-1]           # static (from array shape), jit-safe
    pad = k // 2
    y = jax.lax.conv_general_dilated(
        x, p["w"], window_strides=(1, 1),
        padding=[(pad, pad), (pad, pad)],
        dimension_numbers=("NCHW", "OIHW", "NCHW"))
    scale = p["gamma"] / jnp.sqrt(p["var"] + EPS)
    bias = p["beta"] - p["mean"] * scale
    y = y * scale[None, :, None, None] + bias[None, :, None, None]
    return y * jax.nn.sigmoid(y)


def elanb_reference(x, rp):
    x1 = _ref_conv_block(x, rp["cv1"])
    x2 = _ref_conv_block(x, rp["cv2"])
    y1 = x2
    for i in range(2):
        y1 = _ref_conv_block(y1, rp[f"cv3_{i}"])
    y2 = y1
    for i in range(2):
        y2 = _ref_conv_block(y2, rp[f"cv4_{i}"])
    cat = jnp.concatenate([x1, x2, y1, y2], axis=1)
    return _ref_conv_block(cat, rp["out"])


# ----------------------------------------------------------------------------
if __name__ == "__main__":
    # ELANB(in_dims=8, out_dims=16, expand_ratio=0.5) -> ind_dims = 4
    N, C_IN, H, W = 2, 8, 16, 16
    C_OUT = 16
    IND = int(C_IN * 0.5)

    key = jax.random.PRNGKey(0)
    kx, k1, k2, k3a, k3b, k4a, k4b, ko = jax.random.split(key, 8)

    raw_params = {
        "cv1": make_conv_block_params(k1, C_IN, IND, 1),
        "cv2": make_conv_block_params(k2, C_IN, IND, 1),
        "cv3_0": make_conv_block_params(k3a, IND, IND, 3),
        "cv3_1": make_conv_block_params(k3b, IND, IND, 3),
        "cv4_0": make_conv_block_params(k4a, IND, IND, 3),
        "cv4_1": make_conv_block_params(k4b, IND, IND, 3),
        "out": make_conv_block_params(ko, 4 * IND, C_OUT, 1),
    }

    x = jax.random.normal(kx, (N, C_IN, H, W), jnp.float32)

    out = jax.jit(elanb_forward)(x, raw_params)
    out = jax.block_until_ready(out)
    assert out.shape == (N, C_OUT, H, W), out.shape

    ref = jax.jit(elanb_reference)(x, raw_params)
    ref = jax.block_until_ready(ref)
    np.testing.assert_allclose(np.asarray(out), np.asarray(ref),
                               rtol=2e-3, atol=2e-3)

    print("KERNEL_OK")
</pallas_src>

<mosaic_0001>
module attributes {stable_mosaic.version = 11 : i64} {
  func.func @_dual_mm_bias_silu_kernel(%arg0: i32, %arg1: memref<256x8xf32, #tpu.memory_space<vmem>>, %arg2: memref<8x4xf32, #tpu.memory_space<vmem>>, %arg3: memref<1x4xf32, #tpu.memory_space<vmem>>, %arg4: memref<8x4xf32, #tpu.memory_space<vmem>>, %arg5: memref<1x4xf32, #tpu.memory_space<vmem>>, %arg6: memref<256x4xf32, #tpu.memory_space<vmem>>, %arg7: memref<256x4xf32, #tpu.memory_space<vmem>>) attributes {dimension_semantics = [#tpu.dimension_semantics<parallel>], iteration_bounds = array<i64: 2>, scalar_prefetch = 0 : i64, scratch_operands = 0 : i64, tpu.core_type = #tpu.core_type<tc>, window_params = [{transform_indices = @transform_0, window_bounds = array<i64: 256, 8>}, {pipeline_mode = #tpu.pipeline_mode<synchronous>, transform_indices = @transform_1, window_bounds = array<i64: 8, 4>}, {pipeline_mode = #tpu.pipeline_mode<synchronous>, transform_indices = @transform_2, window_bounds = array<i64: 1, 4>}, {pipeline_mode = #tpu.pipeline_mode<synchronous>, transform_indices = @transform_3, window_bounds = array<i64: 8, 4>}, {pipeline_mode = #tpu.pipeline_mode<synchronous>, transform_indices = @transform_4, window_bounds = array<i64: 1, 4>}, {transform_indices = @transform_5, window_bounds = array<i64: 256, 4>}, {transform_indices = @transform_6, window_bounds = array<i64: 256, 4>}]} {
    %c0 = arith.constant 0 : index
    %c0_0 = arith.constant 0 : index
    %0 = vector.load %arg1[%c0, %c0_0] : memref<256x8xf32, #tpu.memory_space<vmem>>, vector<256x8xf32>
    %c0_1 = arith.constant 0 : index
    %c0_2 = arith.constant 0 : index
    %1 = vector.load %arg2[%c0_1, %c0_2] : memref<8x4xf32, #tpu.memory_space<vmem>>, vector<8x4xf32>
    %cst = arith.constant dense<0.000000e+00> : vector<256x4xf32>
    %2 = tpu.matmul %0, %1, %cst {dimension_numbers = #tpu.dot_dimension_numbers<[1], [0], [0], [1], [0, 0, 1, 1], [], []>} : vector<256x8xf32>, vector<8x4xf32>, vector<256x4xf32> -> vector<256x4xf32>
    %c0_3 = arith.constant 0 : index
    %c0_4 = arith.constant 0 : index
    %3 = vector.load %arg3[%c0_3, %c0_4] : memref<1x4xf32, #tpu.memory_space<vmem>>, vector<1x4xf32>
    %4 = vector.broadcast %3 : vector<1x4xf32> to vector<256x4xf32>
    %5 = arith.addf %2, %4 : vector<256x4xf32>
    %6 = arith.negf %5 : vector<256x4xf32>
    %7 = math.exp %6 : vector<256x4xf32>
    %cst_5 = arith.constant 1.000000e+00 : f32
    %8 = vector.broadcast %cst_5 : f32 to vector<256x4xf32>
    %9 = arith.addf %8, %7 : vector<256x4xf32>
    %10 = arith.divf %8, %9 : vector<256x4xf32>
    %11 = arith.mulf %5, %10 : vector<256x4xf32>
    %c0_6 = arith.constant 0 : index
    %c0_7 = arith.constant 0 : index
    %12 = vector.load %arg6[%c0_6, %c0_7] : memref<256x4xf32, #tpu.memory_space<vmem>>, vector<256x4xf32>
    tpu.vector_store %arg6[%c0_6, %c0_7], %11 {strides = array<i32>} : memref<256x4xf32, #tpu.memory_space<vmem>>, vector<256x4xf32>,
    %c0_8 = arith.constant 0 : index
    %c0_9 = arith.constant 0 : index
    %13 = vector.load %arg4[%c0_8, %c0_9] : memref<8x4xf32, #tpu.memory_space<vmem>>, vector<8x4xf32>
    %cst_10 = arith.constant dense<0.000000e+00> : vector<256x4xf32>
    %14 = tpu.matmul %0, %13, %cst_10 {dimension_numbers = #tpu.dot_dimension_numbers<[1], [0], [0], [1], [0, 0, 1, 1], [], []>} : vector<256x8xf32>, vector<8x4xf32>, vector<256x4xf32> -> vector<256x4xf32>
    %c0_11 = arith.constant 0 : index
    %c0_12 = arith.constant 0 : index
    %15 = vector.load %arg5[%c0_11, %c0_12] : memref<1x4xf32, #tpu.memory_space<vmem>>, vector<1x4xf32>
    %16 = vector.broadcast %15 : vector<1x4xf32> to vector<256x4xf32>
    %17 = arith.addf %14, %16 : vector<256x4xf32>
    %18 = arith.negf %17 : vector<256x4xf32>
    %19 = math.exp %18 : vector<256x4xf32>
    %cst_13 = arith.constant 1.000000e+00 : f32
    %20 = vector.broadcast %cst_13 : f32 to vector<256x4xf32>
    %21 = arith.addf %20, %19 : vector<256x4xf32>
    %22 = arith.divf %20, %21 : vector<256x4xf32>
    %23 = arith.mulf %17, %22 : vector<256x4xf32>
    %c0_14 = arith.constant 0 : index
    %c0_15 = arith.constant 0 : index
    %24 = vector.load %arg7[%c0_14, %c0_15] : memref<256x4xf32, #tpu.memory_space<vmem>>, vector<256x4xf32>
    tpu.vector_store %arg7[%c0_14, %c0_15], %23 {strides = array<i32>} : memref<256x4xf32, #tpu.memory_space<vmem>>, vector<256x4xf32>,
    return
  }
  func.func @transform_0(%arg0: i32) -> (i32, i32) {
    %c0_i32 = arith.constant 0 : i32
    %c0_i32_0 = arith.constant 0 : i32
    return %arg0, %c0_i32 : i32, i32
  }
  func.func @transform_1(%arg0: i32) -> (i32, i32) {
    %c0_i32 = arith.constant 0 : i32
    %c0_i32_0 = arith.constant 0 : i32
    %c0_i32_1 = arith.constant 0 : i32
    return %c0_i32, %c0_i32_0 : i32, i32
  }
  func.func @transform_2(%arg0: i32) -> (i32, i32) {
    %c0_i32 = arith.constant 0 : i32
    %c0_i32_0 = arith.constant 0 : i32
    %c0_i32_1 = arith.constant 0 : i32
    return %c0_i32, %c0_i32_0 : i32, i32
  }
  func.func @transform_3(%arg0: i32) -> (i32, i32) {
    %c0_i32 = arith.constant 0 : i32
    %c0_i32_0 = arith.constant 0 : i32
    %c0_i32_1 = arith.constant 0 : i32
    return %c0_i32, %c0_i32_0 : i32, i32
  }
  func.func @transform_4(%arg0: i32) -> (i32, i32) {
    %c0_i32 = arith.constant 0 : i32
    %c0_i32_0 = arith.constant 0 : i32
    %c0_i32_1 = arith.constant 0 : i32
    return %c0_i32, %c0_i32_0 : i32, i32
  }
  func.func @transform_5(%arg0: i32) -> (i32, i32) {
    %c0_i32 = arith.constant 0 : i32
    %c0_i32_0 = arith.constant 0 : i32
    return %arg0, %c0_i32 : i32, i32
  }
  func.func @transform_6(%arg0: i32) -> (i32, i32) {
    %c0_i32 = arith.constant 0 : i32
    %c0_i32_0 = arith.constant 0 : i32
    return %arg0, %c0_i32 : i32, i32
  }
}

module attributes {stable_mosaic.version = 11 : i64} {
  func.func @_mm_bias_silu_kernel(%arg0: i32, %arg1: memref<256x36xf32, #tpu.memory_space<vmem>>, %arg2: memref<36x4xf32, #tpu.memory_space<vmem>>, %arg3: memref<1x4xf32, #tpu.memory_space<vmem>>, %arg4: memref<256x4xf32, #tpu.memory_space<vmem>>) attributes {dimension_semantics = [#tpu.dimension_semantics<parallel>], iteration_bounds = array<i64: 2>, scalar_prefetch = 0 : i64, scratch_operands = 0 : i64, tpu.core_type = #tpu.core_type<tc>, window_params = [{transform_indices = @transform_0, window_bounds = array<i64: 256, 36>}, {pipeline_mode = #tpu.pipeline_mode<synchronous>, transform_indices = @transform_1, window_bounds = array<i64: 36, 4>}, {pipeline_mode = #tpu.pipeline_mode<synchronous>, transform_indices = @transform_2, window_bounds = array<i64: 1, 4>}, {transform_indices = @transform_3, window_bounds = array<i64: 256, 4>}]} {
    %c0 = arith.constant 0 : index
    %c0_0 = arith.constant 0 : index
    %0 = vector.load %arg1[%c0, %c0_0] : memref<256x36xf32, #tpu.memory_space<vmem>>, vector<256x36xf32>
    %c0_1 = arith.constant 0 : index
    %c0_2 = arith.constant 0 : index
    %1 = vector.load %arg2[%c0_1, %c0_2] : memref<36x4xf32, #tpu.memory_space<vmem>>, vector<36x4xf32>
    %cst = arith.constant dense<0.000000e+00> : vector<256x4xf32>
    %2 = tpu.matmul %0, %1, %cst {dimension_numbers = #tpu.dot_dimension_numbers<[1], [0], [0], [1], [0, 0, 1, 1], [], []>} : vector<256x36xf32>, vector<36x4xf32>, vector<256x4xf32> -> vector<256x4xf32>
    %c0_3 = arith.constant 0 : index
    %c0_4 = arith.constant 0 : index
    %3 = vector.load %arg3[%c0_3, %c0_4] : memref<1x4xf32, #tpu.memory_space<vmem>>, vector<1x4xf32>
    %4 = vector.broadcast %3 : vector<1x4xf32> to vector<256x4xf32>
    %5 = arith.addf %2, %4 : vector<256x4xf32>
    %6 = arith.negf %5 : vector<256x4xf32>
    %7 = math.exp %6 : vector<256x4xf32>
    %cst_5 = arith.constant 1.000000e+00 : f32
    %8 = vector.broadcast %cst_5 : f32 to vector<256x4xf32>
    %9 = arith.addf %8, %7 : vector<256x4xf32>
    %10 = arith.divf %8, %9 : vector<256x4xf32>
    %11 = arith.mulf %5, %10 : vector<256x4xf32>
    %c0_6 = arith.constant 0 : index
    %c0_7 = arith.constant 0 : index
    %12 = vector.load %arg4[%c0_6, %c0_7] : memref<256x4xf32, #tpu.memory_space<vmem>>, vector<256x4xf32>
    tpu.vector_store %arg4[%c0_6, %c0_7], %11 {strides = array<i32>} : memref<256x4xf32, #tpu.memory_space<vmem>>, vector<256x4xf32>,
    return
  }
  func.func @transform_0(%arg0: i32) -> (i32, i32) {
    %c0_i32 = arith.constant 0 : i32
    %c0_i32_0 = arith.constant 0 : i32
    return %arg0, %c0_i32 : i32, i32
  }
  func.func @transform_1(%arg0: i32) -> (i32, i32) {
    %c0_i32 = arith.constant 0 : i32
    %c0_i32_0 = arith.constant 0 : i32
    %c0_i32_1 = arith.constant 0 : i32
    return %c0_i32, %c0_i32_0 : i32, i32
  }
  func.func @transform_2(%arg0: i32) -> (i32, i32) {
    %c0_i32 = arith.constant 0 : i32
    %c0_i32_0 = arith.constant 0 : i32
    %c0_i32_1 = arith.constant 0 : i32
    return %c0_i32, %c0_i32_0 : i32, i32
  }
  func.func @transform_3(%arg0: i32) -> (i32, i32) {
    %c0_i32 = arith.constant 0 : i32
    %c0_i32_0 = arith.constant 0 : i32
    return %arg0, %c0_i32 : i32, i32
  }
}

module attributes {stable_mosaic.version = 11 : i64} {
  func.func @_concat4_mm_bias_silu_kernel(%arg0: i32, %arg1: memref<256x4xf32, #tpu.memory_space<vmem>>, %arg2: memref<256x4xf32, #tpu.memory_space<vmem>>, %arg3: memref<256x4xf32, #tpu.memory_space<vmem>>, %arg4: memref<256x4xf32, #tpu.memory_space<vmem>>, %arg5: memref<4x16xf32, #tpu.memory_space<vmem>>, %arg6: memref<4x16xf32, #tpu.memory_space<vmem>>, %arg7: memref<4x16xf32, #tpu.memory_space<vmem>>, %arg8: memref<4x16xf32, #tpu.memory_space<vmem>>, %arg9: memref<1x16xf32, #tpu.memory_space<vmem>>, %arg10: memref<256x16xf32, #tpu.memory_space<vmem>>) attributes {dimension_semantics = [#tpu.dimension_semantics<parallel>], iteration_bounds = array<i64: 2>, scalar_prefetch = 0 : i64, scratch_operands = 0 : i64, tpu.core_type = #tpu.core_type<tc>, window_params = [{transform_indices = @transform_0, window_bounds = array<i64: 256, 4>}, {transform_indices = @transform_1, window_bounds = array<i64: 256, 4>}, {transform_indices = @transform_2, window_bounds = array<i64: 256, 4>}, {transform_indices = @transform_3, window_bounds = array<i64: 256, 4>}, {pipeline_mode = #tpu.pipeline_mode<synchronous>, transform_indices = @transform_4, window_bounds = array<i64: 4, 16>}, {pipeline_mode = #tpu.pipeline_mode<synchronous>, transform_indices = @transform_5, window_bounds = array<i64: 4, 16>}, {pipeline_mode = #tpu.pipeline_mode<synchronous>, transform_indices = @transform_6, window_bounds = array<i64: 4, 16>}, {pipeline_mode = #tpu.pipeline_mode<synchronous>, transform_indices = @transform_7, window_bounds = array<i64: 4, 16>}, {pipeline_mode = #tpu.pipeline_mode<synchronous>, transform_indices = @transform_8, window_bounds = array<i64: 1, 16>}, {transform_indices = @transform_9, window_bounds = array<i64: 256, 16>}]} {
    %c0 = arith.constant 0 : index
    %c0_0 = arith.constant 0 : index
    %0 = vector.load %arg1[%c0, %c0_0] : memref<256x4xf32, #tpu.memory_space<vmem>>, vector<256x4xf32>
    %c0_1 = arith.constant 0 : index
    %c0_2 = arith.constant 0 : index
    %1 = vector.load %arg5[%c0_1, %c0_2] : memref<4x16xf32, #tpu.memory_space<vmem>>, vector<4x16xf32>
    %cst = arith.constant dense<0.000000e+00> : vector<256x16xf32>
    %2 = tpu.matmul %0, %1, %cst {dimension_numbers = #tpu.dot_dimension_numbers<[1], [0], [0], [1], [0, 0, 1, 1], [], []>} : vector<256x4xf32>, vector<4x16xf32>, vector<256x16xf32> -> vector<256x16xf32>
    %c0_3 = arith.constant 0 : index
    %c0_4 = arith.constant 0 : index
    %3 = vector.load %arg2[%c0_3, %c0_4] : memref<256x4xf32, #tpu.memory_space<vmem>>, vector<256x4xf32>
    %c0_5 = arith.constant 0 : index
    %c0_6 = arith.constant 0 : index
    %4 = vector.load %arg6[%c0_5, %c0_6] : memref<4x16xf32, #tpu.memory_space<vmem>>, vector<4x16xf32>
    %cst_7 = arith.constant dense<0.000000e+00> : vector<256x16xf32>
    %5 = tpu.matmul %3, %4, %cst_7 {dimension_numbers = #tpu.dot_dimension_numbers<[1], [0], [0], [1], [0, 0, 1, 1], [], []>} : vector<256x4xf32>, vector<4x16xf32>, vector<256x16xf32> -> vector<256x16xf32>
    %6 = arith.addf %2, %5 : vector<256x16xf32>
    %c0_8 = arith.constant 0 : index
    %c0_9 = arith.constant 0 : index
    %7 = vector.load %arg3[%c0_8, %c0_9] : memref<256x4xf32, #tpu.memory_space<vmem>>, vector<256x4xf32>
    %c0_10 = arith.constant 0 : index
    %c0_11 = arith.constant 0 : index
    %8 = vector.load %arg7[%c0_10, %c0_11] : memref<4x16xf32, #tpu.memory_space<vmem>>, vector<4x16xf32>
    %cst_12 = arith.constant dense<0.000000e+00> : vector<256x16xf32>
    %9 = tpu.matmul %7, %8, %cst_12 {dimension_numbers = #tpu.dot_dimension_numbers<[1], [0], [0], [1], [0, 0, 1, 1], [], []>} : vector<256x4xf32>, vector<4x16xf32>, vector<256x16xf32> -> vector<256x16xf32>
    %10 = arith.addf %6, %9 : vector<256x16xf32>
    %c0_13 = arith.constant 0 : index
    %c0_14 = arith.constant 0 : index
    %11 = vector.load %arg4[%c0_13, %c0_14] : memref<256x4xf32, #tpu.memory_space<vmem>>, vector<256x4xf32>
    %c0_15 = arith.constant 0 : index
    %c0_16 = arith.constant 0 : index
    %12 = vector.load %arg8[%c0_15, %c0_16] : memref<4x16xf32, #tpu.memory_space<vmem>>, vector<4x16xf32>
    %cst_17 = arith.constant dense<0.000000e+00> : vector<256x16xf32>
    %13 = tpu.matmul %11, %12, %cst_17 {dimension_numbers = #tpu.dot_dimension_numbers<[1], [0], [0], [1], [0, 0, 1, 1], [], []>} : vector<256x4xf32>, vector<4x16xf32>, vector<256x16xf32> -> vector<256x16xf32>
    %14 = arith.addf %10, %13 : vector<256x16xf32>
    %c0_18 = arith.constant 0 : index
    %c0_19 = arith.constant 0 : index
    %15 = vector.load %arg9[%c0_18, %c0_19] : memref<1x16xf32, #tpu.memory_space<vmem>>, vector<1x16xf32>
    %16 = vector.broadcast %15 : vector<1x16xf32> to vector<256x16xf32>
    %17 = arith.addf %14, %16 : vector<256x16xf32>
    %18 = arith.negf %17 : vector<256x16xf32>
    %19 = math.exp %18 : vector<256x16xf32>
    %cst_20 = arith.constant 1.000000e+00 : f32
    %20 = vector.broadcast %cst_20 : f32 to vector<256x16xf32>
    %21 = arith.addf %20, %19 : vector<256x16xf32>
    %22 = arith.divf %20, %21 : vector<256x16xf32>
    %23 = arith.mulf %17, %22 : vector<256x16xf32>
    %c0_21 = arith.constant 0 : index
    %c0_22 = arith.constant 0 : index
    %24 = vector.load %arg10[%c0_21, %c0_22] : memref<256x16xf32, #tpu.memory_space<vmem>>, vector<256x16xf32>
    tpu.vector_store %arg10[%c0_21, %c0_22], %23 {strides = array<i32>} : memref<256x16xf32, #tpu.memory_space<vmem>>, vector<256x16xf32>,
    return
  }
  func.func @transform_0(%arg0: i32) -> (i32, i32) {
    %c0_i32 = arith.constant 0 : i32
    %c0_i32_0 = arith.constant 0 : i32
    return %arg0, %c0_i32 : i32, i32
  }
  func.func @transform_1(%arg0: i32) -> (i32, i32) {
    %c0_i32 = arith.constant 0 : i32
    %c0_i32_0 = arith.constant 0 : i32
    return %arg0, %c0_i32 : i32, i32
  }
  func.func @transform_2(%arg0: i32) -> (i32, i32) {
    %c0_i32 = arith.constant 0 : i32
    %c0_i32_0 = arith.constant 0 : i32
    return %arg0, %c0_i32 : i32, i32
  }
  func.func @transform_3(%arg0: i32) -> (i32, i32) {
    %c0_i32 = arith.constant 0 : i32
    %c0_i32_0 = arith.constant 0 : i32
    return %arg0, %c0_i32 : i32, i32
  }
  func.func @transform_4(%arg0: i32) -> (i32, i32) {
    %c0_i32 = arith.constant 0 : i32
    %c0_i32_0 = arith.constant 0 : i32
    %c0_i32_1 = arith.constant 0 : i32
    return %c0_i32, %c0_i32_0 : i32, i32
  }
  func.func @transform_5(%arg0: i32) -> (i32, i32) {
    %c0_i32 = arith.constant 0 : i32
    %c0_i32_0 = arith.constant 0 : i32
    %c0_i32_1 = arith.constant 0 : i32
    return %c0_i32, %c0_i32_0 : i32, i32
  }
  func.func @transform_6(%arg0: i32) -> (i32, i32) {
    %c0_i32 = arith.constant 0 : i32
    %c0_i32_0 = arith.constant 0 : i32
    %c0_i32_1 = arith.constant 0 : i32
    return %c0_i32, %c0_i32_0 : i32, i32
  }
  func.func @transform_7(%arg0: i32) -> (i32, i32) {
    %c0_i32 = arith.constant 0 : i32
    %c0_i32_0 = arith.constant 0 : i32
    %c0_i32_1 = arith.constant 0 : i32
    return %c0_i32, %c0_i32_0 : i32, i32
  }
  func.func @transform_8(%arg0: i32) -> (i32, i32) {
    %c0_i32 = arith.constant 0 : i32
    %c0_i32_0 = arith.constant 0 : i32
    %c0_i32_1 = arith.constant 0 : i32
    return %c0_i32, %c0_i32_0 : i32, i32
  }
  func.func @transform_9(%arg0: i32) -> (i32, i32) {
    %c0_i32 = arith.constant 0 : i32
    %c0_i32_0 = arith.constant 0 : i32
    return %arg0, %c0_i32 : i32, i32
  }
}

</mosaic_0001>

<llo_original>
// kernel: elanb_forward.6
$region0: #{elanb_forward.6}
  #allocation0 [shape = 'u32[]', space=smem, size = 0x4, offset = 0x4, fixed_abs, tag = 'smem constant byte address 0x4 - core index']
  #allocation1 [shape = 'u32[72,128]{1,0:T(1,128)}', space=vmem, size = 0x9000, scoped, tag = 'internal scratch']
  %s0 = inlined_call_operand.vmem [shape: f32[512,8], index: 0, kind: input, shape index: {}]
  %s1 = inlined_call_operand.vmem [shape: f32[8,4], index: 1, kind: input, shape index: {}]
  %s2 = inlined_call_operand.vmem [shape: f32[1,4], index: 2, kind: input, shape index: {}]
  %s3 = inlined_call_operand.vmem [shape: f32[8,4], index: 3, kind: input, shape index: {}]
  %s4 = inlined_call_operand.vmem [shape: f32[1,4], index: 4, kind: input, shape index: {}]
  %s5 = inlined_call_operand.vmem [shape: f32[512,4], index: 5, kind: output, shape index: {0}]
  %s6 = inlined_call_operand.vmem [shape: f32[512,4], index: 6, kind: output, shape index: {1}]
  %7 = xla_tuple %s5, %s6
  %s8 = sld [smem:[#allocation0]]
  $region61: #{elanb_forward.6} parent=0
    _
  %s10 = ssub.s32 1, %s8
  %s11 = scalar_select 0, %s10, %s8
  loop: start=0, step=1, limit=4
  $region2: #{elanb_forward.6} parent=0 // loop_pre_header
    _
  $region3: #{elanb_forward.6} parent=0 // loop_header
    %s13 = sphi 0, %s17
    %p14 = scmp.ge.s32.totalorder %s13, 4
    %s23 = sphi 0, %s25
    %s26 = sphi 0, %s23
    %s27 = sphi 0, %s26
    %s43 = sphi 0, %s27
    %s47 = sphi 0, %s47
    %s49 = sphi 0, %s47
    %s50 = sphi 0, %s49
    %s64 = sphi 0, %s50
    %s68 = sphi 0, %s68
    %s70 = sphi 0, %s68
    %s71 = sphi 0, %s70
    %s85 = sphi 0, %s71
    %s89 = sphi 0, %s89
    %s91 = sphi 0, %s89
    %s92 = sphi 0, %s91
    %s106 = sphi 0, %s92
    %s110 = sphi 0, %s110
    %s112 = sphi 0, %s110
    %s113 = sphi 0, %s112
    %s127 = sphi 0, %s113
    %s133 = sphi 0, %s135
    %s136 = sphi 0, %s133
    %s137 = sphi 0, %s136
    %s153 = sphi 0, %s137
    %s159 = sphi 0, %s161
    %s162 = sphi 0, %s159
    %s163 = sphi 0, %s162
    %s179 = sphi 0, %s163
  $region4: #{elanb_forward.6} parent=0 // loop_header_branch
    %16 = sbr.rel (%p14) target = $region8
  $region5: #{elanb_forward.6} parent=0 // loop_body
    %s18 = ssub.s32 %s13, 1
    %s19 = ssub.s32 %s13, 2
    %s20 = sadd.s32 %s13, 1
    %s21 = ssub.s32 %s13, %s20
    %p22 = scmp.eq.s32.totalorder %s21, 0
    %s24 = sadd.s32 %s23, 1
    %s25 = scalar_select %p22, %s23, %s24
    %p28 = pneg %p22
    %p29 = scmp.eq.s32.totalorder %s13, 1
    %p30 = por %p28, %p29
    %p31 = scmp.ne.s32.totalorder %s23, %s26
    %p32 = scmp.eq.s32.totalorder %s13, 0
    %p33 = por %p31, %p32
    %p34 = scmp.ne.s32.totalorder %s23, %s26
    %p35 = scmp.eq.s32.totalorder %s18, 1
    %p36 = por %p34, %p35
    %p37 = scmp.ne.s32.totalorder %s26, %s27
    %p38 = scmp.eq.s32.totalorder %s18, 0
    %p39 = por %p37, %p38
    %p40 = scmp.ne.s32.totalorder %s26, %s27
    %p41 = scmp.eq.s32.totalorder %s19, 1
    %p42 = por %p40, %p41
    %p44 = scmp.ne.s32.totalorder %s27, %s43
    %p45 = scmp.eq.s32.totalorder %s19, 0
    %p46 = por %p44, %p45
    %s48 = sadd.s32 %s47, 1
    %p51 = scmp.eq.s32.totalorder %s13, 1
    %p52 = scmp.ne.s32.totalorder %s47, %s49
    %p53 = scmp.eq.s32.totalorder %s13, 0
    %p54 = por %p52, %p53
    %p55 = scmp.ne.s32.totalorder %s47, %s49
    %p56 = scmp.eq.s32.totalorder %s18, 1
    %p57 = por %p55, %p56
    %p58 = scmp.ne.s32.totalorder %s49, %s50
    %p59 = scmp.eq.s32.totalorder %s18, 0
    %p60 = por %p58, %p59
    %p61 = scmp.ne.s32.totalorder %s49, %s50
    %p62 = scmp.eq.s32.totalorder %s19, 1
    %p63 = por %p61, %p62
    %p65 = scmp.ne.s32.totalorder %s50, %s64
    %p66 = scmp.eq.s32.totalorder %s19, 0
    %p67 = por %p65, %p66
    %s69 = sadd.s32 %s68, 1
    %p72 = scmp.eq.s32.totalorder %s13, 1
    %p73 = scmp.ne.s32.totalorder %s68, %s70
    %p74 = scmp.eq.s32.totalorder %s13, 0
    %p75 = por %p73, %p74
    %p76 = scmp.ne.s32.totalorder %s68, %s70
    %p77 = scmp.eq.s32.totalorder %s18, 1
    %p78 = por %p76, %p77
    %p79 = scmp.ne.s32.totalorder %s70, %s71
    %p80 = scmp.eq.s32.totalorder %s18, 0
    %p81 = por %p79, %p80
    %p82 = scmp.ne.s32.totalorder %s70, %s71
    %p83 = scmp.eq.s32.totalorder %s19, 1
    %p84 = por %p82, %p83
    %p86 = scmp.ne.s32.totalorder %s71, %s85
    %p87 = scmp.eq.s32.totalorder %s19, 0
    %p88 = por %p86, %p87
    %s90 = sadd.s32 %s89, 1
    %p93 = scmp.eq.s32.totalorder %s13, 1
    %p94 = scmp.ne.s32.totalorder %s89, %s91
    %p95 = scmp.eq.s32.totalorder %s13, 0
    %p96 = por %p94, %p95
    %p97 = scmp.ne.s32.totalorder %s89, %s91
    %p98 = scmp.eq.s32.totalorder %s18, 1
    %p99 = por %p97, %p98
    %p100 = scmp.ne.s32.totalorder %s91, %s92
    %p101 = scmp.eq.s32.totalorder %s18, 0
    %p102 = por %p100, %p101
    %p103 = scmp.ne.s32.totalorder %s91, %s92
    %p104 = scmp.eq.s32.totalorder %s19, 1
    %p105 = por %p103, %p104
    %p107 = scmp.ne.s32.totalorder %s92, %s106
    %p108 = scmp.eq.s32.totalorder %s19, 0
    %p109 = por %p107, %p108
    %s111 = sadd.s32 %s110, 1
    %p114 = scmp.eq.s32.totalorder %s13, 1
    %p115 = scmp.ne.s32.totalorder %s110, %s112
    %p116 = scmp.eq.s32.totalorder %s13, 0
    %p117 = por %p115, %p116
    %p118 = scmp.ne.s32.totalorder %s110, %s112
    %p119 = scmp.eq.s32.totalorder %s18, 1
    %p120 = por %p118, %p119
    %p121 = scmp.ne.s32.totalorder %s112, %s113
    %p122 = scmp.eq.s32.totalorder %s18, 0
    %p123 = por %p121, %p122
    %p124 = scmp.ne.s32.totalorder %s112, %s113
    %p125 = scmp.eq.s32.totalorder %s19, 1
    %p126 = por %p124, %p125
    %p128 = scmp.ne.s32.totalorder %s113, %s127
    %p129 = scmp.eq.s32.totalorder %s19, 0
    %p130 = por %p128, %p129
    %s131 = ssub.s32 %s13, %s20
    %p132 = scmp.eq.s32.totalorder %s131, 0
    %s134 = sadd.s32 %s133, 1
    %s135 = scalar_select %p132, %s133, %s134
    %p138 = pneg %p132
    %p139 = scmp.eq.s32.totalorder %s13, 1
    %p140 = por %p138, %p139
    %p141 = scmp.ne.s32.totalorder %s133, %s136
    %p142 = scmp.eq.s32.totalorder %s13, 0
    %p143 = por %p141, %p142
    %p144 = scmp.ne.s32.totalorder %s133, %s136
    %p145 = scmp.eq.s32.totalorder %s18, 1
    %p146 = por %p144, %p145
    %p147 = scmp.ne.s32.totalorder %s136, %s137
    %p148 = scmp.eq.s32.totalorder %s18, 0
    %p149 = por %p147, %p148
    %p150 = scmp.ne.s32.totalorder %s136, %s137
    %p151 = scmp.eq.s32.totalorder %s19, 1
    %p152 = por %p150, %p151
    %p154 = scmp.ne.s32.totalorder %s137, %s153
    %p155 = scmp.eq.s32.totalorder %s19, 0
    %p156 = por %p154, %p155
    %s157 = ssub.s32 %s13, %s20
    %p158 = scmp.eq.s32.totalorder %s157, 0
    %s160 = sadd.s32 %s159, 1
    %s161 = scalar_select %p158, %s159, %s160
    %p164 = pneg %p158
    %p165 = scmp.eq.s32.totalorder %s13, 1
    %p166 = por %p164, %p165
    %p167 = scmp.ne.s32.totalorder %s159, %s162
    %p168 = scmp.eq.s32.totalorder %s13, 0
    %p169 = por %p167, %p168
    %p170 = scmp.ne.s32.totalorder %s159, %s162
    %p171 = scmp.eq.s32.totalorder %s18, 1
    %p172 = por %p170, %p171
    %p173 = scmp.ne.s32.totalorder %s162, %s163
    %p174 = scmp.eq.s32.totalorder %s18, 0
    %p175 = por %p173, %p174
    %p176 = scmp.ne.s32.totalorder %s162, %s163
    %p177 = scmp.eq.s32.totalorder %s19, 1
    %p178 = por %p176, %p177
    %p180 = scmp.ne.s32.totalorder %s163, %s179
    %p181 = scmp.eq.s32.totalorder %s19, 0
    %p182 = por %p180, %p181
    %p183 = scmp.le.s32.totalorder 1, %s13
    %p184 = scmp.lt.s32.totalorder %s13, 3
    %p185 = pnand %p183, %p184
    %p186 = pneg %p185
    // Predicated region
    $region9: #{elanb_forward.6} parent=5 // pred_check
      _
    $region10: #{elanb_forward.6} parent=5 // pred_check_branch
      %188 = sbr.rel (%p185) target = $region12
    $region11: #{elanb_forward.6} parent=5 // pred_region
      %s189 = ssub.s32 %s13, 1
      // Predicated region
      $region13: #{elanb_forward.6} parent=11 // pred_check
        %p190 = pneg %p60
      $region14: #{elanb_forward.6} parent=11 // pred_check_branch
        %192 = sbr.rel (%p190) target = $region16
      $region15: #{elanb_forward.6} parent=11 // pred_region
        _
      $region16: #{elanb_forward.6} parent=11 // pred_fallthru
        _
      // Predicated region
      $region17: #{elanb_forward.6} parent=11 // pred_check
        %p193 = pneg %p81
      $region18: #{elanb_forward.6} parent=11 // pred_check_branch
        %195 = sbr.rel (%p193) target = $region20
      $region19: #{elanb_forward.6} parent=11 // pred_region
        _
      $region20: #{elanb_forward.6} parent=11 // pred_fallthru
        _
      // Predicated region
      $region21: #{elanb_forward.6} parent=11 // pred_check
        %p196 = pneg %p102
      $region22: #{elanb_forward.6} parent=11 // pred_check_branch
        %198 = sbr.rel (%p196) target = $region24
      $region23: #{elanb_forward.6} parent=11 // pred_region
        _
      $region24: #{elanb_forward.6} parent=11 // pred_fallthru
        _
      // Predicated region
      $region25: #{elanb_forward.6} parent=11 // pred_check
        %p199 = pneg %p123
      $region26: #{elanb_forward.6} parent=11 // pred_check_branch
        %201 = sbr.rel (%p199) target = $region28
      $region27: #{elanb_forward.6} parent=11 // pred_region
        _
      $region28: #{elanb_forward.6} parent=11 // pred_fallthru
        _
    $region12: #{elanb_forward.6} parent=5 // pred_fallthru
      _
    %p202 = scmp.lt.s32.totalorder %s13, 2
    // Predicated region
    $region29: #{elanb_forward.6} parent=5 // pred_check
      %p203 = pneg %p202
    $region30: #{elanb_forward.6} parent=5 // pred_check_branch
      %205 = sbr.rel (%p203) target = $region32
    $region31: #{elanb_forward.6} parent=5 // pred_region
      // Predicated region
      $region33: #{elanb_forward.6} parent=31 // pred_check
        %p206 = pneg %p33
      $region34: #{elanb_forward.6} parent=31 // pred_check_branch
        %208 = sbr.rel (%p206) target = $region36
      $region35: #{elanb_forward.6} parent=31 // pred_region
        %s209 = smul.u32 32, %s13
        %p210 = scmp.lt.s32.totalorder %s209, 63
        %s211 = scalar_select %p210, %s209, 63
        %s212 = smul.addr %s211, 8
        %s213 = scalar_lea.vmem %s0, %s212
        %s214 = smul.u32 32, %s13
      $region36: #{elanb_forward.6} parent=31 // pred_fallthru
        _
    $region32: #{elanb_forward.6} parent=5 // pred_fallthru
      _
    %p215 = scmp.le.s32.totalorder 1, %s13
    %p216 = scmp.lt.s32.totalorder %s13, 3
    %p217 = pnand %p215, %p216
    %p218 = pneg %p217
    // Predicated region
    $region37: #{elanb_forward.6} parent=5 // pred_check
      _
    $region38: #{elanb_forward.6} parent=5 // pred_check_branch
      %220 = sbr.rel (%p217) target = $region40
    $region39: #{elanb_forward.6} parent=5 // pred_region
      %s221 = ssub.s32 %s13, 1
      %s222 = smul.u32 32, %s18
      %p223 = scmp.lt.s32.totalorder %s222, 63
      %s224 = scalar_select %p223, %s222, 63
      %s225 = smul.addr %s224, 8
      %s226 = scalar_lea.vmem %s0, %s225
      %p227 = pneg %p39
      %p228 = pneg %p36
      %p229 = pneg %p60
      %p230 = pneg %p57
      %p231 = pneg %p81
      %p232 = pneg %p78
      %p233 = pneg %p102
      %p234 = pneg %p99
      %p235 = pneg %p123
      %p236 = pneg %p120
      %p237 = pneg %p149
      %p238 = pneg %p146
      %s239 = smul.u32 32, %s18
      %p240 = scmp.lt.s32.totalorder %s239, 63
      %s241 = scalar_select %p240, %s239, 63
      %s242 = smul.addr %s241, 8
      %s243 = scalar_lea.vmem %s5, %s242
      %p244 = pneg %p175
      %p245 = pneg %p172
      %s246 = smul.u32 32, %s18
      %p247 = scmp.lt.s32.totalorder %s246, 63
      %s248 = scalar_select %p247, %s246, 63
      %s249 = smul.addr %s248, 8
      %s250 = scalar_lea.vmem %s6, %s249
      %s251 = smul.u32 32, %s18
      %p252 = scmp.lt.s32.totalorder %s251, 63
      %s253 = scalar_select %p252, %s251, 63
      %s254 = smul.addr %s253, 8
      %s255 = scalar_lea.vmem %s0, %s254
      %s256 = smul.u32 32, %s18
      %s257 = smul.u32 32, %s18
      %p258 = scmp.lt.s32.totalorder %s257, 63
      %s259 = scalar_select %p258, %s257, 63
      %s260 = smul.addr %s259, 8
      %s261 = scalar_lea.vmem %s5, %s260
      %s262 = smul.u32 32, %s18
      %s263 = smul.u32 32, %s18
      %p264 = scmp.lt.s32.totalorder %s263, 63
      %s265 = scalar_select %p264, %s263, 63
      %s266 = smul.addr %s265, 8
      %s267 = scalar_lea.vmem %s6, %s266
      %s268 = smul.u32 32, %s18
      %v269 = vld [vmem:[%s255] sm:$0xff]
      %v270 = vld [vmem:[%s255 + $0x8] sm:$0xff]
      %v271 = vld [vmem:[%s255 + $0x10] sm:$0xff]
      %v272 = vld [vmem:[%s255 + $0x18] sm:$0xff]
      %v273 = vld [vmem:[%s255 + $0x20] sm:$0xff]
      %v274 = vld [vmem:[%s255 + $0x28] sm:$0xff]
      %v275 = vld [vmem:[%s255 + $0x30] sm:$0xff]
      %v276 = vld [vmem:[%s255 + $0x38] sm:$0xff]
      %v277 = vld [vmem:[%s255 + $0x40] sm:$0xff]
      %v278 = vld [vmem:[%s255 + $0x48] sm:$0xff]
      %v279 = vld [vmem:[%s255 + $0x50] sm:$0xff]
      %v280 = vld [vmem:[%s255 + $0x58] sm:$0xff]
      %v281 = vld [vmem:[%s255 + $0x60] sm:$0xff]
      %v282 = vld [vmem:[%s255 + $0x68] sm:$0xff]
      %v283 = vld [vmem:[%s255 + $0x70] sm:$0xff]
      %v284 = vld [vmem:[%s255 + $0x78] sm:$0xff]
      %v285 = vld [vmem:[%s255 + $0x80] sm:$0xff]
      %v286 = vld [vmem:[%s255 + $0x88] sm:$0xff]
      %v287 = vld [vmem:[%s255 + $0x90] sm:$0xff]
      %v288 = vld [vmem:[%s255 + $0x98] sm:$0xff]
      %v289 = vld [vmem:[%s255 + $0xa0] sm:$0xff]
      %v290 = vld [vmem:[%s255 + $0xa8] sm:$0xff]
      %v291 = vld [vmem:[%s255 + $0xb0] sm:$0xff]
      %v292 = vld [vmem:[%s255 + $0xb8] sm:$0xff]
      %v293 = vld [vmem:[%s255 + $0xc0] sm:$0xff]
      %v294 = vld [vmem:[%s255 + $0xc8] sm:$0xff]
      %v295 = vld [vmem:[%s255 + $0xd0] sm:$0xff]
      %v296 = vld [vmem:[%s255 + $0xd8] sm:$0xff]
      %v297 = vld [vmem:[%s255 + $0xe0] sm:$0xff]
      %v298 = vld [vmem:[%s255 + $0xe8] sm:$0xff]
      %v299 = vld [vmem:[%s255 + $0xf0] sm:$0xff]
      %v300 = vld [vmem:[%s255 + $0xf8] sm:$0xff]
      %v301 = vld [vmem:[%s1] sm:$0xff]
      %v302 = vld [vmem:[%s2] sm:$0x1]
      %v304 = vperm.slane %v302, 0
      %vm306 = vcmask 64512
      %v308 = vsel %vm306, %v269, 0
      %v311 = vsel %vm306, %v270, 0
      %v314 = vsel %vm306, %v271, 0
      %v317 = vsel %vm306, %v272, 0
      %v320 = vsel %vm306, %v273, 0
      %v323 = vsel %vm306, %v274, 0
      %v326 = vsel %vm306, %v275, 0
      %v329 = vsel %vm306, %v276, 0
      %v332 = vsel %vm306, %v277, 0
      %v335 = vsel %vm306, %v278, 0
      %v338 = vsel %vm306, %v279, 0
      %v341 = vsel %vm306, %v280, 0
      %v344 = vsel %vm306, %v281, 0
      %v347 = vsel %vm306, %v282, 0
      %v350 = vsel %vm306, %v283, 0
      %v353 = vsel %vm306, %v284, 0
      %v356 = vsel %vm306, %v285, 0
      %v359 = vsel %vm306, %v286, 0
      %v362 = vsel %vm306, %v287, 0
      %v365 = vsel %vm306, %v288, 0
      %v368 = vsel %vm306, %v289, 0
      %v371 = vsel %vm306, %v290, 0
      %v374 = vsel %vm306, %v291, 0
      %v377 = vsel %vm306, %v292, 0
      %v380 = vsel %vm306, %v293, 0
      %v383 = vsel %vm306, %v294, 0
      %v386 = vsel %vm306, %v295, 0
      %v389 = vsel %vm306, %v296, 0
      %v392 = vsel %vm306, %v297, 0
      %v395 = vsel %vm306, %v298, 0
      %v398 = vsel %vm306, %v299, 0
      %v401 = vsel %vm306, %v300, 0
      %403 = vmatpush.msra.mxu0 0.0
      %404 = vmatpush.msra.mxu0 0.0
      %405 = vmatpush.msra.mxu0 0.0
      %406 = vmatpush.msra.mxu0 0.0
      %407 = vmatpush.msra.mxu0 0.0
      %408 = vmatpush.msra.mxu0 0.0
      %409 = vmatpush.msra.mxu0 0.0
      %410 = vmatpush.msra.mxu0 0.0
      %411 = vmatpush.msra.mxu0 0.0
      %412 = vmatpush.msra.mxu0 0.0
      %413 = vmatpush.msra.mxu0 0.0
      %414 = vmatpush.msra.mxu0 0.0
      %415 = vmatpush.msra.mxu0 0.0
      %416 = vmatpush.msra.mxu0 0.0
      %417 = vmatpush.msra.mxu0 0.0
      %418 = vmatpush.msra.mxu0 %v301
      %419 = vmatmul.f32.gmra.mxu0 %v308
      %v420 = vpop.f32.mrf.mxu0
      %v421 = vadd.f32 %v304, %v420
      %422 = vmatmul.f32.gmra.mxu0 %v311
      %v423 = vpop.f32.mrf.mxu0
      %v424 = vadd.f32 %v304, %v423
      %425 = vmatmul.f32.gmra.mxu0 %v314
      %v426 = vpop.f32.mrf.mxu0
      %v427 = vadd.f32 %v304, %v426
      %428 = vmatmul.f32.gmra.mxu0 %v317
      %v429 = vpop.f32.mrf.mxu0
      %v430 = vadd.f32 %v304, %v429
      %431 = vmatmul.f32.gmra.mxu0 %v320
      %v432 = vpop.f32.mrf.mxu0
      %v433 = vadd.f32 %v304, %v432
      %434 = vmatmul.f32.gmra.mxu0 %v323
      %v435 = vpop.f32.mrf.mxu0
      %v436 = vadd.f32 %v304, %v435
      %437 = vmatmul.f32.gmra.mxu0 %v326
      %v438 = vpop.f32.mrf.mxu0
      %v439 = vadd.f32 %v304, %v438
      %440 = vmatmul.f32.gmra.mxu0 %v329
      %v441 = vpop.f32.mrf.mxu0
      %v442 = vadd.f32 %v304, %v441
      %443 = vmatmul.f32.gmra.mxu0 %v332
      %v444 = vpop.f32.mrf.mxu0
      %v445 = vadd.f32 %v304, %v444
      %446 = vmatmul.f32.gmra.mxu0 %v335
      %v447 = vpop.f32.mrf.mxu0
      %v448 = vadd.f32 %v304, %v447
      %449 = vmatmul.f32.gmra.mxu0 %v338
      %v450 = vpop.f32.mrf.mxu0
      %v451 = vadd.f32 %v304, %v450
      %452 = vmatmul.f32.gmra.mxu0 %v341
      %v453 = vpop.f32.mrf.mxu0
      %v454 = vadd.f32 %v304, %v453
      %455 = vmatmul.f32.gmra.mxu0 %v344
      %v456 = vpop.f32.mrf.mxu0
      %v457 = vadd.f32 %v304, %v456
      %458 = vmatmul.f32.gmra.mxu0 %v347
      %v459 = vpop.f32.mrf.mxu0
      %v460 = vadd.f32 %v304, %v459
      %461 = vmatmul.f32.gmra.mxu0 %v350
      %v462 = vpop.f32.mrf.mxu0
      %v463 = vadd.f32 %v304, %v462
      %464 = vmatmul.f32.gmra.mxu0 %v353
      %v465 = vpop.f32.mrf.mxu0
      %v466 = vadd.f32 %v304, %v465
      %467 = vmatmul.f32.gmra.mxu0 %v356
      %v468 = vpop.f32.mrf.mxu0
      %v469 = vadd.f32 %v304, %v468
      %470 = vmatmul.f32.gmra.mxu0 %v359
      %v471 = vpop.f32.mrf.mxu0
      %v472 = vadd.f32 %v304, %v471
      %473 = vmatmul.f32.gmra.mxu0 %v362
      %v474 = vpop.f32.mrf.mxu0
      %v475 = vadd.f32 %v304, %v474
      %476 = vmatmul.f32.gmra.mxu0 %v365
      %v477 = vpop.f32.mrf.mxu0
      %v478 = vadd.f32 %v304, %v477
      %479 = vmatmul.f32.gmra.mxu0 %v368
      %v480 = vpop.f32.mrf.mxu0
      %v481 = vadd.f32 %v304, %v480
      %482 = vmatmul.f32.gmra.mxu0 %v371
      %v483 = vpop.f32.mrf.mxu0
      %v484 = vadd.f32 %v304, %v483
      %485 = vmatmul.f32.gmra.mxu0 %v374
      %v486 = vpop.f32.mrf.mxu0
      %v487 = vadd.f32 %v304, %v486
      %488 = vmatmul.f32.gmra.mxu0 %v377
      %v489 = vpop.f32.mrf.mxu0
      %v490 = vadd.f32 %v304, %v489
      %491 = vmatmul.f32.gmra.mxu0 %v380
      %v492 = vpop.f32.mrf.mxu0
      %v493 = vadd.f32 %v304, %v492
      %494 = vmatmul.f32.gmra.mxu0 %v383
      %v495 = vpop.f32.mrf.mxu0
      %v496 = vadd.f32 %v304, %v495
      %497 = vmatmul.f32.gmra.mxu0 %v386
      %v498 = vpop.f32.mrf.mxu0
      %v499 = vadd.f32 %v304, %v498
      %500 = vmatmul.f32.gmra.mxu0 %v389
      %v501 = vpop.f32.mrf.mxu0
      %v502 = vadd.f32 %v304, %v501
      %503 = vmatmul.f32.gmra.mxu0 %v392
      %v504 = vpop.f32.mrf.mxu0
      %v505 = vadd.f32 %v304, %v504
      %506 = vmatmul.f32.gmra.mxu0 %v395
      %v507 = vpop.f32.mrf.mxu0
      %v508 = vadd.f32 %v304, %v507
      %509 = vmatmul.f32.gmra.mxu0 %v398
      %v510 = vpop.f32.mrf.mxu0
      %v511 = vadd.f32 %v304, %v510
      %512 = vmatmul.f32.gmra.mxu0 %v401
      %v513 = vpop.f32.mrf.mxu0
      %v514 = vadd.f32 %v304, %v513
      %515 = vdwg.mxu0
      %v516 = vxor.u32 %v421, 2147483648
      %v517 = vxor.u32 %v424, 2147483648
      %v518 = vxor.u32 %v427, 2147483648
      %v519 = vxor.u32 %v430, 2147483648
      %v520 = vxor.u32 %v433, 2147483648
      %v521 = vxor.u32 %v436, 2147483648
      %v522 = vxor.u32 %v439, 2147483648
      %v523 = vxor.u32 %v442, 2147483648
      %v524 = vxor.u32 %v445, 2147483648
      %v525 = vxor.u32 %v448, 2147483648
      %v526 = vxor.u32 %v451, 2147483648
      %v527 = vxor.u32 %v454, 2147483648
      %v528 = vxor.u32 %v457, 2147483648
      %v529 = vxor.u32 %v460, 2147483648
      %v530 = vxor.u32 %v463, 2147483648
      %v531 = vxor.u32 %v466, 2147483648
      %v532 = vxor.u32 %v469, 2147483648
      %v533 = vxor.u32 %v472, 2147483648
      %v534 = vxor.u32 %v475, 2147483648
      %v535 = vxor.u32 %v478, 2147483648
      %v536 = vxor.u32 %v481, 2147483648
      %v537 = vxor.u32 %v484, 2147483648
      %v538 = vxor.u32 %v487, 2147483648
      %v539 = vxor.u32 %v490, 2147483648
      %v540 = vxor.u32 %v493, 2147483648
      %v541 = vxor.u32 %v496, 2147483648
      %v542 = vxor.u32 %v499, 2147483648
      %v543 = vxor.u32 %v502, 2147483648
      %v544 = vxor.u32 %v505, 2147483648
      %v545 = vxor.u32 %v508, 2147483648
      %v546 = vxor.u32 %v511, 2147483648
      %v547 = vxor.u32 %v514, 2147483648
      %v548 = vmul.f32 %v516, 1.442695
      %v549 = vpow.pop %v548
      %v550 = vmul.f32 %v517, 1.442695
      %v551 = vpow.pop %v550
      %v552 = vmul.f32 %v518, 1.442695
      %v553 = vpow.pop %v552
      %v554 = vmul.f32 %v519, 1.442695
      %v555 = vpow.pop %v554
      %v556 = vmul.f32 %v520, 1.442695
      %v557 = vpow.pop %v556
      %v558 = vmul.f32 %v521, 1.442695
      %v559 = vpow.pop %v558
      %v560 = vmul.f32 %v522, 1.442695
      %v561 = vpow.pop %v560
      %v562 = vmul.f32 %v523, 1.442695
      %v563 = vpow.pop %v562
      %v564 = vmul.f32 %v524, 1.442695
      %v565 = vpow.pop %v564
      %v566 = vmul.f32 %v525, 1.442695
      %v567 = vpow.pop %v566
      %v568 = vmul.f32 %v526, 1.442695
      %v569 = vpow.pop %v568
      %v570 = vmul.f32 %v527, 1.442695
      %v571 = vpow.pop %v570
      %v572 = vmul.f32 %v528, 1.442695
      %v573 = vpow.pop %v572
      %v574 = vmul.f32 %v529, 1.442695
      %v575 = vpow.pop %v574
      %v576 = vmul.f32 %v530, 1.442695
      %v577 = vpow.pop %v576
      %v578 = vmul.f32 %v531, 1.442695
      %v579 = vpow.pop %v578
      %v580 = vmul.f32 %v532, 1.442695
      %v581 = vpow.pop %v580
      %v582 = vmul.f32 %v533, 1.442695
      %v583 = vpow.pop %v582
      %v584 = vmul.f32 %v534, 1.442695
      %v585 = vpow.pop %v584
      %v586 = vmul.f32 %v535, 1.442695
      %v587 = vpow.pop %v586
      %v588 = vmul.f32 %v536, 1.442695
      %v589 = vpow.pop %v588
      %v590 = vmul.f32 %v537, 1.442695
      %v591 = vpow.pop %v590
      %v592 = vmul.f32 %v538, 1.442695
      %v593 = vpow.pop %v592
      %v594 = vmul.f32 %v539, 1.442695
      %v595 = vpow.pop %v594
      %v596 = vmul.f32 %v540, 1.442695
      %v597 = vpow.pop %v596
      %v598 = vmul.f32 %v541, 1.442695
      %v599 = vpow.pop %v598
      %v600 = vmul.f32 %v542, 1.442695
      %v601 = vpow.pop %v600
      %v602 = vmul.f32 %v543, 1.442695
      %v603 = vpow.pop %v602
      %v604 = vmul.f32 %v544, 1.442695
      %v605 = vpow.pop %v604
      %v606 = vmul.f32 %v545, 1.442695
      %v607 = vpow.pop %v606
      %v608 = vmul.f32 %v546, 1.442695
      %v609 = vpow.pop %v608
      %v610 = vmul.f32 %v547, 1.442695
      %v611 = vpow.pop %v610
      %v612 = vadd.f32 %v549, 1.0
      %v613 = vadd.f32 %v551, 1.0
      %v614 = vadd.f32 %v553, 1.0
      %v615 = vadd.f32 %v555, 1.0
      %v616 = vadd.f32 %v557, 1.0
      %v617 = vadd.f32 %v559, 1.0
      %v618 = vadd.f32 %v561, 1.0
      %v619 = vadd.f32 %v563, 1.0
      %v620 = vadd.f32 %v565, 1.0
      %v621 = vadd.f32 %v567, 1.0
      %v622 = vadd.f32 %v569, 1.0
      %v623 = vadd.f32 %v571, 1.0
      %v624 = vadd.f32 %v573, 1.0
      %v625 = vadd.f32 %v575, 1.0
      %v626 = vadd.f32 %v577, 1.0
      %v627 = vadd.f32 %v579, 1.0
      %v628 = vadd.f32 %v581, 1.0
      %v629 = vadd.f32 %v583, 1.0
      %v630 = vadd.f32 %v585, 1.0
      %v631 = vadd.f32 %v587, 1.0
      %v632 = vadd.f32 %v589, 1.0
      %v633 = vadd.f32 %v591, 1.0
      %v634 = vadd.f32 %v593, 1.0
      %v635 = vadd.f32 %v595, 1.0
      %v636 = vadd.f32 %v597, 1.0
      %v637 = vadd.f32 %v599, 1.0
      %v638 = vadd.f32 %v601, 1.0
      %v639 = vadd.f32 %v603, 1.0
      %v640 = vadd.f32 %v605, 1.0
      %v641 = vadd.f32 %v607, 1.0
      %v642 = vadd.f32 %v609, 1.0
      %v643 = vadd.f32 %v611, 1.0
      %v644 = vrcp.pop %v612
      %v645 = vmul.f32 %v612, %v644
      %v646 = vsub.f32 1.0, %v645
      %v647 = vmul.f32 %v644, %v646
      %v648 = vadd.f32 %v644, %v647
      %vm649 = vweird.f32 %v612
      %vm650 = vweird.f32 %v644
      %vm651 = vmor %vm649, %vm650
      %v652 = vsel %vm651, %v644, %v648
      %v653 = vand.u32 2147483647, %v612
      %vm654 = vcmp.eq.f32.partialorder %v653, 8.507059e+37
      %v655 = vand.u32 %v612, 2147483648
      %v656 = vor.u32 1.1754944e-38, %v655
      %v657 = vsel %vm654, %v656, %v652
      %v658 = vmul.f32 1.0, %v657
      %v659 = vrcp.pop %v613
      %v660 = vmul.f32 %v613, %v659
      %v661 = vsub.f32 1.0, %v660
      %v662 = vmul.f32 %v659, %v661
      %v663 = vadd.f32 %v659, %v662
      %vm664 = vweird.f32 %v613
      %vm665 = vweird.f32 %v659
      %vm666 = vmor %vm664, %vm665
      %v667 = vsel %vm666, %v659, %v663
      %v668 = vand.u32 2147483647, %v613
      %vm669 = vcmp.eq.f32.partialorder %v668, 8.507059e+37
      %v670 = vand.u32 %v613, 2147483648
      %v671 = vor.u32 1.1754944e-38, %v670
      %v672 = vsel %vm669, %v671, %v667
      %v673 = vmul.f32 1.0, %v672
      %v674 = vrcp.pop %v614
      %v675 = vmul.f32 %v614, %v674
      %v676 = vsub.f32 1.0, %v675
      %v677 = vmul.f32 %v674, %v676
      %v678 = vadd.f32 %v674, %v677
      %vm679 = vweird.f32 %v614
      %vm680 = vweird.f32 %v674
      %vm681 = vmor %vm679, %vm680
      %v682 = vsel %vm681, %v674, %v678
      %v683 = vand.u32 2147483647, %v614
      %vm684 = vcmp.eq.f32.partialorder %v683, 8.507059e+37
      %v685 = vand.u32 %v614, 2147483648
      %v686 = vor.u32 1.1754944e-38, %v685
      %v687 = vsel %vm684, %v686, %v682
      %v688 = vmul.f32 1.0, %v687
      %v689 = vrcp.pop %v615
      %v690 = vmul.f32 %v615, %v689
      %v691 = vsub.f32 1.0, %v690
      %v692 = vmul.f32 %v689, %v691
      %v693 = vadd.f32 %v689, %v692
      %vm694 = vweird.f32 %v615
      %vm695 = vweird.f32 %v689
      %vm696 = vmor %vm694, %vm695
      %v697 = vsel %vm696, %v689, %v693
      %v698 = vand.u32 2147483647, %v615
      %vm699 = vcmp.eq.f32.partialorder %v698, 8.507059e+37
      %v700 = vand.u32 %v615, 2147483648
      %v701 = vor.u32 1.1754944e-38, %v700
      %v702 = vsel %vm699, %v701, %v697
      %v703 = vmul.f32 1.0, %v702
      %v704 = vrcp.pop %v616
      %v705 = vmul.f32 %v616, %v704
      %v706 = vsub.f32 1.0, %v705
      %v707 = vmul.f32 %v704, %v706
      %v708 = vadd.f32 %v704, %v707
      %vm709 = vweird.f32 %v616
      %vm710 = vweird.f32 %v704
      %vm711 = vmor %vm709, %vm710
      %v712 = vsel %vm711, %v704, %v708
      %v713 = vand.u32 2147483647, %v616
      %vm714 = vcmp.eq.f32.partialorder %v713, 8.507059e+37
      %v715 = vand.u32 %v616, 2147483648
      %v716 = vor.u32 1.1754944e-38, %v715
      %v717 = vsel %vm714, %v716, %v712
      %v718 = vmul.f32 1.0, %v717
      %v719 = vrcp.pop %v617
      %v720 = vmul.f32 %v617, %v719
      %v721 = vsub.f32 1.0, %v720
      %v722 = vmul.f32 %v719, %v721
      %v723 = vadd.f32 %v719, %v722
      %vm724 = vweird.f32 %v617
      %vm725 = vweird.f32 %v719
      %vm726 = vmor %vm724, %vm725
      %v727 = vsel %vm726, %v719, %v723
      %v728 = vand.u32 2147483647, %v617
      %vm729 = vcmp.eq.f32.partialorder %v728, 8.507059e+37
      %v730 = vand.u32 %v617, 2147483648
      %v731 = vor.u32 1.1754944e-38, %v730
      %v732 = vsel %vm729, %v731, %v727
      %v733 = vmul.f32 1.0, %v732
      %v734 = vrcp.pop %v618
      %v735 = vmul.f32 %v618, %v734
      %v736 = vsub.f32 1.0, %v735
      %v737 = vmul.f32 %v734, %v736
      %v738 = vadd.f32 %v734, %v737
      %vm739 = vweird.f32 %v618
      %vm740 = vweird.f32 %v734
      %vm741 = vmor %vm739, %vm740
      %v742 = vsel %vm741, %v734, %v738
      %v743 = vand.u32 2147483647, %v618
      %vm744 = vcmp.eq.f32.partialorder %v743, 8.507059e+37
      %v745 = vand.u32 %v618, 2147483648
      %v746 = vor.u32 1.1754944e-38, %v745
      %v747 = vsel %vm744, %v746, %v742
      %v748 = vmul.f32 1.0, %v747
      %v749 = vrcp.pop %v619
      %v750 = vmul.f32 %v619, %v749
      %v751 = vsub.f32 1.0, %v750
      %v752 = vmul.f32 %v749, %v751
      %v753 = vadd.f32 %v749, %v752
      %vm754 = vweird.f32 %v619
      %vm755 = vweird.f32 %v749
      %vm756 = vmor %vm754, %vm755
      %v757 = vsel %vm756, %v749, %v753
      %v758 = vand.u32 2147483647, %v619
      %vm759 = vcmp.eq.f32.partialorder %v758, 8.507059e+37
      %v760 = vand.u32 %v619, 2147483648
      %v761 = vor.u32 1.1754944e-38, %v760
      %v762 = vsel %vm759, %v761, %v757
      %v763 = vmul.f32 1.0, %v762
      %v764 = vrcp.pop %v620
      %v765 = vmul.f32 %v620, %v764
      %v766 = vsub.f32 1.0, %v765
      %v767 = vmul.f32 %v764, %v766
      %v768 = vadd.f32 %v764, %v767
      %vm769 = vweird.f32 %v620
      %vm770 = vweird.f32 %v764
      %vm771 = vmor %vm769, %vm770
      %v772 = vsel %vm771, %v764, %v768
      %v773 = vand.u32 2147483647, %v620
      %vm774 = vcmp.eq.f32.partialorder %v773, 8.507059e+37
      %v775 = vand.u32 %v620, 2147483648
      %v776 = vor.u32 1.1754944e-38, %v775
      %v777 = vsel %vm774, %v776, %v772
      %v778 = vmul.f32 1.0, %v777
      %v779 = vrcp.pop %v621
      %v780 = vmul.f32 %v621, %v779
      %v781 = vsub.f32 1.0, %v780
      %v782 = vmul.f32 %v779, %v781
      %v783 = vadd.f32 %v779, %v782
      %vm784 = vweird.f32 %v621
      %vm785 = vweird.f32 %v779
      %vm786 = vmor %vm784, %vm785
      %v787 = vsel %vm786, %v779, %v783
      %v788 = vand.u32 2147483647, %v621
      %vm789 = vcmp.eq.f32.partialorder %v788, 8.507059e+37
      %v790 = vand.u32 %v621, 2147483648
      %v791 = vor.u32 1.1754944e-38, %v790
      %v792 = vsel %vm789, %v791, %v787
      %v793 = vmul.f32 1.0, %v792
      %v794 = vrcp.pop %v622
      %v795 = vmul.f32 %v622, %v794
      %v796 = vsub.f32 1.0, %v795
      %v797 = vmul.f32 %v794, %v796
      %v798 = vadd.f32 %v794, %v797
      %vm799 = vweird.f32 %v622
      %vm800 = vweird.f32 %v794
      %vm801 = vmor %vm799, %vm800
      %v802 = vsel %vm801, %v794, %v798
      %v803 = vand.u32 2147483647, %v622
      %vm804 = vcmp.eq.f32.partialorder %v803, 8.507059e+37
      %v805 = vand.u32 %v622, 2147483648
      %v806 = vor.u32 1.1754944e-38, %v805
      %v807 = vsel %vm804, %v806, %v802
      %v808 = vmul.f32 1.0, %v807
      %v809 = vrcp.pop %v623
      %v810 = vmul.f32 %v623, %v809
      %v811 = vsub.f32 1.0, %v810
      %v812 = vmul.f32 %v809, %v811
      %v813 = vadd.f32 %v809, %v812
      %vm814 = vweird.f32 %v623
      %vm815 = vweird.f32 %v809
      %vm816 = vmor %vm814, %vm815
      %v817 = vsel %vm816, %v809, %v813
      %v818 = vand.u32 2147483647, %v623
      %vm819 = vcmp.eq.f32.partialorder %v818, 8.507059e+37
      %v820 = vand.u32 %v623, 2147483648
      %v821 = vor.u32 1.1754944e-38, %v820
      %v822 = vsel %vm819, %v821, %v817
      %v823 = vmul.f32 1.0, %v822
      %v824 = vrcp.pop %v624
      %v825 = vmul.f32 %v624, %v824
      %v826 = vsub.f32 1.0, %v825
      %v827 = vmul.f32 %v824, %v826
      %v828 = vadd.f32 %v824, %v827
      %vm829 = vweird.f32 %v624
      %vm830 = vweird.f32 %v824
      %vm831 = vmor %vm829, %vm830
      %v832 = vsel %vm831, %v824, %v828
      %v833 = vand.u32 2147483647, %v624
      %vm834 = vcmp.eq.f32.partialorder %v833, 8.507059e+37
      %v835 = vand.u32 %v624, 2147483648
      %v836 = vor.u32 1.1754944e-38, %v835
      %v837 = vsel %vm834, %v836, %v832
      %v838 = vmul.f32 1.0, %v837
      %v839 = vrcp.pop %v625
      %v840 = vmul.f32 %v625, %v839
      %v841 = vsub.f32 1.0, %v840
      %v842 = vmul.f32 %v839, %v841
      %v843 = vadd.f32 %v839, %v842
      %vm844 = vweird.f32 %v625
      %vm845 = vweird.f32 %v839
      %vm846 = vmor %vm844, %vm845
      %v847 = vsel %vm846, %v839, %v843
      %v848 = vand.u32 2147483647, %v625
      %vm849 = vcmp.eq.f32.partialorder %v848, 8.507059e+37
      %v850 = vand.u32 %v625, 2147483648
      %v851 = vor.u32 1.1754944e-38, %v850
      %v852 = vsel %vm849, %v851, %v847
      %v853 = vmul.f32 1.0, %v852
      %v854 = vrcp.pop %v626
      %v855 = vmul.f32 %v626, %v854
      %v856 = vsub.f32 1.0, %v855
      %v857 = vmul.f32 %v854, %v856
      %v858 = vadd.f32 %v854, %v857
      %vm859 = vweird.f32 %v626
      %vm860 = vweird.f32 %v854
      %vm861 = vmor %vm859, %vm860
      %v862 = vsel %vm861, %v854, %v858
      %v863 = vand.u32 2147483647, %v626
      %vm864 = vcmp.eq.f32.partialorder %v863, 8.507059e+37
      %v865 = vand.u32 %v626, 2147483648
      %v866 = vor.u32 1.1754944e-38, %v865
      %v867 = vsel %vm864, %v866, %v862
      %v868 = vmul.f32 1.0, %v867
      %v869 = vrcp.pop %v627
      %v870 = vmul.f32 %v627, %v869
      %v871 = vsub.f32 1.0, %v870
      %v872 = vmul.f32 %v869, %v871
      %v873 = vadd.f32 %v869, %v872
      %vm874 = vweird.f32 %v627
      %vm875 = vweird.f32 %v869
      %vm876 = vmor %vm874, %vm875
      %v877 = vsel %vm876, %v869, %v873
      %v878 = vand.u32 2147483647, %v627
      %vm879 = vcmp.eq.f32.partialorder %v878, 8.507059e+37
      %v880 = vand.u32 %v627, 2147483648
      %v881 = vor.u32 1.1754944e-38, %v880
      %v882 = vsel %vm879, %v881, %v877
      %v883 = vmul.f32 1.0, %v882
      %v884 = vrcp.pop %v628
      %v885 = vmul.f32 %v628, %v884
      %v886 = vsub.f32 1.0, %v885
      %v887 = vmul.f32 %v884, %v886
      %v888 = vadd.f32 %v884, %v887
      %vm889 = vweird.f32 %v628
      %vm890 = vweird.f32 %v884
      %vm891 = vmor %vm889, %vm890
      %v892 = vsel %vm891, %v884, %v888
      %v893 = vand.u32 2147483647, %v628
      %vm894 = vcmp.eq.f32.partialorder %v893, 8.507059e+37
      %v895 = vand.u32 %v628, 2147483648
      %v896 = vor.u32 1.1754944e-38, %v895
      %v897 = vsel %vm894, %v896, %v892
      %v898 = vmul.f32 1.0, %v897
      %v899 = vrcp.pop %v629
      %v900 = vmul.f32 %v629, %v899
      %v901 = vsub.f32 1.0, %v900
      %v902 = vmul.f32 %v899, %v901
      %v903 = vadd.f32 %v899, %v902
      %vm904 = vweird.f32 %v629
      %vm905 = vweird.f32 %v899
      %vm906 = vmor %vm904, %vm905
      %v907 = vsel %vm906, %v899, %v903
      %v908 = vand.u32 2147483647, %v629
      %vm909 = vcmp.eq.f32.partialorder %v908, 8.507059e+37
      %v910 = vand.u32 %v629, 2147483648
      %v911 = vor.u32 1.1754944e-38, %v910
      %v912 = vsel %vm909, %v911, %v907
      %v913 = vmul.f32 1.0, %v912
      %v914 = vrcp.pop %v630
      %v915 = vmul.f32 %v630, %v914
      %v916 = vsub.f32 1.0, %v915
      %v917 = vmul.f32 %v914, %v916
      %v918 = vadd.f32 %v914, %v917
      %vm919 = vweird.f32 %v630
      %vm920 = vweird.f32 %v914
      %vm921 = vmor %vm919, %vm920
      %v922 = vsel %vm921, %v914, %v918
      %v923 = vand.u32 2147483647, %v630
      %vm924 = vcmp.eq.f32.partialorder %v923, 8.507059e+37
      %v925 = vand.u32 %v630, 2147483648
      %v926 = vor.u32 1.1754944e-38, %v925
      %v927 = vsel %vm924, %v926, %v922
      %v928 = vmul.f32 1.0, %v927
      %v929 = vrcp.pop %v631
      %v930 = vmul.f32 %v631, %v929
      %v931 = vsub.f32 1.0, %v930
      %v932 = vmul.f32 %v929, %v931
      %v933 = vadd.f32 %v929, %v932
      %vm934 = vweird.f32 %v631
      %vm935 = vweird.f32 %v929
      %vm936 = vmor %vm934, %vm935
      %v937 = vsel %vm936, %v929, %v933
      %v938 = vand.u32 2147483647, %v631
      %vm939 = vcmp.eq.f32.partialorder %v938, 8.507059e+37
      %v940 = vand.u32 %v631, 2147483648
      %v941 = vor.u32 1.1754944e-38, %v940
      %v942 = vsel %vm939, %v941, %v937
      %v943 = vmul.f32 1.0, %v942
      %v944 = vrcp.pop %v632
      %v945 = vmul.f32 %v632, %v944
      %v946 = vsub.f32 1.0, %v945
      %v947 = vmul.f32 %v944, %v946
      %v948 = vadd.f32 %v944, %v947
      %vm949 = vweird.f32 %v632
      %vm950 = vweird.f32 %v944
      %vm951 = vmor %vm949, %vm950
      %v952 = vsel %vm951, %v944, %v948
      %v953 = vand.u32 2147483647, %v632
      %vm954 = vcmp.eq.f32.partialorder %v953, 8.507059e+37
      %v955 = vand.u32 %v632, 2147483648
      %v956 = vor.u32 1.1754944e-38, %v955
      %v957 = vsel %vm954, %v956, %v952
      %v958 = vmul.f32 1.0, %v957
      %v959 = vrcp.pop %v633
      %v960 = vmul.f32 %v633, %v959
      %v961 = vsub.f32 1.0, %v960
      %v962 = vmul.f32 %v959, %v961
      %v963 = vadd.f32 %v959, %v962
      %vm964 = vweird.f32 %v633
      %vm965 = vweird.f32 %v959
      %vm966 = vmor %vm964, %vm965
      %v967 = vsel %vm966, %v959, %v963
      %v968 = vand.u32 2147483647, %v633
      %vm969 = vcmp.eq.f32.partialorder %v968, 8.507059e+37
      %v970 = vand.u32 %v633, 2147483648
      %v971 = vor.u32 1.1754944e-38, %v970
      %v972 = vsel %vm969, %v971, %v967
      %v973 = vmul.f32 1.0, %v972
      %v974 = vrcp.pop %v634
      %v975 = vmul.f32 %v634, %v974
      %v976 = vsub.f32 1.0, %v975
      %v977 = vmul.f32 %v974, %v976
      %v978 = vadd.f32 %v974, %v977
      %vm979 = vweird.f32 %v634
      %vm980 = vweird.f32 %v974
      %vm981 = vmor %vm979, %vm980
      %v982 = vsel %vm981, %v974, %v978
      %v983 = vand.u32 2147483647, %v634
      %vm984 = vcmp.eq.f32.partialorder %v983, 8.507059e+37
      %v985 = vand.u32 %v634, 2147483648
      %v986 = vor.u32 1.1754944e-38, %v985
      %v987 = vsel %vm984, %v986, %v982
      %v988 = vmul.f32 1.0, %v987
      %v989 = vrcp.pop %v635
      %v990 = vmul.f32 %v635, %v989
      %v991 = vsub.f32 1.0, %v990
      %v992 = vmul.f32 %v989, %v991
      %v993 = vadd.f32 %v989, %v992
      %vm994 = vweird.f32 %v635
      %vm995 = vweird.f32 %v989
      %vm996 = vmor %vm994, %vm995
      %v997 = vsel %vm996, %v989, %v993
      %v998 = vand.u32 2147483647, %v635
      %vm999 = vcmp.eq.f32.partialorder %v998, 8.507059e+37
      %v1000 = vand.u32 %v635, 2147483648
      %v1001 = vor.u32 1.1754944e-38, %v1000
      %v1002 = vsel %vm999, %v1001, %v997
      %v1003 = vmul.f32 1.0, %v1002
      %v1004 = vrcp.pop %v636
      %v1005 = vmul.f32 %v636, %v1004
      %v1006 = vsub.f32 1.0, %v1005
      %v1007 = vmul.f32 %v1004, %v1006
      %v1008 = vadd.f32 %v1004, %v1007
      %vm1009 = vweird.f32 %v636
      %vm1010 = vweird.f32 %v1004
      %vm1011 = vmor %vm1009, %vm1010
      %v1012 = vsel %vm1011, %v1004, %v1008
      %v1013 = vand.u32 2147483647, %v636
      %vm1014 = vcmp.eq.f32.partialorder %v1013, 8.507059e+37
      %v1015 = vand.u32 %v636, 2147483648
      %v1016 = vor.u32 1.1754944e-38, %v1015
      %v1017 = vsel %vm1014, %v1016, %v1012
      %v1018 = vmul.f32 1.0, %v1017
      %v1019 = vrcp.pop %v637
      %v1020 = vmul.f32 %v637, %v1019
      %v1021 = vsub.f32 1.0, %v1020
      %v1022 = vmul.f32 %v1019, %v1021
      %v1023 = vadd.f32 %v1019, %v1022
      %vm1024 = vweird.f32 %v637
      %vm1025 = vweird.f32 %v1019
      %vm1026 = vmor %vm1024, %vm1025
      %v1027 = vsel %vm1026, %v1019, %v1023
      %v1028 = vand.u32 2147483647, %v637
      %vm1029 = vcmp.eq.f32.partialorder %v1028, 8.507059e+37
      %v1030 = vand.u32 %v637, 2147483648
      %v1031 = vor.u32 1.1754944e-38, %v1030
      %v1032 = vsel %vm1029, %v1031, %v1027
      %v1033 = vmul.f32 1.0, %v1032
      %v1034 = vrcp.pop %v638
      %v1035 = vmul.f32 %v638, %v1034
      %v1036 = vsub.f32 1.0, %v1035
      %v1037 = vmul.f32 %v1034, %v1036
      %v1038 = vadd.f32 %v1034, %v1037
      %vm1039 = vweird.f32 %v638
      %vm1040 = vweird.f32 %v1034
      %vm1041 = vmor %vm1039, %vm1040
      %v1042 = vsel %vm1041, %v1034, %v1038
      %v1043 = vand.u32 2147483647, %v638
      %vm1044 = vcmp.eq.f32.partialorder %v1043, 8.507059e+37
      %v1045 = vand.u32 %v638, 2147483648
      %v1046 = vor.u32 1.1754944e-38, %v1045
      %v1047 = vsel %vm1044, %v1046, %v1042
      %v1048 = vmul.f32 1.0, %v1047
      %v1049 = vrcp.pop %v639
      %v1050 = vmul.f32 %v639, %v1049
      %v1051 = vsub.f32 1.0, %v1050
      %v1052 = vmul.f32 %v1049, %v1051
      %v1053 = vadd.f32 %v1049, %v1052
      %vm1054 = vweird.f32 %v639
      %vm1055 = vweird.f32 %v1049
      %vm1056 = vmor %vm1054, %vm1055
      %v1057 = vsel %vm1056, %v1049, %v1053
      %v1058 = vand.u32 2147483647, %v639
      %vm1059 = vcmp.eq.f32.partialorder %v1058, 8.507059e+37
      %v1060 = vand.u32 %v639, 2147483648
      %v1061 = vor.u32 1.1754944e-38, %v1060
      %v1062 = vsel %vm1059, %v1061, %v1057
      %v1063 = vmul.f32 1.0, %v1062
      %v1064 = vrcp.pop %v640
      %v1065 = vmul.f32 %v640, %v1064
      %v1066 = vsub.f32 1.0, %v1065
      %v1067 = vmul.f32 %v1064, %v1066
      %v1068 = vadd.f32 %v1064, %v1067
      %vm1069 = vweird.f32 %v640
      %vm1070 = vweird.f32 %v1064
      %vm1071 = vmor %vm1069, %vm1070
      %v1072 = vsel %vm1071, %v1064, %v1068
      %v1073 = vand.u32 2147483647, %v640
      %vm1074 = vcmp.eq.f32.partialorder %v1073, 8.507059e+37
      %v1075 = vand.u32 %v640, 2147483648
      %v1076 = vor.u32 1.1754944e-38, %v1075
      %v1077 = vsel %vm1074, %v1076, %v1072
      %v1078 = vmul.f32 1.0, %v1077
      %v1079 = vrcp.pop %v641
      %v1080 = vmul.f32 %v641, %v1079
      %v1081 = vsub.f32 1.0, %v1080
      %v1082 = vmul.f32 %v1079, %v1081
      %v1083 = vadd.f32 %v1079, %v1082
      %vm1084 = vweird.f32 %v641
      %vm1085 = vweird.f32 %v1079
      %vm1086 = vmor %vm1084, %vm1085
      %v1087 = vsel %vm1086, %v1079, %v1083
      %v1088 = vand.u32 2147483647, %v641
      %vm1089 = vcmp.eq.f32.partialorder %v1088, 8.507059e+37
      %v1090 = vand.u32 %v641, 2147483648
      %v1091 = vor.u32 1.1754944e-38, %v1090
      %v1092 = vsel %vm1089, %v1091, %v1087
      %v1093 = vmul.f32 1.0, %v1092
      %v1094 = vrcp.pop %v642
      %v1095 = vmul.f32 %v642, %v1094
      %v1096 = vsub.f32 1.0, %v1095
      %v1097 = vmul.f32 %v1094, %v1096
      %v1098 = vadd.f32 %v1094, %v1097
      %vm1099 = vweird.f32 %v642
      %vm1100 = vweird.f32 %v1094
      %vm1101 = vmor %vm1099, %vm1100
      %v1102 = vsel %vm1101, %v1094, %v1098
      %v1103 = vand.u32 2147483647, %v642
      %vm1104 = vcmp.eq.f32.partialorder %v1103, 8.507059e+37
      %v1105 = vand.u32 %v642, 2147483648
      %v1106 = vor.u32 1.1754944e-38, %v1105
      %v1107 = vsel %vm1104, %v1106, %v1102
      %v1108 = vmul.f32 1.0, %v1107
      %v1109 = vrcp.pop %v643
      %v1110 = vmul.f32 %v643, %v1109
      %v1111 = vsub.f32 1.0, %v1110
      %v1112 = vmul.f32 %v1109, %v1111
      %v1113 = vadd.f32 %v1109, %v1112
      %vm1114 = vweird.f32 %v643
      %vm1115 = vweird.f32 %v1109
      %vm1116 = vmor %vm1114, %vm1115
      %v1117 = vsel %vm1116, %v1109, %v1113
      %v1118 = vand.u32 2147483647, %v643
      %vm1119 = vcmp.eq.f32.partialorder %v1118, 8.507059e+37
      %v1120 = vand.u32 %v643, 2147483648
      %v1121 = vor.u32 1.1754944e-38, %v1120
      %v1122 = vsel %vm1119, %v1121, %v1117
      %v1123 = vmul.f32 1.0, %v1122
      %v1124 = vmul.f32 %v421, %v658
      %v1125 = vmul.f32 %v424, %v673
      %v1126 = vmul.f32 %v427, %v688
      %v1127 = vmul.f32 %v430, %v703
      %v1128 = vmul.f32 %v433, %v718
      %v1129 = vmul.f32 %v436, %v733
      %v1130 = vmul.f32 %v439, %v748
      %v1131 = vmul.f32 %v442, %v763
      %v1132 = vmul.f32 %v445, %v778
      %v1133 = vmul.f32 %v448, %v793
      %v1134 = vmul.f32 %v451, %v808
      %v1135 = vmul.f32 %v454, %v823
      %v1136 = vmul.f32 %v457, %v838
      %v1137 = vmul.f32 %v460, %v853
      %v1138 = vmul.f32 %v463, %v868
      %v1139 = vmul.f32 %v466, %v883
      %v1140 = vmul.f32 %v469, %v898
      %v1141 = vmul.f32 %v472, %v913
      %v1142 = vmul.f32 %v475, %v928
      %v1143 = vmul.f32 %v478, %v943
      %v1144 = vmul.f32 %v481, %v958
      %v1145 = vmul.f32 %v484, %v973
      %v1146 = vmul.f32 %v487, %v988
      %v1147 = vmul.f32 %v490, %v1003
      %v1148 = vmul.f32 %v493, %v1018
      %v1149 = vmul.f32 %v496, %v1033
      %v1150 = vmul.f32 %v499, %v1048
      %v1151 = vmul.f32 %v502, %v1063
      %v1152 = vmul.f32 %v505, %v1078
      %v1153 = vmul.f32 %v508, %v1093
      %v1154 = vmul.f32 %v511, %v1108
      %v1155 = vmul.f32 %v514, %v1123
      %vm1156 = vcmask 31744
      %1157 = vst.msk [vmem:[%s261] sm:$0xff] %vm1156, %v1124
      %1158 = vst.msk [vmem:[%s261 + $0x8] sm:$0xff] %vm1156, %v1125
      %1159 = vst.msk [vmem:[%s261 + $0x10] sm:$0xff] %vm1156, %v1126
      %1160 = vst.msk [vmem:[%s261 + $0x18] sm:$0xff] %vm1156, %v1127
      %1161 = vst.msk [vmem:[%s261 + $0x20] sm:$0xff] %vm1156, %v1128
      %1162 = vst.msk [vmem:[%s261 + $0x28] sm:$0xff] %vm1156, %v1129
      %1163 = vst.msk [vmem:[%s261 + $0x30] sm:$0xff] %vm1156, %v1130
      %1164 = vst.msk [vmem:[%s261 + $0x38] sm:$0xff] %vm1156, %v1131
      %1165 = vst.msk [vmem:[%s261 + $0x40] sm:$0xff] %vm1156, %v1132
      %1166 = vst.msk [vmem:[%s261 + $0x48] sm:$0xff] %vm1156, %v1133
      %1167 = vst.msk [vmem:[%s261 + $0x50] sm:$0xff] %vm1156, %v1134
      %1168 = vst.msk [vmem:[%s261 + $0x58] sm:$0xff] %vm1156, %v1135
      %1169 = vst.msk [vmem:[%s261 + $0x60] sm:$0xff] %vm1156, %v1136
      %1170 = vst.msk [vmem:[%s261 + $0x68] sm:$0xff] %vm1156, %v1137
      %1171 = vst.msk [vmem:[%s261 + $0x70] sm:$0xff] %vm1156, %v1138
      %1172 = vst.msk [vmem:[%s261 + $0x78] sm:$0xff] %vm1156, %v1139
      %1173 = vst.msk [vmem:[%s261 + $0x80] sm:$0xff] %vm1156, %v1140
      %1174 = vst.msk [vmem:[%s261 + $0x88] sm:$0xff] %vm1156, %v1141
      %1175 = vst.msk [vmem:[%s261 + $0x90] sm:$0xff] %vm1156, %v1142
      %1176 = vst.msk [vmem:[%s261 + $0x98] sm:$0xff] %vm1156, %v1143
      %1177 = vst.msk [vmem:[%s261 + $0xa0] sm:$0xff] %vm1156, %v1144
      %1178 = vst.msk [vmem:[%s261 + $0xa8] sm:$0xff] %vm1156, %v1145
      %1179 = vst.msk [vmem:[%s261 + $0xb0] sm:$0xff] %vm1156, %v1146
      %1180 = vst.msk [vmem:[%s261 + $0xb8] sm:$0xff] %vm1156, %v1147
      %1181 = vst.msk [vmem:[%s261 + $0xc0] sm:$0xff] %vm1156, %v1148
      %1182 = vst.msk [vmem:[%s261 + $0xc8] sm:$0xff] %vm1156, %v1149
      %1183 = vst.msk [vmem:[%s261 + $0xd0] sm:$0xff] %vm1156, %v1150
      %1184 = vst.msk [vmem:[%s261 + $0xd8] sm:$0xff] %vm1156, %v1151
      %1185 = vst.msk [vmem:[%s261 + $0xe0] sm:$0xff] %vm1156, %v1152
      %1186 = vst.msk [vmem:[%s261 + $0xe8] sm:$0xff] %vm1156, %v1153
      %1187 = vst.msk [vmem:[%s261 + $0xf0] sm:$0xff] %vm1156, %v1154
      %1188 = vst.msk [vmem:[%s261 + $0xf8] sm:$0xff] %vm1156, %v1155
      %v1189 = vld [vmem:[%s3] sm:$0xff]
      %v1190 = vld [vmem:[%s4] sm:$0x1]
      %v1192 = vperm.slane %v1190, 0
      %1194 = vmatpush.msra.mxu0 0.0
      %1195 = vmatpush.msra.mxu0 0.0
      %1196 = vmatpush.msra.mxu0 0.0
      %1197 = vmatpush.msra.mxu0 0.0
      %1198 = vmatpush.msra.mxu0 0.0
      %1199 = vmatpush.msra.mxu0 0.0
      %1200 = vmatpush.msra.mxu0 0.0
      %1201 = vmatpush.msra.mxu0 0.0
      %1202 = vmatpush.msra.mxu0 0.0
      %1203 = vmatpush.msra.mxu0 0.0
      %1204 = vmatpush.msra.mxu0 0.0
      %1205 = vmatpush.msra.mxu0 0.0
      %1206 = vmatpush.msra.mxu0 0.0
      %1207 = vmatpush.msra.mxu0 0.0
      %1208 = vmatpush.msra.mxu0 0.0
      %1209 = vmatpush.msra.mxu0 %v1189
      %1210 = vmatmul.f32.gmra.mxu0 %v308
      %v1211 = vpop.f32.mrf.mxu0
      %v1212 = vadd.f32 %v1192, %v1211
      %1213 = vmatmul.f32.gmra.mxu0 %v311
      %v1214 = vpop.f32.mrf.mxu0
      %v1215 = vadd.f32 %v1192, %v1214
      %1216 = vmatmul.f32.gmra.mxu0 %v314
      %v1217 = vpop.f32.mrf.mxu0
      %v1218 = vadd.f32 %v1192, %v1217
      %1219 = vmatmul.f32.gmra.mxu0 %v317
      %v1220 = vpop.f32.mrf.mxu0
      %v1221 = vadd.f32 %v1192, %v1220
      %1222 = vmatmul.f32.gmra.mxu0 %v320
      %v1223 = vpop.f32.mrf.mxu0
      %v1224 = vadd.f32 %v1192, %v1223
      %1225 = vmatmul.f32.gmra.mxu0 %v323
      %v1226 = vpop.f32.mrf.mxu0
      %v1227 = vadd.f32 %v1192, %v1226
      %1228 = vmatmul.f32.gmra.mxu0 %v326
      %v1229 = vpop.f32.mrf.mxu0
      %v1230 = vadd.f32 %v1192, %v1229
      %1231 = vmatmul.f32.gmra.mxu0 %v329
      %v1232 = vpop.f32.mrf.mxu0
      %v1233 = vadd.f32 %v1192, %v1232
      %1234 = vmatmul.f32.gmra.mxu0 %v332
      %v1235 = vpop.f32.mrf.mxu0
      %v1236 = vadd.f32 %v1192, %v1235
      %1237 = vmatmul.f32.gmra.mxu0 %v335
      %v1238 = vpop.f32.mrf.mxu0
      %v1239 = vadd.f32 %v1192, %v1238
      %1240 = vmatmul.f32.gmra.mxu0 %v338
      %v1241 = vpop.f32.mrf.mxu0
      %v1242 = vadd.f32 %v1192, %v1241
      %1243 = vmatmul.f32.gmra.mxu0 %v341
      %v1244 = vpop.f32.mrf.mxu0
      %v1245 = vadd.f32 %v1192, %v1244
      %1246 = vmatmul.f32.gmra.mxu0 %v344
      %v1247 = vpop.f32.mrf.mxu0
      %v1248 = vadd.f32 %v1192, %v1247
      %1249 = vmatmul.f32.gmra.mxu0 %v347
      %v1250 = vpop.f32.mrf.mxu0
      %v1251 = vadd.f32 %v1192, %v1250
      %1252 = vmatmul.f32.gmra.mxu0 %v350
      %v1253 = vpop.f32.mrf.mxu0
      %v1254 = vadd.f32 %v1192, %v1253
      %1255 = vmatmul.f32.gmra.mxu0 %v353
      %v1256 = vpop.f32.mrf.mxu0
      %v1257 = vadd.f32 %v1192, %v1256
      %1258 = vmatmul.f32.gmra.mxu0 %v356
      %v1259 = vpop.f32.mrf.mxu0
      %v1260 = vadd.f32 %v1192, %v1259
      %1261 = vmatmul.f32.gmra.mxu0 %v359
      %v1262 = vpop.f32.mrf.mxu0
      %v1263 = vadd.f32 %v1192, %v1262
      %1264 = vmatmul.f32.gmra.mxu0 %v362
      %v1265 = vpop.f32.mrf.mxu0
      %v1266 = vadd.f32 %v1192, %v1265
      %1267 = vmatmul.f32.gmra.mxu0 %v365
      %v1268 = vpop.f32.mrf.mxu0
      %v1269 = vadd.f32 %v1192, %v1268
      %1270 = vmatmul.f32.gmra.mxu0 %v368
      %v1271 = vpop.f32.mrf.mxu0
      %v1272 = vadd.f32 %v1192, %v1271
      %1273 = vmatmul.f32.gmra.mxu0 %v371
      %v1274 = vpop.f32.mrf.mxu0
      %v1275 = vadd.f32 %v1192, %v1274
      %1276 = vmatmul.f32.gmra.mxu0 %v374
      %v1277 = vpop.f32.mrf.mxu0
      %v1278 = vadd.f32 %v1192, %v1277
      %1279 = vmatmul.f32.gmra.mxu0 %v377
      %v1280 = vpop.f32.mrf.mxu0
      %v1281 = vadd.f32 %v1192, %v1280
      %1282 = vmatmul.f32.gmra.mxu0 %v380
      %v1283 = vpop.f32.mrf.mxu0
      %v1284 = vadd.f32 %v1192, %v1283
      %1285 = vmatmul.f32.gmra.mxu0 %v383
      %v1286 = vpop.f32.mrf.mxu0
      %v1287 = vadd.f32 %v1192, %v1286
      %1288 = vmatmul.f32.gmra.mxu0 %v386
      %v1289 = vpop.f32.mrf.mxu0
      %v1290 = vadd.f32 %v1192, %v1289
      %1291 = vmatmul.f32.gmra.mxu0 %v389
      %v1292 = vpop.f32.mrf.mxu0
      %v1293 = vadd.f32 %v1192, %v1292
      %1294 = vmatmul.f32.gmra.mxu0 %v392
      %v1295 = vpop.f32.mrf.mxu0
      %v1296 = vadd.f32 %v1192, %v1295
      %1297 = vmatmul.f32.gmra.mxu0 %v395
      %v1298 = vpop.f32.mrf.mxu0
      %v1299 = vadd.f32 %v1192, %v1298
      %1300 = vmatmul.f32.gmra.mxu0 %v398
      %v1301 = vpop.f32.mrf.mxu0
      %v1302 = vadd.f32 %v1192, %v1301
      %1303 = vmatmul.f32.gmra.mxu0 %v401
      %v1304 = vpop.f32.mrf.mxu0
      %v1305 = vadd.f32 %v1192, %v1304
      %1306 = vdwg.mxu0
      %v1307 = vxor.u32 %v1212, 2147483648
      %v1308 = vxor.u32 %v1215, 2147483648
      %v1309 = vxor.u32 %v1218, 2147483648
      %v1310 = vxor.u32 %v1221, 2147483648
      %v1311 = vxor.u32 %v1224, 2147483648
      %v1312 = vxor.u32 %v1227, 2147483648
      %v1313 = vxor.u32 %v1230, 2147483648
      %v1314 = vxor.u32 %v1233, 2147483648
      %v1315 = vxor.u32 %v1236, 2147483648
      %v1316 = vxor.u32 %v1239, 2147483648
      %v1317 = vxor.u32 %v1242, 2147483648
      %v1318 = vxor.u32 %v1245, 2147483648
      %v1319 = vxor.u32 %v1248, 2147483648
      %v1320 = vxor.u32 %v1251, 2147483648
      %v1321 = vxor.u32 %v1254, 2147483648
      %v1322 = vxor.u32 %v1257, 2147483648
      %v1323 = vxor.u32 %v1260, 2147483648
      %v1324 = vxor.u32 %v1263, 2147483648
      %v1325 = vxor.u32 %v1266, 2147483648
      %v1326 = vxor.u32 %v1269, 2147483648
      %v1327 = vxor.u32 %v1272, 2147483648
      %v1328 = vxor.u32 %v1275, 2147483648
      %v1329 = vxor.u32 %v1278, 2147483648
      %v1330 = vxor.u32 %v1281, 2147483648
      %v1331 = vxor.u32 %v1284, 2147483648
      %v1332 = vxor.u32 %v1287, 2147483648
      %v1333 = vxor.u32 %v1290, 2147483648
      %v1334 = vxor.u32 %v1293, 2147483648
      %v1335 = vxor.u32 %v1296, 2147483648
      %v1336 = vxor.u32 %v1299, 2147483648
      %v1337 = vxor.u32 %v1302, 2147483648
      %v1338 = vxor.u32 %v1305, 2147483648
      %v1339 = vmul.f32 %v1307, 1.442695
      %v1340 = vpow.pop %v1339
      %v1341 = vmul.f32 %v1308, 1.442695
      %v1342 = vpow.pop %v1341
      %v1343 = vmul.f32 %v1309, 1.442695
      %v1344 = vpow.pop %v1343
      %v1345 = vmul.f32 %v1310, 1.442695
      %v1346 = vpow.pop %v1345
      %v1347 = vmul.f32 %v1311, 1.442695
      %v1348 = vpow.pop %v1347
      %v1349 = vmul.f32 %v1312, 1.442695
      %v1350 = vpow.pop %v1349
      %v1351 = vmul.f32 %v1313, 1.442695
      %v1352 = vpow.pop %v1351
      %v1353 = vmul.f32 %v1314, 1.442695
      %v1354 = vpow.pop %v1353
      %v1355 = vmul.f32 %v1315, 1.442695
      %v1356 = vpow.pop %v1355
      %v1357 = vmul.f32 %v1316, 1.442695
      %v1358 = vpow.pop %v1357
      %v1359 = vmul.f32 %v1317, 1.442695
      %v1360 = vpow.pop %v1359
      %v1361 = vmul.f32 %v1318, 1.442695
      %v1362 = vpow.pop %v1361
      %v1363 = vmul.f32 %v1319, 1.442695
      %v1364 = vpow.pop %v1363
      %v1365 = vmul.f32 %v1320, 1.442695
      %v1366 = vpow.pop %v1365
      %v1367 = vmul.f32 %v1321, 1.442695
      %v1368 = vpow.pop %v1367
      %v1369 = vmul.f32 %v1322, 1.442695
      %v1370 = vpow.pop %v1369
      %v1371 = vmul.f32 %v1323, 1.442695
      %v1372 = vpow.pop %v1371
      %v1373 = vmul.f32 %v1324, 1.442695
      %v1374 = vpow.pop %v1373
      %v1375 = vmul.f32 %v1325, 1.442695
      %v1376 = vpow.pop %v1375
      %v1377 = vmul.f32 %v1326, 1.442695
      %v1378 = vpow.pop %v1377
      %v1379 = vmul.f32 %v1327, 1.442695
      %v1380 = vpow.pop %v1379
      %v1381 = vmul.f32 %v1328, 1.442695
      %v1382 = vpow.pop %v1381
      %v1383 = vmul.f32 %v1329, 1.442695
      %v1384 = vpow.pop %v1383
      %v1385 = vmul.f32 %v1330, 1.442695
      %v1386 = vpow.pop %v1385
      %v1387 = vmul.f32 %v1331, 1.442695
      %v1388 = vpow.pop %v1387
      %v1389 = vmul.f32 %v1332, 1.442695
      %v1390 = vpow.pop %v1389
      %v1391 = vmul.f32 %v1333, 1.442695
      %v1392 = vpow.pop %v1391
      %v1393 = vmul.f32 %v1334, 1.442695
      %v1394 = vpow.pop %v1393
      %v1395 = vmul.f32 %v1335, 1.442695
      %v1396 = vpow.pop %v1395
      %v1397 = vmul.f32 %v1336, 1.442695
      %v1398 = vpow.pop %v1397
      %v1399 = vmul.f32 %v1337, 1.442695
      %v1400 = vpow.pop %v1399
      %v1401 = vmul.f32 %v1338, 1.442695
      %v1402 = vpow.pop %v1401
      %v1403 = vadd.f32 %v1340, 1.0
      %v1404 = vadd.f32 %v1342, 1.0
      %v1405 = vadd.f32 %v1344, 1.0
      %v1406 = vadd.f32 %v1346, 1.0
      %v1407 = vadd.f32 %v1348, 1.0
      %v1408 = vadd.f32 %v1350, 1.0
      %v1409 = vadd.f32 %v1352, 1.0
      %v1410 = vadd.f32 %v1354, 1.0
      %v1411 = vadd.f32 %v1356, 1.0
      %v1412 = vadd.f32 %v1358, 1.0
      %v1413 = vadd.f32 %v1360, 1.0
      %v1414 = vadd.f32 %v1362, 1.0
      %v1415 = vadd.f32 %v1364, 1.0
      %v1416 = vadd.f32 %v1366, 1.0
      %v1417 = vadd.f32 %v1368, 1.0
      %v1418 = vadd.f32 %v1370, 1.0
      %v1419 = vadd.f32 %v1372, 1.0
      %v1420 = vadd.f32 %v1374, 1.0
      %v1421 = vadd.f32 %v1376, 1.0
      %v1422 = vadd.f32 %v1378, 1.0
      %v1423 = vadd.f32 %v1380, 1.0
      %v1424 = vadd.f32 %v1382, 1.0
      %v1425 = vadd.f32 %v1384, 1.0
      %v1426 = vadd.f32 %v1386, 1.0
      %v1427 = vadd.f32 %v1388, 1.0
      %v1428 = vadd.f32 %v1390, 1.0
      %v1429 = vadd.f32 %v1392, 1.0
      %v1430 = vadd.f32 %v1394, 1.0
      %v1431 = vadd.f32 %v1396, 1.0
      %v1432 = vadd.f32 %v1398, 1.0
      %v1433 = vadd.f32 %v1400, 1.0
      %v1434 = vadd.f32 %v1402, 1.0
      %v1435 = vrcp.pop %v1403
      %v1436 = vmul.f32 %v1403, %v1435
      %v1437 = vsub.f32 1.0, %v1436
      %v1438 = vmul.f32 %v1435, %v1437
      %v1439 = vadd.f32 %v1435, %v1438
      %vm1440 = vweird.f32 %v1403
      %vm1441 = vweird.f32 %v1435
      %vm1442 = vmor %vm1440, %vm1441
      %v1443 = vsel %vm1442, %v1435, %v1439
      %v1444 = vand.u32 2147483647, %v1403
      %vm1445 = vcmp.eq.f32.partialorder %v1444, 8.507059e+37
      %v1446 = vand.u32 %v1403, 2147483648
      %v1447 = vor.u32 1.1754944e-38, %v1446
      %v1448 = vsel %vm1445, %v1447, %v1443
      %v1449 = vmul.f32 1.0, %v1448
      %v1450 = vrcp.pop %v1404
      %v1451 = vmul.f32 %v1404, %v1450
      %v1452 = vsub.f32 1.0, %v1451
      %v1453 = vmul.f32 %v1450, %v1452
      %v1454 = vadd.f32 %v1450, %v1453
      %vm1455 = vweird.f32 %v1404
      %vm1456 = vweird.f32 %v1450
      %vm1457 = vmor %vm1455, %vm1456
      %v1458 = vsel %vm1457, %v1450, %v1454
      %v1459 = vand.u32 2147483647, %v1404
      %vm1460 = vcmp.eq.f32.partialorder %v1459, 8.507059e+37
      %v1461 = vand.u32 %v1404, 2147483648
      %v1462 = vor.u32 1.1754944e-38, %v1461
      %v1463 = vsel %vm1460, %v1462, %v1458
      %v1464 = vmul.f32 1.0, %v1463
      %v1465 = vrcp.pop %v1405
      %v1466 = vmul.f32 %v1405, %v1465
      %v1467 = vsub.f32 1.0, %v1466
      %v1468 = vmul.f32 %v1465, %v1467
      %v1469 = vadd.f32 %v1465, %v1468
      %vm1470 = vweird.f32 %v1405
      %vm1471 = vweird.f32 %v1465
      %vm1472 = vmor %vm1470, %vm1471
      %v1473 = vsel %vm1472, %v1465, %v1469
      %v1474 = vand.u32 2147483647, %v1405
      %vm1475 = vcmp.eq.f32.partialorder %v1474, 8.507059e+37
      %v1476 = vand.u32 %v1405, 2147483648
      %v1477 = vor.u32 1.1754944e-38, %v1476
      %v1478 = vsel %vm1475, %v1477, %v1473
      %v1479 = vmul.f32 1.0, %v1478
      %v1480 = vrcp.pop %v1406
      %v1481 = vmul.f32 %v1406, %v1480
      %v1482 = vsub.f32 1.0, %v1481
      %v1483 = vmul.f32 %v1480, %v1482
      %v1484 = vadd.f32 %v1480, %v1483
      %vm1485 = vweird.f32 %v1406
      %vm1486 = vweird.f32 %v1480
      %vm1487 = vmor %vm1485, %vm1486
      %v1488 = vsel %vm1487, %v1480, %v1484
      %v1489 = vand.u32 2147483647, %v1406
      %vm1490 = vcmp.eq.f32.partialorder %v1489, 8.507059e+37
      %v1491 = vand.u32 %v1406, 2147483648
      %v1492 = vor.u32 1.1754944e-38, %v1491
      %v1493 = vsel %vm1490, %v1492, %v1488
      %v1494 = vmul.f32 1.0, %v1493
      %v1495 = vrcp.pop %v1407
      %v1496 = vmul.f32 %v1407, %v1495
      %v1497 = vsub.f32 1.0, %v1496
      %v1498 = vmul.f32 %v1495, %v1497
      %v1499 = vadd.f32 %v1495, %v1498
      %vm1500 = vweird.f32 %v1407
      %vm1501 = vweird.f32 %v1495
      %vm1502 = vmor %vm1500, %vm1501
      %v1503 = vsel %vm1502, %v1495, %v1499
      %v1504 = vand.u32 2147483647, %v1407
      %vm1505 = vcmp.eq.f32.partialorder %v1504, 8.507059e+37
      %v1506 = vand.u32 %v1407, 2147483648
      %v1507 = vor.u32 1.1754944e-38, %v1506
      %v1508 = vsel %vm1505, %v1507, %v1503
      %v1509 = vmul.f32 1.0, %v1508
      %v1510 = vrcp.pop %v1408
      %v1511 = vmul.f32 %v1408, %v1510
      %v1512 = vsub.f32 1.0, %v1511
      %v1513 = vmul.f32 %v1510, %v1512
      %v1514 = vadd.f32 %v1510, %v1513
      %vm1515 = vweird.f32 %v1408
      %vm1516 = vweird.f32 %v1510
      %vm1517 = vmor %vm1515, %vm1516
      %v1518 = vsel %vm1517, %v1510, %v1514
      %v1519 = vand.u32 2147483647, %v1408
      %vm1520 = vcmp.eq.f32.partialorder %v1519, 8.507059e+37
      %v1521 = vand.u32 %v1408, 2147483648
      %v1522 = vor.u32 1.1754944e-38, %v1521
      %v1523 = vsel %vm1520, %v1522, %v1518
      %v1524 = vmul.f32 1.0, %v1523
      %v1525 = vrcp.pop %v1409
      %v1526 = vmul.f32 %v1409, %v1525
      %v1527 = vsub.f32 1.0, %v1526
      %v1528 = vmul.f32 %v1525, %v1527
      %v1529 = vadd.f32 %v1525, %v1528
      %vm1530 = vweird.f32 %v1409
      %vm1531 = vweird.f32 %v1525
      %vm1532 = vmor %vm1530, %vm1531
      %v1533 = vsel %vm1532, %v1525, %v1529
      %v1534 = vand.u32 2147483647, %v1409
      %vm1535 = vcmp.eq.f32.partialorder %v1534, 8.507059e+37
      %v1536 = vand.u32 %v1409, 2147483648
      %v1537 = vor.u32 1.1754944e-38, %v1536
      %v1538 = vsel %vm1535, %v1537, %v1533
      %v1539 = vmul.f32 1.0, %v1538
      %v1540 = vrcp.pop %v1410
      %v1541 = vmul.f32 %v1410, %v1540
      %v1542 = vsub.f32 1.0, %v1541
      %v1543 = vmul.f32 %v1540, %v1542
      %v1544 = vadd.f32 %v1540, %v1543
      %vm1545 = vweird.f32 %v1410
      %vm1546 = vweird.f32 %v1540
      %vm1547 = vmor %vm1545, %vm1546
      %v1548 = vsel %vm1547, %v1540, %v1544
      %v1549 = vand.u32 2147483647, %v1410
      %vm1550 = vcmp.eq.f32.partialorder %v1549, 8.507059e+37
      %v1551 = vand.u32 %v1410, 2147483648
      %v1552 = vor.u32 1.1754944e-38, %v1551
      %v1553 = vsel %vm1550, %v1552, %v1548
      %v1554 = vmul.f32 1.0, %v1553
      %v1555 = vrcp.pop %v1411
      %v1556 = vmul.f32 %v1411, %v1555
      %v1557 = vsub.f32 1.0, %v1556
      %v1558 = vmul.f32 %v1555, %v1557
      %v1559 = vadd.f32 %v1555, %v1558
      %vm1560 = vweird.f32 %v1411
      %vm1561 = vweird.f32 %v1555
      %vm1562 = vmor %vm1560, %vm1561
      %v1563 = vsel %vm1562, %v1555, %v1559
      %v1564 = vand.u32 2147483647, %v1411
      %vm1565 = vcmp.eq.f32.partialorder %v1564, 8.507059e+37
      %v1566 = vand.u32 %v1411, 2147483648
      %v1567 = vor.u32 1.1754944e-38, %v1566
      %v1568 = vsel %vm1565, %v1567, %v1563
      %v1569 = vmul.f32 1.0, %v1568
      %v1570 = vrcp.pop %v1412
      %v1571 = vmul.f32 %v1412, %v1570
      %v1572 = vsub.f32 1.0, %v1571
      %v1573 = vmul.f32 %v1570, %v1572
      %v1574 = vadd.f32 %v1570, %v1573
      %vm1575 = vweird.f32 %v1412
      %vm1576 = vweird.f32 %v1570
      %vm1577 = vmor %vm1575, %vm1576
      %v1578 = vsel %vm1577, %v1570, %v1574
      %v1579 = vand.u32 2147483647, %v1412
      %vm1580 = vcmp.eq.f32.partialorder %v1579, 8.507059e+37
      %v1581 = vand.u32 %v1412, 2147483648
      %v1582 = vor.u32 1.1754944e-38, %v1581
      %v1583 = vsel %vm1580, %v1582, %v1578
      %v1584 = vmul.f32 1.0, %v1583
      %v1585 = vrcp.pop %v1413
      %v1586 = vmul.f32 %v1413, %v1585
      %v1587 = vsub.f32 1.0, %v1586
      %v1588 = vmul.f32 %v1585, %v1587
      %v1589 = vadd.f32 %v1585, %v1588
      %vm1590 = vweird.f32 %v1413
      %vm1591 = vweird.f32 %v1585
      %vm1592 = vmor %vm1590, %vm1591
      %v1593 = vsel %vm1592, %v1585, %v1589
      %v1594 = vand.u32 2147483647, %v1413
      %vm1595 = vcmp.eq.f32.partialorder %v1594, 8.507059e+37
      %v1596 = vand.u32 %v1413, 2147483648
      %v1597 = vor.u32 1.1754944e-38, %v1596
      %v1598 = vsel %vm1595, %v1597, %v1593
      %v1599 = vmul.f32 1.0, %v1598
      %v1600 = vrcp.pop %v1414
      %v1601 = vmul.f32 %v1414, %v1600
      %v1602 = vsub.f32 1.0, %v1601
      %v1603 = vmul.f32 %v1600, %v1602
      %v1604 = vadd.f32 %v1600, %v1603
      %vm1605 = vweird.f32 %v1414
      %vm1606 = vweird.f32 %v1600
      %vm1607 = vmor %vm1605, %vm1606
      %v1608 = vsel %vm1607, %v1600, %v1604
      %v1609 = vand.u32 2147483647, %v1414
      %vm1610 = vcmp.eq.f32.partialorder %v1609, 8.507059e+37
      %v1611 = vand.u32 %v1414, 2147483648
      %v1612 = vor.u32 1.1754944e-38, %v1611
      %v1613 = vsel %vm1610, %v1612, %v1608
      %v1614 = vmul.f32 1.0, %v1613
      %v1615 = vrcp.pop %v1415
      %v1616 = vmul.f32 %v1415, %v1615
      %v1617 = vsub.f32 1.0, %v1616
      %v1618 = vmul.f32 %v1615, %v1617
      %v1619 = vadd.f32 %v1615, %v1618
      %vm1620 = vweird.f32 %v1415
      %vm1621 = vweird.f32 %v1615
      %vm1622 = vmor %vm1620, %vm1621
      %v1623 = vsel %vm1622, %v1615, %v1619
      %v1624 = vand.u32 2147483647, %v1415
      %vm1625 = vcmp.eq.f32.partialorder %v1624, 8.507059e+37
      %v1626 = vand.u32 %v1415, 2147483648
      %v1627 = vor.u32 1.1754944e-38, %v1626
      %v1628 = vsel %vm1625, %v1627, %v1623
      %v1629 = vmul.f32 1.0, %v1628
      %v1630 = vrcp.pop %v1416
      %v1631 = vmul.f32 %v1416, %v1630
      %v1632 = vsub.f32 1.0, %v1631
      %v1633 = vmul.f32 %v1630, %v1632
      %v1634 = vadd.f32 %v1630, %v1633
      %vm1635 = vweird.f32 %v1416
      %vm1636 = vweird.f32 %v1630
      %vm1637 = vmor %vm1635, %vm1636
      %v1638 = vsel %vm1637, %v1630, %v1634
      %v1639 = vand.u32 2147483647, %v1416
      %vm1640 = vcmp.eq.f32.partialorder %v1639, 8.507059e+37
      %v1641 = vand.u32 %v1416, 2147483648
      %v1642 = vor.u32 1.1754944e-38, %v1641
      %v1643 = vsel %vm1640, %v1642, %v1638
      %v1644 = vmul.f32 1.0, %v1643
      %v1645 = vrcp.pop %v1417
      %v1646 = vmul.f32 %v1417, %v1645
      %v1647 = vsub.f32 1.0, %v1646
      %v1648 = vmul.f32 %v1645, %v1647
      %v1649 = vadd.f32 %v1645, %v1648
      %vm1650 = vweird.f32 %v1417
      %vm1651 = vweird.f32 %v1645
      %vm1652 = vmor %vm1650, %vm1651
      %v1653 = vsel %vm1652, %v1645, %v1649
      %v1654 = vand.u32 2147483647, %v1417
      %vm1655 = vcmp.eq.f32.partialorder %v1654, 8.507059e+37
      %v1656 = vand.u32 %v1417, 2147483648
      %v1657 = vor.u32 1.1754944e-38, %v1656
      %v1658 = vsel %vm1655, %v1657, %v1653
      %v1659 = vmul.f32 1.0, %v1658
      %v1660 = vrcp.pop %v1418
      %v1661 = vmul.f32 %v1418, %v1660
      %v1662 = vsub.f32 1.0, %v1661
      %v1663 = vmul.f32 %v1660, %v1662
      %v1664 = vadd.f32 %v1660, %v1663
      %vm1665 = vweird.f32 %v1418
      %vm1666 = vweird.f32 %v1660
      %vm1667 = vmor %vm1665, %vm1666
      %v1668 = vsel %vm1667, %v1660, %v1664
      %v1669 = vand.u32 2147483647, %v1418
      %vm1670 = vcmp.eq.f32.partialorder %v1669, 8.507059e+37
      %v1671 = vand.u32 %v1418, 2147483648
      %v1672 = vor.u32 1.1754944e-38, %v1671
      %v1673 = vsel %vm1670, %v1672, %v1668
      %v1674 = vmul.f32 1.0, %v1673
      %v1675 = vrcp.pop %v1419
      %v1676 = vmul.f32 %v1419, %v1675
      %v1677 = vsub.f32 1.0, %v1676
      %v1678 = vmul.f32 %v1675, %v1677
      %v1679 = vadd.f32 %v1675, %v1678
      %vm1680 = vweird.f32 %v1419
      %vm1681 = vweird.f32 %v1675
      %vm1682 = vmor %vm1680, %vm1681
      %v1683 = vsel %vm1682, %v1675, %v1679
      %v1684 = vand.u32 2147483647, %v1419
      %vm1685 = vcmp.eq.f32.partialorder %v1684, 8.507059e+37
      %v1686 = vand.u32 %v1419, 2147483648
      %v1687 = vor.u32 1.1754944e-38, %v1686
      %v1688 = vsel %vm1685, %v1687, %v1683
      %v1689 = vmul.f32 1.0, %v1688
      %v1690 = vrcp.pop %v1420
      %v1691 = vmul.f32 %v1420, %v1690
      %v1692 = vsub.f32 1.0, %v1691
      %v1693 = vmul.f32 %v1690, %v1692
      %v1694 = vadd.f32 %v1690, %v1693
      %vm1695 = vweird.f32 %v1420
      %vm1696 = vweird.f32 %v1690
      %vm1697 = vmor %vm1695, %vm1696
      %v1698 = vsel %vm1697, %v1690, %v1694
      %v1699 = vand.u32 2147483647, %v1420
      %vm1700 = vcmp.eq.f32.partialorder %v1699, 8.507059e+37
      %v1701 = vand.u32 %v1420, 2147483648
      %v1702 = vor.u32 1.1754944e-38, %v1701
      %v1703 = vsel %vm1700, %v1702, %v1698
      %v1704 = vmul.f32 1.0, %v1703
      %v1705 = vrcp.pop %v1421
      %v1706 = vmul.f32 %v1421, %v1705
      %v1707 = vsub.f32 1.0, %v1706
      %v1708 = vmul.f32 %v1705, %v1707
      %v1709 = vadd.f32 %v1705, %v1708
      %vm1710 = vweird.f32 %v1421
      %vm1711 = vweird.f32 %v1705
      %vm1712 = vmor %vm1710, %vm1711
      %v1713 = vsel %vm1712, %v1705, %v1709
      %v1714 = vand.u32 2147483647, %v1421
      %vm1715 = vcmp.eq.f32.partialorder %v1714, 8.507059e+37
      %v1716 = vand.u32 %v1421, 2147483648
      %v1717 = vor.u32 1.1754944e-38, %v1716
      %v1718 = vsel %vm1715, %v1717, %v1713
      %v1719 = vmul.f32 1.0, %v1718
      %v1720 = vrcp.pop %v1422
      %v1721 = vmul.f32 %v1422, %v1720
      %v1722 = vsub.f32 1.0, %v1721
      %v1723 = vmul.f32 %v1720, %v1722
      %v1724 = vadd.f32 %v1720, %v1723
      %vm1725 = vweird.f32 %v1422
      %vm1726 = vweird.f32 %v1720
      %vm1727 = vmor %vm1725, %vm1726
      %v1728 = vsel %vm1727, %v1720, %v1724
      %v1729 = vand.u32 2147483647, %v1422
      %vm1730 = vcmp.eq.f32.partialorder %v1729, 8.507059e+37
      %v1731 = vand.u32 %v1422, 2147483648
      %v1732 = vor.u32 1.1754944e-38, %v1731
      %v1733 = vsel %vm1730, %v1732, %v1728
      %v1734 = vmul.f32 1.0, %v1733
      %v1735 = vrcp.pop %v1423
      %v1736 = vmul.f32 %v1423, %v1735
      %v1737 = vsub.f32 1.0, %v1736
      %v1738 = vmul.f32 %v1735, %v1737
      %v1739 = vadd.f32 %v1735, %v1738
      %vm1740 = vweird.f32 %v1423
      %vm1741 = vweird.f32 %v1735
      %vm1742 = vmor %vm1740, %vm1741
      %v1743 = vsel %vm1742, %v1735, %v1739
      %v1744 = vand.u32 2147483647, %v1423
      %vm1745 = vcmp.eq.f32.partialorder %v1744, 8.507059e+37
      %v1746 = vand.u32 %v1423, 2147483648
      %v1747 = vor.u32 1.1754944e-38, %v1746
      %v1748 = vsel %vm1745, %v1747, %v1743
      %v1749 = vmul.f32 1.0, %v1748
      %v1750 = vrcp.pop %v1424
      %v1751 = vmul.f32 %v1424, %v1750
      %v1752 = vsub.f32 1.0, %v1751
      %v1753 = vmul.f32 %v1750, %v1752
      %v1754 = vadd.f32 %v1750, %v1753
      %vm1755 = vweird.f32 %v1424
      %vm1756 = vweird.f32 %v1750
      %vm1757 = vmor %vm1755, %vm1756
      %v1758 = vsel %vm1757, %v1750, %v1754
      %v1759 = vand.u32 2147483647, %v1424
      %vm1760 = vcmp.eq.f32.partialorder %v1759, 8.507059e+37
      %v1761 = vand.u32 %v1424, 2147483648
      %v1762 = vor.u32 1.1754944e-38, %v1761
      %v1763 = vsel %vm1760, %v1762, %v1758
      %v1764 = vmul.f32 1.0, %v1763
      %v1765 = vrcp.pop %v1425
      %v1766 = vmul.f32 %v1425, %v1765
      %v1767 = vsub.f32 1.0, %v1766
      %v1768 = vmul.f32 %v1765, %v1767
      %v1769 = vadd.f32 %v1765, %v1768
      %vm1770 = vweird.f32 %v1425
      %vm1771 = vweird.f32 %v1765
      %vm1772 = vmor %vm1770, %vm1771
      %v1773 = vsel %vm1772, %v1765, %v1769
      %v1774 = vand.u32 2147483647, %v1425
      %vm1775 = vcmp.eq.f32.partialorder %v1774, 8.507059e+37
      %v1776 = vand.u32 %v1425, 2147483648
      %v1777 = vor.u32 1.1754944e-38, %v1776
      %v1778 = vsel %vm1775, %v1777, %v1773
      %v1779 = vmul.f32 1.0, %v1778
      %v1780 = vrcp.pop %v1426
      %v1781 = vmul.f32 %v1426, %v1780
      %v1782 = vsub.f32 1.0, %v1781
      %v1783 = vmul.f32 %v1780, %v1782
      %v1784 = vadd.f32 %v1780, %v1783
      %vm1785 = vweird.f32 %v1426
      %vm1786 = vweird.f32 %v1780
      %vm1787 = vmor %vm1785, %vm1786
      %v1788 = vsel %vm1787, %v1780, %v1784
      %v1789 = vand.u32 2147483647, %v1426
      %vm1790 = vcmp.eq.f32.partialorder %v1789, 8.507059e+37
      %v1791 = vand.u32 %v1426, 2147483648
      %v1792 = vor.u32 1.1754944e-38, %v1791
      %v1793 = vsel %vm1790, %v1792, %v1788
      %v1794 = vmul.f32 1.0, %v1793
      %v1795 = vrcp.pop %v1427
      %v1796 = vmul.f32 %v1427, %v1795
      %v1797 = vsub.f32 1.0, %v1796
      %v1798 = vmul.f32 %v1795, %v1797
      %v1799 = vadd.f32 %v1795, %v1798
      %vm1800 = vweird.f32 %v1427
      %vm1801 = vweird.f32 %v1795
      %vm1802 = vmor %vm1800, %vm1801
      %v1803 = vsel %vm1802, %v1795, %v1799
      %v1804 = vand.u32 2147483647, %v1427
      %vm1805 = vcmp.eq.f32.partialorder %v1804, 8.507059e+37
      %v1806 = vand.u32 %v1427, 2147483648
      %v1807 = vor.u32 1.1754944e-38, %v1806
      %v1808 = vsel %vm1805, %v1807, %v1803
      %v1809 = vmul.f32 1.0, %v1808
      %v1810 = vrcp.pop %v1428
      %v1811 = vmul.f32 %v1428, %v1810
      %v1812 = vsub.f32 1.0, %v1811
      %v1813 = vmul.f32 %v1810, %v1812
      %v1814 = vadd.f32 %v1810, %v1813
      %vm1815 = vweird.f32 %v1428
      %vm1816 = vweird.f32 %v1810
      %vm1817 = vmor %vm1815, %vm1816
      %v1818 = vsel %vm1817, %v1810, %v1814
      %v1819 = vand.u32 2147483647, %v1428
      %vm1820 = vcmp.eq.f32.partialorder %v1819, 8.507059e+37
      %v1821 = vand.u32 %v1428, 2147483648
      %v1822 = vor.u32 1.1754944e-38, %v1821
      %v1823 = vsel %vm1820, %v1822, %v1818
      %v1824 = vmul.f32 1.0, %v1823
      %v1825 = vrcp.pop %v1429
      %v1826 = vmul.f32 %v1429, %v1825
      %v1827 = vsub.f32 1.0, %v1826
      %v1828 = vmul.f32 %v1825, %v1827
      %v1829 = vadd.f32 %v1825, %v1828
      %vm1830 = vweird.f32 %v1429
      %vm1831 = vweird.f32 %v1825
      %vm1832 = vmor %vm1830, %vm1831
      %v1833 = vsel %vm1832, %v1825, %v1829
      %v1834 = vand.u32 2147483647, %v1429
      %vm1835 = vcmp.eq.f32.partialorder %v1834, 8.507059e+37
      %v1836 = vand.u32 %v1429, 2147483648
      %v1837 = vor.u32 1.1754944e-38, %v1836
      %v1838 = vsel %vm1835, %v1837, %v1833
      %v1839 = vmul.f32 1.0, %v1838
      %v1840 = vrcp.pop %v1430
      %v1841 = vmul.f32 %v1430, %v1840
      %v1842 = vsub.f32 1.0, %v1841
      %v1843 = vmul.f32 %v1840, %v1842
      %v1844 = vadd.f32 %v1840, %v1843
      %vm1845 = vweird.f32 %v1430
      %vm1846 = vweird.f32 %v1840
      %vm1847 = vmor %vm1845, %vm1846
      %v1848 = vsel %vm1847, %v1840, %v1844
      %v1849 = vand.u32 2147483647, %v1430
      %vm1850 = vcmp.eq.f32.partialorder %v1849, 8.507059e+37
      %v1851 = vand.u32 %v1430, 2147483648
      %v1852 = vor.u32 1.1754944e-38, %v1851
      %v1853 = vsel %vm1850, %v1852, %v1848
      %v1854 = vmul.f32 1.0, %v1853
      %v1855 = vrcp.pop %v1431
      %v1856 = vmul.f32 %v1431, %v1855
      %v1857 = vsub.f32 1.0, %v1856
      %v1858 = vmul.f32 %v1855, %v1857
      %v1859 = vadd.f32 %v1855, %v1858
      %vm1860 = vweird.f32 %v1431
      %vm1861 = vweird.f32 %v1855
      %vm1862 = vmor %vm1860, %vm1861
      %v1863 = vsel %vm1862, %v1855, %v1859
      %v1864 = vand.u32 2147483647, %v1431
      %vm1865 = vcmp.eq.f32.partialorder %v1864, 8.507059e+37
      %v1866 = vand.u32 %v1431, 2147483648
      %v1867 = vor.u32 1.1754944e-38, %v1866
      %v1868 = vsel %vm1865, %v1867, %v1863
      %v1869 = vmul.f32 1.0, %v1868
      %v1870 = vrcp.pop %v1432
      %v1871 = vmul.f32 %v1432, %v1870
      %v1872 = vsub.f32 1.0, %v1871
      %v1873 = vmul.f32 %v1870, %v1872
      %v1874 = vadd.f32 %v1870, %v1873
      %vm1875 = vweird.f32 %v1432
      %vm1876 = vweird.f32 %v1870
      %vm1877 = vmor %vm1875, %vm1876
      %v1878 = vsel %vm1877, %v1870, %v1874
      %v1879 = vand.u32 2147483647, %v1432
      %vm1880 = vcmp.eq.f32.partialorder %v1879, 8.507059e+37
      %v1881 = vand.u32 %v1432, 2147483648
      %v1882 = vor.u32 1.1754944e-38, %v1881
      %v1883 = vsel %vm1880, %v1882, %v1878
      %v1884 = vmul.f32 1.0, %v1883
      %v1885 = vrcp.pop %v1433
      %v1886 = vmul.f32 %v1433, %v1885
      %v1887 = vsub.f32 1.0, %v1886
      %v1888 = vmul.f32 %v1885, %v1887
      %v1889 = vadd.f32 %v1885, %v1888
      %vm1890 = vweird.f32 %v1433
      %vm1891 = vweird.f32 %v1885
      %vm1892 = vmor %vm1890, %vm1891
      %v1893 = vsel %vm1892, %v1885, %v1889
      %v1894 = vand.u32 2147483647, %v1433
      %vm1895 = vcmp.eq.f32.partialorder %v1894, 8.507059e+37
      %v1896 = vand.u32 %v1433, 2147483648
      %v1897 = vor.u32 1.1754944e-38, %v1896
      %v1898 = vsel %vm1895, %v1897, %v1893
      %v1899 = vmul.f32 1.0, %v1898
      %v1900 = vrcp.pop %v1434
      %v1901 = vmul.f32 %v1434, %v1900
      %v1902 = vsub.f32 1.0, %v1901
      %v1903 = vmul.f32 %v1900, %v1902
      %v1904 = vadd.f32 %v1900, %v1903
      %vm1905 = vweird.f32 %v1434
      %vm1906 = vweird.f32 %v1900
      %vm1907 = vmor %vm1905, %vm1906
      %v1908 = vsel %vm1907, %v1900, %v1904
      %v1909 = vand.u32 2147483647, %v1434
      %vm1910 = vcmp.eq.f32.partialorder %v1909, 8.507059e+37
      %v1911 = vand.u32 %v1434, 2147483648
      %v1912 = vor.u32 1.1754944e-38, %v1911
      %v1913 = vsel %vm1910, %v1912, %v1908
      %v1914 = vmul.f32 1.0, %v1913
      %v1915 = vmul.f32 %v1212, %v1449
      %v1916 = vmul.f32 %v1215, %v1464
      %v1917 = vmul.f32 %v1218, %v1479
      %v1918 = vmul.f32 %v1221, %v1494
      %v1919 = vmul.f32 %v1224, %v1509
      %v1920 = vmul.f32 %v1227, %v1524
      %v1921 = vmul.f32 %v1230, %v1539
      %v1922 = vmul.f32 %v1233, %v1554
      %v1923 = vmul.f32 %v1236, %v1569
      %v1924 = vmul.f32 %v1239, %v1584
      %v1925 = vmul.f32 %v1242, %v1599
      %v1926 = vmul.f32 %v1245, %v1614
      %v1927 = vmul.f32 %v1248, %v1629
      %v1928 = vmul.f32 %v1251, %v1644
      %v1929 = vmul.f32 %v1254, %v1659
      %v1930 = vmul.f32 %v1257, %v1674
      %v1931 = vmul.f32 %v1260, %v1689
      %v1932 = vmul.f32 %v1263, %v1704
      %v1933 = vmul.f32 %v1266, %v1719
      %v1934 = vmul.f32 %v1269, %v1734
      %v1935 = vmul.f32 %v1272, %v1749
      %v1936 = vmul.f32 %v1275, %v1764
      %v1937 = vmul.f32 %v1278, %v1779
      %v1938 = vmul.f32 %v1281, %v1794
      %v1939 = vmul.f32 %v1284, %v1809
      %v1940 = vmul.f32 %v1287, %v1824
      %v1941 = vmul.f32 %v1290, %v1839
      %v1942 = vmul.f32 %v1293, %v1854
      %v1943 = vmul.f32 %v1296, %v1869
      %v1944 = vmul.f32 %v1299, %v1884
      %v1945 = vmul.f32 %v1302, %v1899
      %v1946 = vmul.f32 %v1305, %v1914
      %1947 = vst.msk [vmem:[%s267] sm:$0xff] %vm1156, %v1915
      %1948 = vst.msk [vmem:[%s267 + $0x8] sm:$0xff] %vm1156, %v1916
      %1949 = vst.msk [vmem:[%s267 + $0x10] sm:$0xff] %vm1156, %v1917
      %1950 = vst.msk [vmem:[%s267 + $0x18] sm:$0xff] %vm1156, %v1918
      %1951 = vst.msk [vmem:[%s267 + $0x20] sm:$0xff] %vm1156, %v1919
      %1952 = vst.msk [vmem:[%s267 + $0x28] sm:$0xff] %vm1156, %v1920
      %1953 = vst.msk [vmem:[%s267 + $0x30] sm:$0xff] %vm1156, %v1921
      %1954 = vst.msk [vmem:[%s267 + $0x38] sm:$0xff] %vm1156, %v1922
      %1955 = vst.msk [vmem:[%s267 + $0x40] sm:$0xff] %vm1156, %v1923
      %1956 = vst.msk [vmem:[%s267 + $0x48] sm:$0xff] %vm1156, %v1924
      %1957 = vst.msk [vmem:[%s267 + $0x50] sm:$0xff] %vm1156, %v1925
      %1958 = vst.msk [vmem:[%s267 + $0x58] sm:$0xff] %vm1156, %v1926
      %1959 = vst.msk [vmem:[%s267 + $0x60] sm:$0xff] %vm1156, %v1927
      %1960 = vst.msk [vmem:[%s267 + $0x68] sm:$0xff] %vm1156, %v1928
      %1961 = vst.msk [vmem:[%s267 + $0x70] sm:$0xff] %vm1156, %v1929
      %1962 = vst.msk [vmem:[%s267 + $0x78] sm:$0xff] %vm1156, %v1930
      %1963 = vst.msk [vmem:[%s267 + $0x80] sm:$0xff] %vm1156, %v1931
      %1964 = vst.msk [vmem:[%s267 + $0x88] sm:$0xff] %vm1156, %v1932
      %1965 = vst.msk [vmem:[%s267 + $0x90] sm:$0xff] %vm1156, %v1933
      %1966 = vst.msk [vmem:[%s267 + $0x98] sm:$0xff] %vm1156, %v1934
      %1967 = vst.msk [vmem:[%s267 + $0xa0] sm:$0xff] %vm1156, %v1935
      %1968 = vst.msk [vmem:[%s267 + $0xa8] sm:$0xff] %vm1156, %v1936
      %1969 = vst.msk [vmem:[%s267 + $0xb0] sm:$0xff] %vm1156, %v1937
      %1970 = vst.msk [vmem:[%s267 + $0xb8] sm:$0xff] %vm1156, %v1938
      %1971 = vst.msk [vmem:[%s267 + $0xc0] sm:$0xff] %vm1156, %v1939
      %1972 = vst.msk [vmem:[%s267 + $0xc8] sm:$0xff] %vm1156, %v1940
      %1973 = vst.msk [vmem:[%s267 + $0xd0] sm:$0xff] %vm1156, %v1941
      %1974 = vst.msk [vmem:[%s267 + $0xd8] sm:$0xff] %vm1156, %v1942
      %1975 = vst.msk [vmem:[%s267 + $0xe0] sm:$0xff] %vm1156, %v1943
      %1976 = vst.msk [vmem:[%s267 + $0xe8] sm:$0xff] %vm1156, %v1944
      %1977 = vst.msk [vmem:[%s267 + $0xf0] sm:$0xff] %vm1156, %v1945
      %1978 = vst.msk [vmem:[%s267 + $0xf8] sm:$0xff] %vm1156, %v1946
      %s1979 = smul.u32 32, %s18
      %p1980 = scmp.lt.s32.totalorder %s1979, 63
      %s1981 = scalar_select %p1980, %s1979, 63
      %s1982 = smul.addr %s1981, 8
      %s1983 = scalar_lea.vmem %s5, %s1982
      %s1984 = smul.u32 32, %s18
      %p1985 = scmp.lt.s32.totalorder %s1984, 63
      %s1986 = scalar_select %p1985, %s1984, 63
      %s1987 = smul.addr %s1986, 8
      %s1988 = scalar_lea.vmem %s6, %s1987
      // Predicated region
      $region41: #{elanb_forward.6} parent=39 // pred_check
        %p1989 = pneg %p146
      $region42: #{elanb_forward.6} parent=39 // pred_check_branch
        %1991 = sbr.rel (%p1989) target = $region44
      $region43: #{elanb_forward.6} parent=39 // pred_region
        %s1992 = smul.u32 32, %s18
      $region44: #{elanb_forward.6} parent=39 // pred_fallthru
        _
      // Predicated region
      $region45: #{elanb_forward.6} parent=39 // pred_check
        %p1993 = pneg %p172
      $region46: #{elanb_forward.6} parent=39 // pred_check_branch
        %1995 = sbr.rel (%p1993) target = $region48
      $region47: #{elanb_forward.6} parent=39 // pred_region
        %s1996 = smul.u32 32, %s18
      $region48: #{elanb_forward.6} parent=39 // pred_fallthru
        _
    $region40: #{elanb_forward.6} parent=5 // pred_fallthru
      _
    %p1997 = scmp.le.s32.totalorder 2, %s13
    // Predicated region
    $region49: #{elanb_forward.6} parent=5 // pred_check
      %p1998 = pneg %p1997
    $region50: #{elanb_forward.6} parent=5 // pred_check_branch
      %2000 = sbr.rel (%p1998) target = $region52
    $region51: #{elanb_forward.6} parent=5 // pred_region
      %s2001 = ssub.s32 %s13, 2
      // Predicated region
      $region53: #{elanb_forward.6} parent=51 // pred_check
        %p2002 = pneg %p152
      $region54: #{elanb_forward.6} parent=51 // pred_check_branch
        %2004 = sbr.rel (%p2002) target = $region56
      $region55: #{elanb_forward.6} parent=51 // pred_region
        %s2005 = smul.u32 32, %s19
        %p2006 = scmp.lt.s32.totalorder %s2005, 63
        %s2007 = scalar_select %p2006, %s2005, 63
        %s2008 = smul.addr %s2007, 8
        %s2009 = scalar_lea.vmem %s5, %s2008
      $region56: #{elanb_forward.6} parent=51 // pred_fallthru
        _
      // Predicated region
      $region57: #{elanb_forward.6} parent=51 // pred_check
        %p2010 = pneg %p178
      $region58: #{elanb_forward.6} parent=51 // pred_check_branch
        %2012 = sbr.rel (%p2010) target = $region60
      $region59: #{elanb_forward.6} parent=51 // pred_region
        %s2013 = smul.u32 32, %s19
        %p2014 = scmp.lt.s32.totalorder %s2013, 63
        %s2015 = scalar_select %p2014, %s2013, 63
        %s2016 = smul.addr %s2015, 8
        %s2017 = scalar_lea.vmem %s6, %s2016
      $region60: #{elanb_forward.6} parent=51 // pred_fallthru
        _
    $region52: #{elanb_forward.6} parent=5 // pred_fallthru
      _
  $region6: #{elanb_forward.6} parent=0 // loop_footer
    %s17 = sadd.s32 1, %s13
  $region7: #{elanb_forward.6} parent=0 // loop_footer_branch
    %12 = sbr.rel target = $region3
  $region8: #{elanb_forward.6} parent=0 // loop_exit
    _

// kernel: elanb_forward.7
$region0: #{elanb_forward.7}
  #allocation0 [shape = 'u32[]', space=smem, size = 0x4, offset = 0x4, fixed_abs, tag = 'smem constant byte address 0x4 - core index']
  #allocation1 [shape = 'u32[72,128]{1,0:T(1,128)}', space=vmem, size = 0x9000, scoped, tag = 'internal scratch']
  %s0 = inlined_call_operand.vmem [shape: f32[512,36], index: 0, kind: input, shape index: {}]
  %s1 = inlined_call_operand.vmem [shape: f32[36,4], index: 1, kind: input, shape index: {}]
  %s2 = inlined_call_operand.vmem [shape: f32[1,4], index: 2, kind: input, shape index: {}]
  %s3 = inlined_call_operand.vmem [shape: f32[512,4], index: 3, kind: output, shape index: {}]
  %s4 = sld [smem:[#allocation0]]
  $region45: #{elanb_forward.7} parent=0
    _
  %s6 = ssub.s32 1, %s4
  %s7 = scalar_select 0, %s6, %s4
  loop: start=0, step=1, limit=4
  $region2: #{elanb_forward.7} parent=0 // loop_pre_header
    _
  $region3: #{elanb_forward.7} parent=0 // loop_header
    %s9 = sphi 0, %s13
    %p10 = scmp.ge.s32.totalorder %s9, 4
    %s19 = sphi 0, %s21
    %s22 = sphi 0, %s19
    %s23 = sphi 0, %s22
    %s39 = sphi 0, %s23
    %s43 = sphi 0, %s43
    %s45 = sphi 0, %s43
    %s46 = sphi 0, %s45
    %s60 = sphi 0, %s46
    %s64 = sphi 0, %s64
    %s66 = sphi 0, %s64
    %s67 = sphi 0, %s66
    %s81 = sphi 0, %s67
    %s87 = sphi 0, %s89
    %s90 = sphi 0, %s87
    %s91 = sphi 0, %s90
    %s107 = sphi 0, %s91
  $region4: #{elanb_forward.7} parent=0 // loop_header_branch
    %12 = sbr.rel (%p10) target = $region8
  $region5: #{elanb_forward.7} parent=0 // loop_body
    %s14 = ssub.s32 %s9, 1
    %s15 = ssub.s32 %s9, 2
    %s16 = sadd.s32 %s9, 1
    %s17 = ssub.s32 %s9, %s16
    %p18 = scmp.eq.s32.totalorder %s17, 0
    %s20 = sadd.s32 %s19, 1
    %s21 = scalar_select %p18, %s19, %s20
    %p24 = pneg %p18
    %p25 = scmp.eq.s32.totalorder %s9, 1
    %p26 = por %p24, %p25
    %p27 = scmp.ne.s32.totalorder %s19, %s22
    %p28 = scmp.eq.s32.totalorder %s9, 0
    %p29 = por %p27, %p28
    %p30 = scmp.ne.s32.totalorder %s19, %s22
    %p31 = scmp.eq.s32.totalorder %s14, 1
    %p32 = por %p30, %p31
    %p33 = scmp.ne.s32.totalorder %s22, %s23
    %p34 = scmp.eq.s32.totalorder %s14, 0
    %p35 = por %p33, %p34
    %p36 = scmp.ne.s32.totalorder %s22, %s23
    %p37 = scmp.eq.s32.totalorder %s15, 1
    %p38 = por %p36, %p37
    %p40 = scmp.ne.s32.totalorder %s23, %s39
    %p41 = scmp.eq.s32.totalorder %s15, 0
    %p42 = por %p40, %p41
    %s44 = sadd.s32 %s43, 1
    %p47 = scmp.eq.s32.totalorder %s9, 1
    %p48 = scmp.ne.s32.totalorder %s43, %s45
    %p49 = scmp.eq.s32.totalorder %s9, 0
    %p50 = por %p48, %p49
    %p51 = scmp.ne.s32.totalorder %s43, %s45
    %p52 = scmp.eq.s32.totalorder %s14, 1
    %p53 = por %p51, %p52
    %p54 = scmp.ne.s32.totalorder %s45, %s46
    %p55 = scmp.eq.s32.totalorder %s14, 0
    %p56 = por %p54, %p55
    %p57 = scmp.ne.s32.totalorder %s45, %s46
    %p58 = scmp.eq.s32.totalorder %s15, 1
    %p59 = por %p57, %p58
    %p61 = scmp.ne.s32.totalorder %s46, %s60
    %p62 = scmp.eq.s32.totalorder %s15, 0
    %p63 = por %p61, %p62
    %s65 = sadd.s32 %s64, 1
    %p68 = scmp.eq.s32.totalorder %s9, 1
    %p69 = scmp.ne.s32.totalorder %s64, %s66
    %p70 = scmp.eq.s32.totalorder %s9, 0
    %p71 = por %p69, %p70
    %p72 = scmp.ne.s32.totalorder %s64, %s66
    %p73 = scmp.eq.s32.totalorder %s14, 1
    %p74 = por %p72, %p73
    %p75 = scmp.ne.s32.totalorder %s66, %s67
    %p76 = scmp.eq.s32.totalorder %s14, 0
    %p77 = por %p75, %p76
    %p78 = scmp.ne.s32.totalorder %s66, %s67
    %p79 = scmp.eq.s32.totalorder %s15, 1
    %p80 = por %p78, %p79
    %p82 = scmp.ne.s32.totalorder %s67, %s81
    %p83 = scmp.eq.s32.totalorder %s15, 0
    %p84 = por %p82, %p83
    %s85 = ssub.s32 %s9, %s16
    %p86 = scmp.eq.s32.totalorder %s85, 0
    %s88 = sadd.s32 %s87, 1
    %s89 = scalar_select %p86, %s87, %s88
    %p92 = pneg %p86
    %p93 = scmp.eq.s32.totalorder %s9, 1
    %p94 = por %p92, %p93
    %p95 = scmp.ne.s32.totalorder %s87, %s90
    %p96 = scmp.eq.s32.totalorder %s9, 0
    %p97 = por %p95, %p96
    %p98 = scmp.ne.s32.totalorder %s87, %s90
    %p99 = scmp.eq.s32.totalorder %s14, 1
    %p100 = por %p98, %p99
    %p101 = scmp.ne.s32.totalorder %s90, %s91
    %p102 = scmp.eq.s32.totalorder %s14, 0
    %p103 = por %p101, %p102
    %p104 = scmp.ne.s32.totalorder %s90, %s91
    %p105 = scmp.eq.s32.totalorder %s15, 1
    %p106 = por %p104, %p105
    %p108 = scmp.ne.s32.totalorder %s91, %s107
    %p109 = scmp.eq.s32.totalorder %s15, 0
    %p110 = por %p108, %p109
    %p111 = scmp.le.s32.totalorder 1, %s9
    %p112 = scmp.lt.s32.totalorder %s9, 3
    %p113 = pnand %p111, %p112
    %p114 = pneg %p113
    // Predicated region
    $region9: #{elanb_forward.7} parent=5 // pred_check
      _
    $region10: #{elanb_forward.7} parent=5 // pred_check_branch
      %116 = sbr.rel (%p113) target = $region12
    $region11: #{elanb_forward.7} parent=5 // pred_region
      %s117 = ssub.s32 %s9, 1
      // Predicated region
      $region13: #{elanb_forward.7} parent=11 // pred_check
        %p118 = pneg %p56
      $region14: #{elanb_forward.7} parent=11 // pred_check_branch
        %120 = sbr.rel (%p118) target = $region16
      $region15: #{elanb_forward.7} parent=11 // pred_region
        _
      $region16: #{elanb_forward.7} parent=11 // pred_fallthru
        _
      // Predicated region
      $region17: #{elanb_forward.7} parent=11 // pred_check
        %p121 = pneg %p77
      $region18: #{elanb_forward.7} parent=11 // pred_check_branch
        %123 = sbr.rel (%p121) target = $region20
      $region19: #{elanb_forward.7} parent=11 // pred_region
        _
      $region20: #{elanb_forward.7} parent=11 // pred_fallthru
        _
    $region12: #{elanb_forward.7} parent=5 // pred_fallthru
      _
    %p124 = scmp.lt.s32.totalorder %s9, 2
    // Predicated region
    $region21: #{elanb_forward.7} parent=5 // pred_check
      %p125 = pneg %p124
    $region22: #{elanb_forward.7} parent=5 // pred_check_branch
      %127 = sbr.rel (%p125) target = $region24
    $region23: #{elanb_forward.7} parent=5 // pred_region
      // Predicated region
      $region25: #{elanb_forward.7} parent=23 // pred_check
        %p128 = pneg %p29
      $region26: #{elanb_forward.7} parent=23 // pred_check_branch
        %130 = sbr.rel (%p128) target = $region28
      $region27: #{elanb_forward.7} parent=23 // pred_region
        %s131 = smul.u32 32, %s9
        %p132 = scmp.lt.s32.totalorder %s131, 63
        %s133 = scalar_select %p132, %s131, 63
        %s134 = smul.addr %s133, 8
        %s135 = scalar_lea.vmem %s0, %s134
        %s136 = smul.u32 32, %s9
      $region28: #{elanb_forward.7} parent=23 // pred_fallthru
        _
    $region24: #{elanb_forward.7} parent=5 // pred_fallthru
      _
    %p137 = scmp.le.s32.totalorder 1, %s9
    %p138 = scmp.lt.s32.totalorder %s9, 3
    %p139 = pnand %p137, %p138
    %p140 = pneg %p139
    // Predicated region
    $region29: #{elanb_forward.7} parent=5 // pred_check
      _
    $region30: #{elanb_forward.7} parent=5 // pred_check_branch
      %142 = sbr.rel (%p139) target = $region32
    $region31: #{elanb_forward.7} parent=5 // pred_region
      %s143 = ssub.s32 %s9, 1
      %s144 = smul.u32 32, %s14
      %p145 = scmp.lt.s32.totalorder %s144, 63
      %s146 = scalar_select %p145, %s144, 63
      %s147 = smul.addr %s146, 8
      %s148 = scalar_lea.vmem %s0, %s147
      %p149 = pneg %p35
      %p150 = pneg %p32
      %p151 = pneg %p56
      %p152 = pneg %p53
      %p153 = pneg %p77
      %p154 = pneg %p74
      %p155 = pneg %p103
      %p156 = pneg %p100
      %s157 = smul.u32 32, %s14
      %p158 = scmp.lt.s32.totalorder %s157, 63
      %s159 = scalar_select %p158, %s157, 63
      %s160 = smul.addr %s159, 8
      %s161 = scalar_lea.vmem %s3, %s160
      %s162 = smul.u32 32, %s14
      %p163 = scmp.lt.s32.totalorder %s162, 63
      %s164 = scalar_select %p163, %s162, 63
      %s165 = smul.addr %s164, 8
      %s166 = scalar_lea.vmem %s0, %s165
      %s167 = smul.u32 32, %s14
      %s168 = smul.u32 32, %s14
      %p169 = scmp.lt.s32.totalorder %s168, 63
      %s170 = scalar_select %p169, %s168, 63
      %s171 = smul.addr %s170, 8
      %s172 = scalar_lea.vmem %s3, %s171
      %s173 = smul.u32 32, %s14
      %v174 = vld [vmem:[%s166] sm:$0xff]
      %v175 = vld [vmem:[%s166 + $0x8] sm:$0xff]
      %v176 = vld [vmem:[%s166 + $0x10] sm:$0xff]
      %v177 = vld [vmem:[%s166 + $0x18] sm:$0xff]
      %v178 = vld [vmem:[%s166 + $0x20] sm:$0xff]
      %v179 = vld [vmem:[%s166 + $0x28] sm:$0xff]
      %v180 = vld [vmem:[%s166 + $0x30] sm:$0xff]
      %v181 = vld [vmem:[%s166 + $0x38] sm:$0xff]
      %v182 = vld [vmem:[%s166 + $0x40] sm:$0xff]
      %v183 = vld [vmem:[%s166 + $0x48] sm:$0xff]
      %v184 = vld [vmem:[%s166 + $0x50] sm:$0xff]
      %v185 = vld [vmem:[%s166 + $0x58] sm:$0xff]
      %v186 = vld [vmem:[%s166 + $0x60] sm:$0xff]
      %v187 = vld [vmem:[%s166 + $0x68] sm:$0xff]
      %v188 = vld [vmem:[%s166 + $0x70] sm:$0xff]
      %v189 = vld [vmem:[%s166 + $0x78] sm:$0xff]
      %v190 = vld [vmem:[%s166 + $0x80] sm:$0xff]
      %v191 = vld [vmem:[%s166 + $0x88] sm:$0xff]
      %v192 = vld [vmem:[%s166 + $0x90] sm:$0xff]
      %v193 = vld [vmem:[%s166 + $0x98] sm:$0xff]
      %v194 = vld [vmem:[%s166 + $0xa0] sm:$0xff]
      %v195 = vld [vmem:[%s166 + $0xa8] sm:$0xff]
      %v196 = vld [vmem:[%s166 + $0xb0] sm:$0xff]
      %v197 = vld [vmem:[%s166 + $0xb8] sm:$0xff]
      %v198 = vld [vmem:[%s166 + $0xc0] sm:$0xff]
      %v199 = vld [vmem:[%s166 + $0xc8] sm:$0xff]
      %v200 = vld [vmem:[%s166 + $0xd0] sm:$0xff]
      %v201 = vld [vmem:[%s166 + $0xd8] sm:$0xff]
      %v202 = vld [vmem:[%s166 + $0xe0] sm:$0xff]
      %v203 = vld [vmem:[%s166 + $0xe8] sm:$0xff]
      %v204 = vld [vmem:[%s166 + $0xf0] sm:$0xff]
      %v205 = vld [vmem:[%s166 + $0xf8] sm:$0xff]
      %v206 = vld [vmem:[%s1] sm:$0xff]
      %v207 = vld [vmem:[%s1 + $0x8] sm:$0xff]
      %v208 = vld [vmem:[%s1 + $0x10] sm:$0xff]
      %v209 = vld [vmem:[%s1 + $0x18] sm:$0xff]
      %v210 = vld [vmem:[%s1 + $0x20] sm:$0xf]
      %v211 = vld [vmem:[%s2] sm:$0x1]
      %v213 = vperm.slane %v211, 0
      %vm215 = vcmask 293888
      %v217 = vsel %vm215, %v174, 0
      %v220 = vsel %vm215, %v175, 0
      %v223 = vsel %vm215, %v176, 0
      %v226 = vsel %vm215, %v177, 0
      %v229 = vsel %vm215, %v178, 0
      %v232 = vsel %vm215, %v179, 0
      %v235 = vsel %vm215, %v180, 0
      %v238 = vsel %vm215, %v181, 0
      %v241 = vsel %vm215, %v182, 0
      %v244 = vsel %vm215, %v183, 0
      %v247 = vsel %vm215, %v184, 0
      %v250 = vsel %vm215, %v185, 0
      %v253 = vsel %vm215, %v186, 0
      %v256 = vsel %vm215, %v187, 0
      %v259 = vsel %vm215, %v188, 0
      %v262 = vsel %vm215, %v189, 0
      %v265 = vsel %vm215, %v190, 0
      %v268 = vsel %vm215, %v191, 0
      %v271 = vsel %vm215, %v192, 0
      %v274 = vsel %vm215, %v193, 0
      %v277 = vsel %vm215, %v194, 0
      %v280 = vsel %vm215, %v195, 0
      %v283 = vsel %vm215, %v196, 0
      %v286 = vsel %vm215, %v197, 0
      %v289 = vsel %vm215, %v198, 0
      %v292 = vsel %vm215, %v199, 0
      %v295 = vsel %vm215, %v200, 0
      %v298 = vsel %vm215, %v201, 0
      %v301 = vsel %vm215, %v202, 0
      %v304 = vsel %vm215, %v203, 0
      %v307 = vsel %vm215, %v204, 0
      %v310 = vsel %vm215, %v205, 0
      %vm312 = vcmask 1043456
      %v314 = vsel %vm312, %v210, 0
      %316 = vmatpush.msra.mxu0 0.0
      %317 = vmatpush.msra.mxu0 0.0
      %318 = vmatpush.msra.mxu0 0.0
      %319 = vmatpush.msra.mxu0 0.0
      %320 = vmatpush.msra.mxu0 0.0
      %321 = vmatpush.msra.mxu0 0.0
      %322 = vmatpush.msra.mxu0 0.0
      %323 = vmatpush.msra.mxu0 0.0
      %324 = vmatpush.msra.mxu0 0.0
      %325 = vmatpush.msra.mxu0 0.0
      %326 = vmatpush.msra.mxu0 0.0
      %327 = vmatpush.msra.mxu0 %v314
      %328 = vmatpush.msra.mxu0 %v209
      %329 = vmatpush.msra.mxu0 %v208
      %330 = vmatpush.msra.mxu0 %v207
      %331 = vmatpush.msra.mxu0 %v206
      %332 = vmatmul.f32.gmra.mxu0 %v217
      %v333 = vpop.f32.mrf.mxu0
      %v334 = vadd.f32 %v213, %v333
      %335 = vmatmul.f32.gmra.mxu0 %v220
      %v336 = vpop.f32.mrf.mxu0
      %v337 = vadd.f32 %v213, %v336
      %338 = vmatmul.f32.gmra.mxu0 %v223
      %v339 = vpop.f32.mrf.mxu0
      %v340 = vadd.f32 %v213, %v339
      %341 = vmatmul.f32.gmra.mxu0 %v226
      %v342 = vpop.f32.mrf.mxu0
      %v343 = vadd.f32 %v213, %v342
      %344 = vmatmul.f32.gmra.mxu0 %v229
      %v345 = vpop.f32.mrf.mxu0
      %v346 = vadd.f32 %v213, %v345
      %347 = vmatmul.f32.gmra.mxu0 %v232
      %v348 = vpop.f32.mrf.mxu0
      %v349 = vadd.f32 %v213, %v348
      %350 = vmatmul.f32.gmra.mxu0 %v235
      %v351 = vpop.f32.mrf.mxu0
      %v352 = vadd.f32 %v213, %v351
      %353 = vmatmul.f32.gmra.mxu0 %v238
      %v354 = vpop.f32.mrf.mxu0
      %v355 = vadd.f32 %v213, %v354
      %356 = vmatmul.f32.gmra.mxu0 %v241
      %v357 = vpop.f32.mrf.mxu0
      %v358 = vadd.f32 %v213, %v357
      %359 = vmatmul.f32.gmra.mxu0 %v244
      %v360 = vpop.f32.mrf.mxu0
      %v361 = vadd.f32 %v213, %v360
      %362 = vmatmul.f32.gmra.mxu0 %v247
      %v363 = vpop.f32.mrf.mxu0
      %v364 = vadd.f32 %v213, %v363
      %365 = vmatmul.f32.gmra.mxu0 %v250
      %v366 = vpop.f32.mrf.mxu0
      %v367 = vadd.f32 %v213, %v366
      %368 = vmatmul.f32.gmra.mxu0 %v253
      %v369 = vpop.f32.mrf.mxu0
      %v370 = vadd.f32 %v213, %v369
      %371 = vmatmul.f32.gmra.mxu0 %v256
      %v372 = vpop.f32.mrf.mxu0
      %v373 = vadd.f32 %v213, %v372
      %374 = vmatmul.f32.gmra.mxu0 %v259
      %v375 = vpop.f32.mrf.mxu0
      %v376 = vadd.f32 %v213, %v375
      %377 = vmatmul.f32.gmra.mxu0 %v262
      %v378 = vpop.f32.mrf.mxu0
      %v379 = vadd.f32 %v213, %v378
      %380 = vmatmul.f32.gmra.mxu0 %v265
      %v381 = vpop.f32.mrf.mxu0
      %v382 = vadd.f32 %v213, %v381
      %383 = vmatmul.f32.gmra.mxu0 %v268
      %v384 = vpop.f32.mrf.mxu0
      %v385 = vadd.f32 %v213, %v384
      %386 = vmatmul.f32.gmra.mxu0 %v271
      %v387 = vpop.f32.mrf.mxu0
      %v388 = vadd.f32 %v213, %v387
      %389 = vmatmul.f32.gmra.mxu0 %v274
      %v390 = vpop.f32.mrf.mxu0
      %v391 = vadd.f32 %v213, %v390
      %392 = vmatmul.f32.gmra.mxu0 %v277
      %v393 = vpop.f32.mrf.mxu0
      %v394 = vadd.f32 %v213, %v393
      %395 = vmatmul.f32.gmra.mxu0 %v280
      %v396 = vpop.f32.mrf.mxu0
      %v397 = vadd.f32 %v213, %v396
      %398 = vmatmul.f32.gmra.mxu0 %v283
      %v399 = vpop.f32.mrf.mxu0
      %v400 = vadd.f32 %v213, %v399
      %401 = vmatmul.f32.gmra.mxu0 %v286
      %v402 = vpop.f32.mrf.mxu0
      %v403 = vadd.f32 %v213, %v402
      %404 = vmatmul.f32.gmra.mxu0 %v289
      %v405 = vpop.f32.mrf.mxu0
      %v406 = vadd.f32 %v213, %v405
      %407 = vmatmul.f32.gmra.mxu0 %v292
      %v408 = vpop.f32.mrf.mxu0
      %v409 = vadd.f32 %v213, %v408
      %410 = vmatmul.f32.gmra.mxu0 %v295
      %v411 = vpop.f32.mrf.mxu0
      %v412 = vadd.f32 %v213, %v411
      %413 = vmatmul.f32.gmra.mxu0 %v298
      %v414 = vpop.f32.mrf.mxu0
      %v415 = vadd.f32 %v213, %v414
      %416 = vmatmul.f32.gmra.mxu0 %v301
      %v417 = vpop.f32.mrf.mxu0
      %v418 = vadd.f32 %v213, %v417
      %419 = vmatmul.f32.gmra.mxu0 %v304
      %v420 = vpop.f32.mrf.mxu0
      %v421 = vadd.f32 %v213, %v420
      %422 = vmatmul.f32.gmra.mxu0 %v307
      %v423 = vpop.f32.mrf.mxu0
      %v424 = vadd.f32 %v213, %v423
      %425 = vmatmul.f32.gmra.mxu0 %v310
      %v426 = vpop.f32.mrf.mxu0
      %v427 = vadd.f32 %v213, %v426
      %428 = vdwg.mxu0
      %v429 = vxor.u32 %v334, 2147483648
      %v430 = vxor.u32 %v337, 2147483648
      %v431 = vxor.u32 %v340, 2147483648
      %v432 = vxor.u32 %v343, 2147483648
      %v433 = vxor.u32 %v346, 2147483648
      %v434 = vxor.u32 %v349, 2147483648
      %v435 = vxor.u32 %v352, 2147483648
      %v436 = vxor.u32 %v355, 2147483648
      %v437 = vxor.u32 %v358, 2147483648
      %v438 = vxor.u32 %v361, 2147483648
      %v439 = vxor.u32 %v364, 2147483648
      %v440 = vxor.u32 %v367, 2147483648
      %v441 = vxor.u32 %v370, 2147483648
      %v442 = vxor.u32 %v373, 2147483648
      %v443 = vxor.u32 %v376, 2147483648
      %v444 = vxor.u32 %v379, 2147483648
      %v445 = vxor.u32 %v382, 2147483648
      %v446 = vxor.u32 %v385, 2147483648
      %v447 = vxor.u32 %v388, 2147483648
      %v448 = vxor.u32 %v391, 2147483648
      %v449 = vxor.u32 %v394, 2147483648
      %v450 = vxor.u32 %v397, 2147483648
      %v451 = vxor.u32 %v400, 2147483648
      %v452 = vxor.u32 %v403, 2147483648
      %v453 = vxor.u32 %v406, 2147483648
      %v454 = vxor.u32 %v409, 2147483648
      %v455 = vxor.u32 %v412, 2147483648
      %v456 = vxor.u32 %v415, 2147483648
      %v457 = vxor.u32 %v418, 2147483648
      %v458 = vxor.u32 %v421, 2147483648
      %v459 = vxor.u32 %v424, 2147483648
      %v460 = vxor.u32 %v427, 2147483648
      %v461 = vmul.f32 %v429, 1.442695
      %v462 = vpow.pop %v461
      %v463 = vmul.f32 %v430, 1.442695
      %v464 = vpow.pop %v463
      %v465 = vmul.f32 %v431, 1.442695
      %v466 = vpow.pop %v465
      %v467 = vmul.f32 %v432, 1.442695
      %v468 = vpow.pop %v467
      %v469 = vmul.f32 %v433, 1.442695
      %v470 = vpow.pop %v469
      %v471 = vmul.f32 %v434, 1.442695
      %v472 = vpow.pop %v471
      %v473 = vmul.f32 %v435, 1.442695
      %v474 = vpow.pop %v473
      %v475 = vmul.f32 %v436, 1.442695
      %v476 = vpow.pop %v475
      %v477 = vmul.f32 %v437, 1.442695
      %v478 = vpow.pop %v477
      %v479 = vmul.f32 %v438, 1.442695
      %v480 = vpow.pop %v479
      %v481 = vmul.f32 %v439, 1.442695
      %v482 = vpow.pop %v481
      %v483 = vmul.f32 %v440, 1.442695
      %v484 = vpow.pop %v483
      %v485 = vmul.f32 %v441, 1.442695
      %v486 = vpow.pop %v485
      %v487 = vmul.f32 %v442, 1.442695
      %v488 = vpow.pop %v487
      %v489 = vmul.f32 %v443, 1.442695
      %v490 = vpow.pop %v489
      %v491 = vmul.f32 %v444, 1.442695
      %v492 = vpow.pop %v491
      %v493 = vmul.f32 %v445, 1.442695
      %v494 = vpow.pop %v493
      %v495 = vmul.f32 %v446, 1.442695
      %v496 = vpow.pop %v495
      %v497 = vmul.f32 %v447, 1.442695
      %v498 = vpow.pop %v497
      %v499 = vmul.f32 %v448, 1.442695
      %v500 = vpow.pop %v499
      %v501 = vmul.f32 %v449, 1.442695
      %v502 = vpow.pop %v501
      %v503 = vmul.f32 %v450, 1.442695
      %v504 = vpow.pop %v503
      %v505 = vmul.f32 %v451, 1.442695
      %v506 = vpow.pop %v505
      %v507 = vmul.f32 %v452, 1.442695
      %v508 = vpow.pop %v507
      %v509 = vmul.f32 %v453, 1.442695
      %v510 = vpow.pop %v509
      %v511 = vmul.f32 %v454, 1.442695
      %v512 = vpow.pop %v511
      %v513 = vmul.f32 %v455, 1.442695
      %v514 = vpow.pop %v513
      %v515 = vmul.f32 %v456, 1.442695
      %v516 = vpow.pop %v515
      %v517 = vmul.f32 %v457, 1.442695
      %v518 = vpow.pop %v517
      %v519 = vmul.f32 %v458, 1.442695
      %v520 = vpow.pop %v519
      %v521 = vmul.f32 %v459, 1.442695
      %v522 = vpow.pop %v521
      %v523 = vmul.f32 %v460, 1.442695
      %v524 = vpow.pop %v523
      %v525 = vadd.f32 %v462, 1.0
      %v526 = vadd.f32 %v464, 1.0
      %v527 = vadd.f32 %v466, 1.0
      %v528 = vadd.f32 %v468, 1.0
      %v529 = vadd.f32 %v470, 1.0
      %v530 = vadd.f32 %v472, 1.0
      %v531 = vadd.f32 %v474, 1.0
      %v532 = vadd.f32 %v476, 1.0
      %v533 = vadd.f32 %v478, 1.0
      %v534 = vadd.f32 %v480, 1.0
      %v535 = vadd.f32 %v482, 1.0
      %v536 = vadd.f32 %v484, 1.0
      %v537 = vadd.f32 %v486, 1.0
      %v538 = vadd.f32 %v488, 1.0
      %v539 = vadd.f32 %v490, 1.0
      %v540 = vadd.f32 %v492, 1.0
      %v541 = vadd.f32 %v494, 1.0
      %v542 = vadd.f32 %v496, 1.0
      %v543 = vadd.f32 %v498, 1.0
      %v544 = vadd.f32 %v500, 1.0
      %v545 = vadd.f32 %v502, 1.0
      %v546 = vadd.f32 %v504, 1.0
      %v547 = vadd.f32 %v506, 1.0
      %v548 = vadd.f32 %v508, 1.0
      %v549 = vadd.f32 %v510, 1.0
      %v550 = vadd.f32 %v512, 1.0
      %v551 = vadd.f32 %v514, 1.0
      %v552 = vadd.f32 %v516, 1.0
      %v553 = vadd.f32 %v518, 1.0
      %v554 = vadd.f32 %v520, 1.0
      %v555 = vadd.f32 %v522, 1.0
      %v556 = vadd.f32 %v524, 1.0
      %v557 = vrcp.pop %v525
      %v558 = vmul.f32 %v525, %v557
      %v559 = vsub.f32 1.0, %v558
      %v560 = vmul.f32 %v557, %v559
      %v561 = vadd.f32 %v557, %v560
      %vm562 = vweird.f32 %v525
      %vm563 = vweird.f32 %v557
      %vm564 = vmor %vm562, %vm563
      %v565 = vsel %vm564, %v557, %v561
      %v566 = vand.u32 2147483647, %v525
      %vm567 = vcmp.eq.f32.partialorder %v566, 8.507059e+37
      %v568 = vand.u32 %v525, 2147483648
      %v569 = vor.u32 1.1754944e-38, %v568
      %v570 = vsel %vm567, %v569, %v565
      %v571 = vmul.f32 1.0, %v570
      %v572 = vrcp.pop %v526
      %v573 = vmul.f32 %v526, %v572
      %v574 = vsub.f32 1.0, %v573
      %v575 = vmul.f32 %v572, %v574
      %v576 = vadd.f32 %v572, %v575
      %vm577 = vweird.f32 %v526
      %vm578 = vweird.f32 %v572
      %vm579 = vmor %vm577, %vm578
      %v580 = vsel %vm579, %v572, %v576
      %v581 = vand.u32 2147483647, %v526
      %vm582 = vcmp.eq.f32.partialorder %v581, 8.507059e+37
      %v583 = vand.u32 %v526, 2147483648
      %v584 = vor.u32 1.1754944e-38, %v583
      %v585 = vsel %vm582, %v584, %v580
      %v586 = vmul.f32 1.0, %v585
      %v587 = vrcp.pop %v527
      %v588 = vmul.f32 %v527, %v587
      %v589 = vsub.f32 1.0, %v588
      %v590 = vmul.f32 %v587, %v589
      %v591 = vadd.f32 %v587, %v590
      %vm592 = vweird.f32 %v527
      %vm593 = vweird.f32 %v587
      %vm594 = vmor %vm592, %vm593
      %v595 = vsel %vm594, %v587, %v591
      %v596 = vand.u32 2147483647, %v527
      %vm597 = vcmp.eq.f32.partialorder %v596, 8.507059e+37
      %v598 = vand.u32 %v527, 2147483648
      %v599 = vor.u32 1.1754944e-38, %v598
      %v600 = vsel %vm597, %v599, %v595
      %v601 = vmul.f32 1.0, %v600
      %v602 = vrcp.pop %v528
      %v603 = vmul.f32 %v528, %v602
      %v604 = vsub.f32 1.0, %v603
      %v605 = vmul.f32 %v602, %v604
      %v606 = vadd.f32 %v602, %v605
      %vm607 = vweird.f32 %v528
      %vm608 = vweird.f32 %v602
      %vm609 = vmor %vm607, %vm608
      %v610 = vsel %vm609, %v602, %v606
      %v611 = vand.u32 2147483647, %v528
      %vm612 = vcmp.eq.f32.partialorder %v611, 8.507059e+37
      %v613 = vand.u32 %v528, 2147483648
      %v614 = vor.u32 1.1754944e-38, %v613
      %v615 = vsel %vm612, %v614, %v610
      %v616 = vmul.f32 1.0, %v615
      %v617 = vrcp.pop %v529
      %v618 = vmul.f32 %v529, %v617
      %v619 = vsub.f32 1.0, %v618
      %v620 = vmul.f32 %v617, %v619
      %v621 = vadd.f32 %v617, %v620
      %vm622 = vweird.f32 %v529
      %vm623 = vweird.f32 %v617
      %vm624 = vmor %vm622, %vm623
      %v625 = vsel %vm624, %v617, %v621
      %v626 = vand.u32 2147483647, %v529
      %vm627 = vcmp.eq.f32.partialorder %v626, 8.507059e+37
      %v628 = vand.u32 %v529, 2147483648
      %v629 = vor.u32 1.1754944e-38, %v628
      %v630 = vsel %vm627, %v629, %v625
      %v631 = vmul.f32 1.0, %v630
      %v632 = vrcp.pop %v530
      %v633 = vmul.f32 %v530, %v632
      %v634 = vsub.f32 1.0, %v633
      %v635 = vmul.f32 %v632, %v634
      %v636 = vadd.f32 %v632, %v635
      %vm637 = vweird.f32 %v530
      %vm638 = vweird.f32 %v632
      %vm639 = vmor %vm637, %vm638
      %v640 = vsel %vm639, %v632, %v636
      %v641 = vand.u32 2147483647, %v530
      %vm642 = vcmp.eq.f32.partialorder %v641, 8.507059e+37
      %v643 = vand.u32 %v530, 2147483648
      %v644 = vor.u32 1.1754944e-38, %v643
      %v645 = vsel %vm642, %v644, %v640
      %v646 = vmul.f32 1.0, %v645
      %v647 = vrcp.pop %v531
      %v648 = vmul.f32 %v531, %v647
      %v649 = vsub.f32 1.0, %v648
      %v650 = vmul.f32 %v647, %v649
      %v651 = vadd.f32 %v647, %v650
      %vm652 = vweird.f32 %v531
      %vm653 = vweird.f32 %v647
      %vm654 = vmor %vm652, %vm653
      %v655 = vsel %vm654, %v647, %v651
      %v656 = vand.u32 2147483647, %v531
      %vm657 = vcmp.eq.f32.partialorder %v656, 8.507059e+37
      %v658 = vand.u32 %v531, 2147483648
      %v659 = vor.u32 1.1754944e-38, %v658
      %v660 = vsel %vm657, %v659, %v655
      %v661 = vmul.f32 1.0, %v660
      %v662 = vrcp.pop %v532
      %v663 = vmul.f32 %v532, %v662
      %v664 = vsub.f32 1.0, %v663
      %v665 = vmul.f32 %v662, %v664
      %v666 = vadd.f32 %v662, %v665
      %vm667 = vweird.f32 %v532
      %vm668 = vweird.f32 %v662
      %vm669 = vmor %vm667, %vm668
      %v670 = vsel %vm669, %v662, %v666
      %v671 = vand.u32 2147483647, %v532
      %vm672 = vcmp.eq.f32.partialorder %v671, 8.507059e+37
      %v673 = vand.u32 %v532, 2147483648
      %v674 = vor.u32 1.1754944e-38, %v673
      %v675 = vsel %vm672, %v674, %v670
      %v676 = vmul.f32 1.0, %v675
      %v677 = vrcp.pop %v533
      %v678 = vmul.f32 %v533, %v677
      %v679 = vsub.f32 1.0, %v678
      %v680 = vmul.f32 %v677, %v679
      %v681 = vadd.f32 %v677, %v680
      %vm682 = vweird.f32 %v533
      %vm683 = vweird.f32 %v677
      %vm684 = vmor %vm682, %vm683
      %v685 = vsel %vm684, %v677, %v681
      %v686 = vand.u32 2147483647, %v533
      %vm687 = vcmp.eq.f32.partialorder %v686, 8.507059e+37
      %v688 = vand.u32 %v533, 2147483648
      %v689 = vor.u32 1.1754944e-38, %v688
      %v690 = vsel %vm687, %v689, %v685
      %v691 = vmul.f32 1.0, %v690
      %v692 = vrcp.pop %v534
      %v693 = vmul.f32 %v534, %v692
      %v694 = vsub.f32 1.0, %v693
      %v695 = vmul.f32 %v692, %v694
      %v696 = vadd.f32 %v692, %v695
      %vm697 = vweird.f32 %v534
      %vm698 = vweird.f32 %v692
      %vm699 = vmor %vm697, %vm698
      %v700 = vsel %vm699, %v692, %v696
      %v701 = vand.u32 2147483647, %v534
      %vm702 = vcmp.eq.f32.partialorder %v701, 8.507059e+37
      %v703 = vand.u32 %v534, 2147483648
      %v704 = vor.u32 1.1754944e-38, %v703
      %v705 = vsel %vm702, %v704, %v700
      %v706 = vmul.f32 1.0, %v705
      %v707 = vrcp.pop %v535
      %v708 = vmul.f32 %v535, %v707
      %v709 = vsub.f32 1.0, %v708
      %v710 = vmul.f32 %v707, %v709
      %v711 = vadd.f32 %v707, %v710
      %vm712 = vweird.f32 %v535
      %vm713 = vweird.f32 %v707
      %vm714 = vmor %vm712, %vm713
      %v715 = vsel %vm714, %v707, %v711
      %v716 = vand.u32 2147483647, %v535
      %vm717 = vcmp.eq.f32.partialorder %v716, 8.507059e+37
      %v718 = vand.u32 %v535, 2147483648
      %v719 = vor.u32 1.1754944e-38, %v718
      %v720 = vsel %vm717, %v719, %v715
      %v721 = vmul.f32 1.0, %v720
      %v722 = vrcp.pop %v536
      %v723 = vmul.f32 %v536, %v722
      %v724 = vsub.f32 1.0, %v723
      %v725 = vmul.f32 %v722, %v724
      %v726 = vadd.f32 %v722, %v725
      %vm727 = vweird.f32 %v536
      %vm728 = vweird.f32 %v722
      %vm729 = vmor %vm727, %vm728
      %v730 = vsel %vm729, %v722, %v726
      %v731 = vand.u32 2147483647, %v536
      %vm732 = vcmp.eq.f32.partialorder %v731, 8.507059e+37
      %v733 = vand.u32 %v536, 2147483648
      %v734 = vor.u32 1.1754944e-38, %v733
      %v735 = vsel %vm732, %v734, %v730
      %v736 = vmul.f32 1.0, %v735
      %v737 = vrcp.pop %v537
      %v738 = vmul.f32 %v537, %v737
      %v739 = vsub.f32 1.0, %v738
      %v740 = vmul.f32 %v737, %v739
      %v741 = vadd.f32 %v737, %v740
      %vm742 = vweird.f32 %v537
      %vm743 = vweird.f32 %v737
      %vm744 = vmor %vm742, %vm743
      %v745 = vsel %vm744, %v737, %v741
      %v746 = vand.u32 2147483647, %v537
      %vm747 = vcmp.eq.f32.partialorder %v746, 8.507059e+37
      %v748 = vand.u32 %v537, 2147483648
      %v749 = vor.u32 1.1754944e-38, %v748
      %v750 = vsel %vm747, %v749, %v745
      %v751 = vmul.f32 1.0, %v750
      %v752 = vrcp.pop %v538
      %v753 = vmul.f32 %v538, %v752
      %v754 = vsub.f32 1.0, %v753
      %v755 = vmul.f32 %v752, %v754
      %v756 = vadd.f32 %v752, %v755
      %vm757 = vweird.f32 %v538
      %vm758 = vweird.f32 %v752
      %vm759 = vmor %vm757, %vm758
      %v760 = vsel %vm759, %v752, %v756
      %v761 = vand.u32 2147483647, %v538
      %vm762 = vcmp.eq.f32.partialorder %v761, 8.507059e+37
      %v763 = vand.u32 %v538, 2147483648
      %v764 = vor.u32 1.1754944e-38, %v763
      %v765 = vsel %vm762, %v764, %v760
      %v766 = vmul.f32 1.0, %v765
      %v767 = vrcp.pop %v539
      %v768 = vmul.f32 %v539, %v767
      %v769 = vsub.f32 1.0, %v768
      %v770 = vmul.f32 %v767, %v769
      %v771 = vadd.f32 %v767, %v770
      %vm772 = vweird.f32 %v539
      %vm773 = vweird.f32 %v767
      %vm774 = vmor %vm772, %vm773
      %v775 = vsel %vm774, %v767, %v771
      %v776 = vand.u32 2147483647, %v539
      %vm777 = vcmp.eq.f32.partialorder %v776, 8.507059e+37
      %v778 = vand.u32 %v539, 2147483648
      %v779 = vor.u32 1.1754944e-38, %v778
      %v780 = vsel %vm777, %v779, %v775
      %v781 = vmul.f32 1.0, %v780
      %v782 = vrcp.pop %v540
      %v783 = vmul.f32 %v540, %v782
      %v784 = vsub.f32 1.0, %v783
      %v785 = vmul.f32 %v782, %v784
      %v786 = vadd.f32 %v782, %v785
      %vm787 = vweird.f32 %v540
      %vm788 = vweird.f32 %v782
      %vm789 = vmor %vm787, %vm788
      %v790 = vsel %vm789, %v782, %v786
      %v791 = vand.u32 2147483647, %v540
      %vm792 = vcmp.eq.f32.partialorder %v791, 8.507059e+37
      %v793 = vand.u32 %v540, 2147483648
      %v794 = vor.u32 1.1754944e-38, %v793
      %v795 = vsel %vm792, %v794, %v790
      %v796 = vmul.f32 1.0, %v795
      %v797 = vrcp.pop %v541
      %v798 = vmul.f32 %v541, %v797
      %v799 = vsub.f32 1.0, %v798
      %v800 = vmul.f32 %v797, %v799
      %v801 = vadd.f32 %v797, %v800
      %vm802 = vweird.f32 %v541
      %vm803 = vweird.f32 %v797
      %vm804 = vmor %vm802, %vm803
      %v805 = vsel %vm804, %v797, %v801
      %v806 = vand.u32 2147483647, %v541
      %vm807 = vcmp.eq.f32.partialorder %v806, 8.507059e+37
      %v808 = vand.u32 %v541, 2147483648
      %v809 = vor.u32 1.1754944e-38, %v808
      %v810 = vsel %vm807, %v809, %v805
      %v811 = vmul.f32 1.0, %v810
      %v812 = vrcp.pop %v542
      %v813 = vmul.f32 %v542, %v812
      %v814 = vsub.f32 1.0, %v813
      %v815 = vmul.f32 %v812, %v814
      %v816 = vadd.f32 %v812, %v815
      %vm817 = vweird.f32 %v542
      %vm818 = vweird.f32 %v812
      %vm819 = vmor %vm817, %vm818
      %v820 = vsel %vm819, %v812, %v816
      %v821 = vand.u32 2147483647, %v542
      %vm822 = vcmp.eq.f32.partialorder %v821, 8.507059e+37
      %v823 = vand.u32 %v542, 2147483648
      %v824 = vor.u32 1.1754944e-38, %v823
      %v825 = vsel %vm822, %v824, %v820
      %v826 = vmul.f32 1.0, %v825
      %v827 = vrcp.pop %v543
      %v828 = vmul.f32 %v543, %v827
      %v829 = vsub.f32 1.0, %v828
      %v830 = vmul.f32 %v827, %v829
      %v831 = vadd.f32 %v827, %v830
      %vm832 = vweird.f32 %v543
      %vm833 = vweird.f32 %v827
      %vm834 = vmor %vm832, %vm833
      %v835 = vsel %vm834, %v827, %v831
      %v836 = vand.u32 2147483647, %v543
      %vm837 = vcmp.eq.f32.partialorder %v836, 8.507059e+37
      %v838 = vand.u32 %v543, 2147483648
      %v839 = vor.u32 1.1754944e-38, %v838
      %v840 = vsel %vm837, %v839, %v835
      %v841 = vmul.f32 1.0, %v840
      %v842 = vrcp.pop %v544
      %v843 = vmul.f32 %v544, %v842
      %v844 = vsub.f32 1.0, %v843
      %v845 = vmul.f32 %v842, %v844
      %v846 = vadd.f32 %v842, %v845
      %vm847 = vweird.f32 %v544
      %vm848 = vweird.f32 %v842
      %vm849 = vmor %vm847, %vm848
      %v850 = vsel %vm849, %v842, %v846
      %v851 = vand.u32 2147483647, %v544
      %vm852 = vcmp.eq.f32.partialorder %v851, 8.507059e+37
      %v853 = vand.u32 %v544, 2147483648
      %v854 = vor.u32 1.1754944e-38, %v853
      %v855 = vsel %vm852, %v854, %v850
      %v856 = vmul.f32 1.0, %v855
      %v857 = vrcp.pop %v545
      %v858 = vmul.f32 %v545, %v857
      %v859 = vsub.f32 1.0, %v858
      %v860 = vmul.f32 %v857, %v859
      %v861 = vadd.f32 %v857, %v860
      %vm862 = vweird.f32 %v545
      %vm863 = vweird.f32 %v857
      %vm864 = vmor %vm862, %vm863
      %v865 = vsel %vm864, %v857, %v861
      %v866 = vand.u32 2147483647, %v545
      %vm867 = vcmp.eq.f32.partialorder %v866, 8.507059e+37
      %v868 = vand.u32 %v545, 2147483648
      %v869 = vor.u32 1.1754944e-38, %v868
      %v870 = vsel %vm867, %v869, %v865
      %v871 = vmul.f32 1.0, %v870
      %v872 = vrcp.pop %v546
      %v873 = vmul.f32 %v546, %v872
      %v874 = vsub.f32 1.0, %v873
      %v875 = vmul.f32 %v872, %v874
      %v876 = vadd.f32 %v872, %v875
      %vm877 = vweird.f32 %v546
      %vm878 = vweird.f32 %v872
      %vm879 = vmor %vm877, %vm878
      %v880 = vsel %vm879, %v872, %v876
      %v881 = vand.u32 2147483647, %v546
      %vm882 = vcmp.eq.f32.partialorder %v881, 8.507059e+37
      %v883 = vand.u32 %v546, 2147483648
      %v884 = vor.u32 1.1754944e-38, %v883
      %v885 = vsel %vm882, %v884, %v880
      %v886 = vmul.f32 1.0, %v885
      %v887 = vrcp.pop %v547
      %v888 = vmul.f32 %v547, %v887
      %v889 = vsub.f32 1.0, %v888
      %v890 = vmul.f32 %v887, %v889
      %v891 = vadd.f32 %v887, %v890
      %vm892 = vweird.f32 %v547
      %vm893 = vweird.f32 %v887
      %vm894 = vmor %vm892, %vm893
      %v895 = vsel %vm894, %v887, %v891
      %v896 = vand.u32 2147483647, %v547
      %vm897 = vcmp.eq.f32.partialorder %v896, 8.507059e+37
      %v898 = vand.u32 %v547, 2147483648
      %v899 = vor.u32 1.1754944e-38, %v898
      %v900 = vsel %vm897, %v899, %v895
      %v901 = vmul.f32 1.0, %v900
      %v902 = vrcp.pop %v548
      %v903 = vmul.f32 %v548, %v902
      %v904 = vsub.f32 1.0, %v903
      %v905 = vmul.f32 %v902, %v904
      %v906 = vadd.f32 %v902, %v905
      %vm907 = vweird.f32 %v548
      %vm908 = vweird.f32 %v902
      %vm909 = vmor %vm907, %vm908
      %v910 = vsel %vm909, %v902, %v906
      %v911 = vand.u32 2147483647, %v548
      %vm912 = vcmp.eq.f32.partialorder %v911, 8.507059e+37
      %v913 = vand.u32 %v548, 2147483648
      %v914 = vor.u32 1.1754944e-38, %v913
      %v915 = vsel %vm912, %v914, %v910
      %v916 = vmul.f32 1.0, %v915
      %v917 = vrcp.pop %v549
      %v918 = vmul.f32 %v549, %v917
      %v919 = vsub.f32 1.0, %v918
      %v920 = vmul.f32 %v917, %v919
      %v921 = vadd.f32 %v917, %v920
      %vm922 = vweird.f32 %v549
      %vm923 = vweird.f32 %v917
      %vm924 = vmor %vm922, %vm923
      %v925 = vsel %vm924, %v917, %v921
      %v926 = vand.u32 2147483647, %v549
      %vm927 = vcmp.eq.f32.partialorder %v926, 8.507059e+37
      %v928 = vand.u32 %v549, 2147483648
      %v929 = vor.u32 1.1754944e-38, %v928
      %v930 = vsel %vm927, %v929, %v925
      %v931 = vmul.f32 1.0, %v930
      %v932 = vrcp.pop %v550
      %v933 = vmul.f32 %v550, %v932
      %v934 = vsub.f32 1.0, %v933
      %v935 = vmul.f32 %v932, %v934
      %v936 = vadd.f32 %v932, %v935
      %vm937 = vweird.f32 %v550
      %vm938 = vweird.f32 %v932
      %vm939 = vmor %vm937, %vm938
      %v940 = vsel %vm939, %v932, %v936
      %v941 = vand.u32 2147483647, %v550
      %vm942 = vcmp.eq.f32.partialorder %v941, 8.507059e+37
      %v943 = vand.u32 %v550, 2147483648
      %v944 = vor.u32 1.1754944e-38, %v943
      %v945 = vsel %vm942, %v944, %v940
      %v946 = vmul.f32 1.0, %v945
      %v947 = vrcp.pop %v551
      %v948 = vmul.f32 %v551, %v947
      %v949 = vsub.f32 1.0, %v948
      %v950 = vmul.f32 %v947, %v949
      %v951 = vadd.f32 %v947, %v950
      %vm952 = vweird.f32 %v551
      %vm953 = vweird.f32 %v947
      %vm954 = vmor %vm952, %vm953
      %v955 = vsel %vm954, %v947, %v951
      %v956 = vand.u32 2147483647, %v551
      %vm957 = vcmp.eq.f32.partialorder %v956, 8.507059e+37
      %v958 = vand.u32 %v551, 2147483648
      %v959 = vor.u32 1.1754944e-38, %v958
      %v960 = vsel %vm957, %v959, %v955
      %v961 = vmul.f32 1.0, %v960
      %v962 = vrcp.pop %v552
      %v963 = vmul.f32 %v552, %v962
      %v964 = vsub.f32 1.0, %v963
      %v965 = vmul.f32 %v962, %v964
      %v966 = vadd.f32 %v962, %v965
      %vm967 = vweird.f32 %v552
      %vm968 = vweird.f32 %v962
      %vm969 = vmor %vm967, %vm968
      %v970 = vsel %vm969, %v962, %v966
      %v971 = vand.u32 2147483647, %v552
      %vm972 = vcmp.eq.f32.partialorder %v971, 8.507059e+37
      %v973 = vand.u32 %v552, 2147483648
      %v974 = vor.u32 1.1754944e-38, %v973
      %v975 = vsel %vm972, %v974, %v970
      %v976 = vmul.f32 1.0, %v975
      %v977 = vrcp.pop %v553
      %v978 = vmul.f32 %v553, %v977
      %v979 = vsub.f32 1.0, %v978
      %v980 = vmul.f32 %v977, %v979
      %v981 = vadd.f32 %v977, %v980
      %vm982 = vweird.f32 %v553
      %vm983 = vweird.f32 %v977
      %vm984 = vmor %vm982, %vm983
      %v985 = vsel %vm984, %v977, %v981
      %v986 = vand.u32 2147483647, %v553
      %vm987 = vcmp.eq.f32.partialorder %v986, 8.507059e+37
      %v988 = vand.u32 %v553, 2147483648
      %v989 = vor.u32 1.1754944e-38, %v988
      %v990 = vsel %vm987, %v989, %v985
      %v991 = vmul.f32 1.0, %v990
      %v992 = vrcp.pop %v554
      %v993 = vmul.f32 %v554, %v992
      %v994 = vsub.f32 1.0, %v993
      %v995 = vmul.f32 %v992, %v994
      %v996 = vadd.f32 %v992, %v995
      %vm997 = vweird.f32 %v554
      %vm998 = vweird.f32 %v992
      %vm999 = vmor %vm997, %vm998
      %v1000 = vsel %vm999, %v992, %v996
      %v1001 = vand.u32 2147483647, %v554
      %vm1002 = vcmp.eq.f32.partialorder %v1001, 8.507059e+37
      %v1003 = vand.u32 %v554, 2147483648
      %v1004 = vor.u32 1.1754944e-38, %v1003
      %v1005 = vsel %vm1002, %v1004, %v1000
      %v1006 = vmul.f32 1.0, %v1005
      %v1007 = vrcp.pop %v555
      %v1008 = vmul.f32 %v555, %v1007
      %v1009 = vsub.f32 1.0, %v1008
      %v1010 = vmul.f32 %v1007, %v1009
      %v1011 = vadd.f32 %v1007, %v1010
      %vm1012 = vweird.f32 %v555
      %vm1013 = vweird.f32 %v1007
      %vm1014 = vmor %vm1012, %vm1013
      %v1015 = vsel %vm1014, %v1007, %v1011
      %v1016 = vand.u32 2147483647, %v555
      %vm1017 = vcmp.eq.f32.partialorder %v1016, 8.507059e+37
      %v1018 = vand.u32 %v555, 2147483648
      %v1019 = vor.u32 1.1754944e-38, %v1018
      %v1020 = vsel %vm1017, %v1019, %v1015
      %v1021 = vmul.f32 1.0, %v1020
      %v1022 = vrcp.pop %v556
      %v1023 = vmul.f32 %v556, %v1022
      %v1024 = vsub.f32 1.0, %v1023
      %v1025 = vmul.f32 %v1022, %v1024
      %v1026 = vadd.f32 %v1022, %v1025
      %vm1027 = vweird.f32 %v556
      %vm1028 = vweird.f32 %v1022
      %vm1029 = vmor %vm1027, %vm1028
      %v1030 = vsel %vm1029, %v1022, %v1026
      %v1031 = vand.u32 2147483647, %v556
      %vm1032 = vcmp.eq.f32.partialorder %v1031, 8.507059e+37
      %v1033 = vand.u32 %v556, 2147483648
      %v1034 = vor.u32 1.1754944e-38, %v1033
      %v1035 = vsel %vm1032, %v1034, %v1030
      %v1036 = vmul.f32 1.0, %v1035
      %v1037 = vmul.f32 %v334, %v571
      %v1038 = vmul.f32 %v337, %v586
      %v1039 = vmul.f32 %v340, %v601
      %v1040 = vmul.f32 %v343, %v616
      %v1041 = vmul.f32 %v346, %v631
      %v1042 = vmul.f32 %v349, %v646
      %v1043 = vmul.f32 %v352, %v661
      %v1044 = vmul.f32 %v355, %v676
      %v1045 = vmul.f32 %v358, %v691
      %v1046 = vmul.f32 %v361, %v706
      %v1047 = vmul.f32 %v364, %v721
      %v1048 = vmul.f32 %v367, %v736
      %v1049 = vmul.f32 %v370, %v751
      %v1050 = vmul.f32 %v373, %v766
      %v1051 = vmul.f32 %v376, %v781
      %v1052 = vmul.f32 %v379, %v796
      %v1053 = vmul.f32 %v382, %v811
      %v1054 = vmul.f32 %v385, %v826
      %v1055 = vmul.f32 %v388, %v841
      %v1056 = vmul.f32 %v391, %v856
      %v1057 = vmul.f32 %v394, %v871
      %v1058 = vmul.f32 %v397, %v886
      %v1059 = vmul.f32 %v400, %v901
      %v1060 = vmul.f32 %v403, %v916
      %v1061 = vmul.f32 %v406, %v931
      %v1062 = vmul.f32 %v409, %v946
      %v1063 = vmul.f32 %v412, %v961
      %v1064 = vmul.f32 %v415, %v976
      %v1065 = vmul.f32 %v418, %v991
      %v1066 = vmul.f32 %v421, %v1006
      %v1067 = vmul.f32 %v424, %v1021
      %v1068 = vmul.f32 %v427, %v1036
      %vm1069 = vcmask 31744
      %1070 = vst.msk [vmem:[%s172] sm:$0xff] %vm1069, %v1037
      %1071 = vst.msk [vmem:[%s172 + $0x8] sm:$0xff] %vm1069, %v1038
      %1072 = vst.msk [vmem:[%s172 + $0x10] sm:$0xff] %vm1069, %v1039
      %1073 = vst.msk [vmem:[%s172 + $0x18] sm:$0xff] %vm1069, %v1040
      %1074 = vst.msk [vmem:[%s172 + $0x20] sm:$0xff] %vm1069, %v1041
      %1075 = vst.msk [vmem:[%s172 + $0x28] sm:$0xff] %vm1069, %v1042
      %1076 = vst.msk [vmem:[%s172 + $0x30] sm:$0xff] %vm1069, %v1043
      %1077 = vst.msk [vmem:[%s172 + $0x38] sm:$0xff] %vm1069, %v1044
      %1078 = vst.msk [vmem:[%s172 + $0x40] sm:$0xff] %vm1069, %v1045
      %1079 = vst.msk [vmem:[%s172 + $0x48] sm:$0xff] %vm1069, %v1046
      %1080 = vst.msk [vmem:[%s172 + $0x50] sm:$0xff] %vm1069, %v1047
      %1081 = vst.msk [vmem:[%s172 + $0x58] sm:$0xff] %vm1069, %v1048
      %1082 = vst.msk [vmem:[%s172 + $0x60] sm:$0xff] %vm1069, %v1049
      %1083 = vst.msk [vmem:[%s172 + $0x68] sm:$0xff] %vm1069, %v1050
      %1084 = vst.msk [vmem:[%s172 + $0x70] sm:$0xff] %vm1069, %v1051
      %1085 = vst.msk [vmem:[%s172 + $0x78] sm:$0xff] %vm1069, %v1052
      %1086 = vst.msk [vmem:[%s172 + $0x80] sm:$0xff] %vm1069, %v1053
      %1087 = vst.msk [vmem:[%s172 + $0x88] sm:$0xff] %vm1069, %v1054
      %1088 = vst.msk [vmem:[%s172 + $0x90] sm:$0xff] %vm1069, %v1055
      %1089 = vst.msk [vmem:[%s172 + $0x98] sm:$0xff] %vm1069, %v1056
      %1090 = vst.msk [vmem:[%s172 + $0xa0] sm:$0xff] %vm1069, %v1057
      %1091 = vst.msk [vmem:[%s172 + $0xa8] sm:$0xff] %vm1069, %v1058
      %1092 = vst.msk [vmem:[%s172 + $0xb0] sm:$0xff] %vm1069, %v1059
      %1093 = vst.msk [vmem:[%s172 + $0xb8] sm:$0xff] %vm1069, %v1060
      %1094 = vst.msk [vmem:[%s172 + $0xc0] sm:$0xff] %vm1069, %v1061
      %1095 = vst.msk [vmem:[%s172 + $0xc8] sm:$0xff] %vm1069, %v1062
      %1096 = vst.msk [vmem:[%s172 + $0xd0] sm:$0xff] %vm1069, %v1063
      %1097 = vst.msk [vmem:[%s172 + $0xd8] sm:$0xff] %vm1069, %v1064
      %1098 = vst.msk [vmem:[%s172 + $0xe0] sm:$0xff] %vm1069, %v1065
      %1099 = vst.msk [vmem:[%s172 + $0xe8] sm:$0xff] %vm1069, %v1066
      %1100 = vst.msk [vmem:[%s172 + $0xf0] sm:$0xff] %vm1069, %v1067
      %1101 = vst.msk [vmem:[%s172 + $0xf8] sm:$0xff] %vm1069, %v1068
      %s1102 = smul.u32 32, %s14
      %p1103 = scmp.lt.s32.totalorder %s1102, 63
      %s1104 = scalar_select %p1103, %s1102, 63
      %s1105 = smul.addr %s1104, 8
      %s1106 = scalar_lea.vmem %s3, %s1105
      // Predicated region
      $region33: #{elanb_forward.7} parent=31 // pred_check
        %p1107 = pneg %p100
      $region34: #{elanb_forward.7} parent=31 // pred_check_branch
        %1109 = sbr.rel (%p1107) target = $region36
      $region35: #{elanb_forward.7} parent=31 // pred_region
        %s1110 = smul.u32 32, %s14
      $region36: #{elanb_forward.7} parent=31 // pred_fallthru
        _
    $region32: #{elanb_forward.7} parent=5 // pred_fallthru
      _
    %p1111 = scmp.le.s32.totalorder 2, %s9
    // Predicated region
    $region37: #{elanb_forward.7} parent=5 // pred_check
      %p1112 = pneg %p1111
    $region38: #{elanb_forward.7} parent=5 // pred_check_branch
      %1114 = sbr.rel (%p1112) target = $region40
    $region39: #{elanb_forward.7} parent=5 // pred_region
      %s1115 = ssub.s32 %s9, 2
      // Predicated region
      $region41: #{elanb_forward.7} parent=39 // pred_check
        %p1116 = pneg %p106
      $region42: #{elanb_forward.7} parent=39 // pred_check_branch
        %1118 = sbr.rel (%p1116) target = $region44
      $region43: #{elanb_forward.7} parent=39 // pred_region
        %s1119 = smul.u32 32, %s15
        %p1120 = scmp.lt.s32.totalorder %s1119, 63
        %s1121 = scalar_select %p1120, %s1119, 63
        %s1122 = smul.addr %s1121, 8
        %s1123 = scalar_lea.vmem %s3, %s1122
      $region44: #{elanb_forward.7} parent=39 // pred_fallthru
        _
    $region40: #{elanb_forward.7} parent=5 // pred_fallthru
      _
  $region6: #{elanb_forward.7} parent=0 // loop_footer
    %s13 = sadd.s32 1, %s9
  $region7: #{elanb_forward.7} parent=0 // loop_footer_branch
    %8 = sbr.rel target = $region3
  $region8: #{elanb_forward.7} parent=0 // loop_exit
    _

// kernel: elanb_forward.11
$region0: #{elanb_forward.11}
  #allocation0 [shape = 'u32[]', space=smem, size = 0x4, offset = 0x4, fixed_abs, tag = 'smem constant byte address 0x4 - core index']
  #allocation1 [shape = 'u32[72,128]{1,0:T(1,128)}', space=vmem, size = 0x9000, scoped, tag = 'internal scratch']
  %s0 = inlined_call_operand.vmem [shape: f32[512,4], index: 0, kind: input, shape index: {}]
  %s1 = inlined_call_operand.vmem [shape: f32[512,4], index: 1, kind: input, shape index: {}]
  %s2 = inlined_call_operand.vmem [shape: f32[512,4], index: 2, kind: input, shape index: {}]
  %s3 = inlined_call_operand.vmem [shape: f32[512,4], index: 3, kind: input, shape index: {}]
  %s4 = inlined_call_operand.vmem [shape: f32[4,16], index: 4, kind: input, shape index: {}]
  %s5 = inlined_call_operand.vmem [shape: f32[4,16], index: 5, kind: input, shape index: {}]
  %s6 = inlined_call_operand.vmem [shape: f32[4,16], index: 6, kind: input, shape index: {}]
  %s7 = inlined_call_operand.vmem [shape: f32[4,16], index: 7, kind: input, shape index: {}]
  %s8 = inlined_call_operand.vmem [shape: f32[1,16], index: 8, kind: input, shape index: {}]
  %s9 = inlined_call_operand.vmem [shape: f32[512,16], index: 9, kind: output, shape index: {}]
  %s10 = sld [smem:[#allocation0]]
  $region69: #{elanb_forward.11} parent=0
    _
  %s12 = ssub.s32 1, %s10
  %s13 = scalar_select 0, %s12, %s10
  loop: start=0, step=1, limit=4
  $region2: #{elanb_forward.11} parent=0 // loop_pre_header
    _
  $region3: #{elanb_forward.11} parent=0 // loop_header
    %s15 = sphi 0, %s19
    %p16 = scmp.ge.s32.totalorder %s15, 4
    %s25 = sphi 0, %s27
    %s28 = sphi 0, %s25
    %s29 = sphi 0, %s28
    %s45 = sphi 0, %s29
    %s51 = sphi 0, %s53
    %s54 = sphi 0, %s51
    %s55 = sphi 0, %s54
    %s71 = sphi 0, %s55
    %s77 = sphi 0, %s79
    %s80 = sphi 0, %s77
    %s81 = sphi 0, %s80
    %s97 = sphi 0, %s81
    %s103 = sphi 0, %s105
    %s106 = sphi 0, %s103
    %s107 = sphi 0, %s106
    %s123 = sphi 0, %s107
    %s127 = sphi 0, %s127
    %s129 = sphi 0, %s127
    %s130 = sphi 0, %s129
    %s144 = sphi 0, %s130
    %s148 = sphi 0, %s148
    %s150 = sphi 0, %s148
    %s151 = sphi 0, %s150
    %s165 = sphi 0, %s151
    %s169 = sphi 0, %s169
    %s171 = sphi 0, %s169
    %s172 = sphi 0, %s171
    %s186 = sphi 0, %s172
    %s190 = sphi 0, %s190
    %s192 = sphi 0, %s190
    %s193 = sphi 0, %s192
    %s207 = sphi 0, %s193
    %s211 = sphi 0, %s211
    %s213 = sphi 0, %s211
    %s214 = sphi 0, %s213
    %s228 = sphi 0, %s214
    %s234 = sphi 0, %s236
    %s237 = sphi 0, %s234
    %s238 = sphi 0, %s237
    %s254 = sphi 0, %s238
  $region4: #{elanb_forward.11} parent=0 // loop_header_branch
    %18 = sbr.rel (%p16) target = $region8
  $region5: #{elanb_forward.11} parent=0 // loop_body
    %s20 = ssub.s32 %s15, 1
    %s21 = ssub.s32 %s15, 2
    %s22 = sadd.s32 %s15, 1
    %s23 = ssub.s32 %s15, %s22
    %p24 = scmp.eq.s32.totalorder %s23, 0
    %s26 = sadd.s32 %s25, 1
    %s27 = scalar_select %p24, %s25, %s26
    %p30 = pneg %p24
    %p31 = scmp.eq.s32.totalorder %s15, 1
    %p32 = por %p30, %p31
    %p33 = scmp.ne.s32.totalorder %s25, %s28
    %p34 = scmp.eq.s32.totalorder %s15, 0
    %p35 = por %p33, %p34
    %p36 = scmp.ne.s32.totalorder %s25, %s28
    %p37 = scmp.eq.s32.totalorder %s20, 1
    %p38 = por %p36, %p37
    %p39 = scmp.ne.s32.totalorder %s28, %s29
    %p40 = scmp.eq.s32.totalorder %s20, 0
    %p41 = por %p39, %p40
    %p42 = scmp.ne.s32.totalorder %s28, %s29
    %p43 = scmp.eq.s32.totalorder %s21, 1
    %p44 = por %p42, %p43
    %p46 = scmp.ne.s32.totalorder %s29, %s45
    %p47 = scmp.eq.s32.totalorder %s21, 0
    %p48 = por %p46, %p47
    %s49 = ssub.s32 %s15, %s22
    %p50 = scmp.eq.s32.totalorder %s49, 0
    %s52 = sadd.s32 %s51, 1
    %s53 = scalar_select %p50, %s51, %s52
    %p56 = pneg %p50
    %p57 = scmp.eq.s32.totalorder %s15, 1
    %p58 = por %p56, %p57
    %p59 = scmp.ne.s32.totalorder %s51, %s54
    %p60 = scmp.eq.s32.totalorder %s15, 0
    %p61 = por %p59, %p60
    %p62 = scmp.ne.s32.totalorder %s51, %s54
    %p63 = scmp.eq.s32.totalorder %s20, 1
    %p64 = por %p62, %p63
    %p65 = scmp.ne.s32.totalorder %s54, %s55
    %p66 = scmp.eq.s32.totalorder %s20, 0
    %p67 = por %p65, %p66
    %p68 = scmp.ne.s32.totalorder %s54, %s55
    %p69 = scmp.eq.s32.totalorder %s21, 1
    %p70 = por %p68, %p69
    %p72 = scmp.ne.s32.totalorder %s55, %s71
    %p73 = scmp.eq.s32.totalorder %s21, 0
    %p74 = por %p72, %p73
    %s75 = ssub.s32 %s15, %s22
    %p76 = scmp.eq.s32.totalorder %s75, 0
    %s78 = sadd.s32 %s77, 1
    %s79 = scalar_select %p76, %s77, %s78
    %p82 = pneg %p76
    %p83 = scmp.eq.s32.totalorder %s15, 1
    %p84 = por %p82, %p83
    %p85 = scmp.ne.s32.totalorder %s77, %s80
    %p86 = scmp.eq.s32.totalorder %s15, 0
    %p87 = por %p85, %p86
    %p88 = scmp.ne.s32.totalorder %s77, %s80
    %p89 = scmp.eq.s32.totalorder %s20, 1
    %p90 = por %p88, %p89
    %p91 = scmp.ne.s32.totalorder %s80, %s81
    %p92 = scmp.eq.s32.totalorder %s20, 0
    %p93 = por %p91, %p92
    %p94 = scmp.ne.s32.totalorder %s80, %s81
    %p95 = scmp.eq.s32.totalorder %s21, 1
    %p96 = por %p94, %p95
    %p98 = scmp.ne.s32.totalorder %s81, %s97
    %p99 = scmp.eq.s32.totalorder %s21, 0
    %p100 = por %p98, %p99
    %s101 = ssub.s32 %s15, %s22
    %p102 = scmp.eq.s32.totalorder %s101, 0
    %s104 = sadd.s32 %s103, 1
    %s105 = scalar_select %p102, %s103, %s104
    %p108 = pneg %p102
    %p109 = scmp.eq.s32.totalorder %s15, 1
    %p110 = por %p108, %p109
    %p111 = scmp.ne.s32.totalorder %s103, %s106
    %p112 = scmp.eq.s32.totalorder %s15, 0
    %p113 = por %p111, %p112
    %p114 = scmp.ne.s32.totalorder %s103, %s106
    %p115 = scmp.eq.s32.totalorder %s20, 1
    %p116 = por %p114, %p115
    %p117 = scmp.ne.s32.totalorder %s106, %s107
    %p118 = scmp.eq.s32.totalorder %s20, 0
    %p119 = por %p117, %p118
    %p120 = scmp.ne.s32.totalorder %s106, %s107
    %p121 = scmp.eq.s32.totalorder %s21, 1
    %p122 = por %p120, %p121
    %p124 = scmp.ne.s32.totalorder %s107, %s123
    %p125 = scmp.eq.s32.totalorder %s21, 0
    %p126 = por %p124, %p125
    %s128 = sadd.s32 %s127, 1
    %p131 = scmp.eq.s32.totalorder %s15, 1
    %p132 = scmp.ne.s32.totalorder %s127, %s129
    %p133 = scmp.eq.s32.totalorder %s15, 0
    %p134 = por %p132, %p133
    %p135 = scmp.ne.s32.totalorder %s127, %s129
    %p136 = scmp.eq.s32.totalorder %s20, 1
    %p137 = por %p135, %p136
    %p138 = scmp.ne.s32.totalorder %s129, %s130
    %p139 = scmp.eq.s32.totalorder %s20, 0
    %p140 = por %p138, %p139
    %p141 = scmp.ne.s32.totalorder %s129, %s130
    %p142 = scmp.eq.s32.totalorder %s21, 1
    %p143 = por %p141, %p142
    %p145 = scmp.ne.s32.totalorder %s130, %s144
    %p146 = scmp.eq.s32.totalorder %s21, 0
    %p147 = por %p145, %p146
    %s149 = sadd.s32 %s148, 1
    %p152 = scmp.eq.s32.totalorder %s15, 1
    %p153 = scmp.ne.s32.totalorder %s148, %s150
    %p154 = scmp.eq.s32.totalorder %s15, 0
    %p155 = por %p153, %p154
    %p156 = scmp.ne.s32.totalorder %s148, %s150
    %p157 = scmp.eq.s32.totalorder %s20, 1
    %p158 = por %p156, %p157
    %p159 = scmp.ne.s32.totalorder %s150, %s151
    %p160 = scmp.eq.s32.totalorder %s20, 0
    %p161 = por %p159, %p160
    %p162 = scmp.ne.s32.totalorder %s150, %s151
    %p163 = scmp.eq.s32.totalorder %s21, 1
    %p164 = por %p162, %p163
    %p166 = scmp.ne.s32.totalorder %s151, %s165
    %p167 = scmp.eq.s32.totalorder %s21, 0
    %p168 = por %p166, %p167
    %s170 = sadd.s32 %s169, 1
    %p173 = scmp.eq.s32.totalorder %s15, 1
    %p174 = scmp.ne.s32.totalorder %s169, %s171
    %p175 = scmp.eq.s32.totalorder %s15, 0
    %p176 = por %p174, %p175
    %p177 = scmp.ne.s32.totalorder %s169, %s171
    %p178 = scmp.eq.s32.totalorder %s20, 1
    %p179 = por %p177, %p178
    %p180 = scmp.ne.s32.totalorder %s171, %s172
    %p181 = scmp.eq.s32.totalorder %s20, 0
    %p182 = por %p180, %p181
    %p183 = scmp.ne.s32.totalorder %s171, %s172
    %p184 = scmp.eq.s32.totalorder %s21, 1
    %p185 = por %p183, %p184
    %p187 = scmp.ne.s32.totalorder %s172, %s186
    %p188 = scmp.eq.s32.totalorder %s21, 0
    %p189 = por %p187, %p188
    %s191 = sadd.s32 %s190, 1
    %p194 = scmp.eq.s32.totalorder %s15, 1
    %p195 = scmp.ne.s32.totalorder %s190, %s192
    %p196 = scmp.eq.s32.totalorder %s15, 0
    %p197 = por %p195, %p196
    %p198 = scmp.ne.s32.totalorder %s190, %s192
    %p199 = scmp.eq.s32.totalorder %s20, 1
    %p200 = por %p198, %p199
    %p201 = scmp.ne.s32.totalorder %s192, %s193
    %p202 = scmp.eq.s32.totalorder %s20, 0
    %p203 = por %p201, %p202
    %p204 = scmp.ne.s32.totalorder %s192, %s193
    %p205 = scmp.eq.s32.totalorder %s21, 1
    %p206 = por %p204, %p205
    %p208 = scmp.ne.s32.totalorder %s193, %s207
    %p209 = scmp.eq.s32.totalorder %s21, 0
    %p210 = por %p208, %p209
    %s212 = sadd.s32 %s211, 1
    %p215 = scmp.eq.s32.totalorder %s15, 1
    %p216 = scmp.ne.s32.totalorder %s211, %s213
    %p217 = scmp.eq.s32.totalorder %s15, 0
    %p218 = por %p216, %p217
    %p219 = scmp.ne.s32.totalorder %s211, %s213
    %p220 = scmp.eq.s32.totalorder %s20, 1
    %p221 = por %p219, %p220
    %p222 = scmp.ne.s32.totalorder %s213, %s214
    %p223 = scmp.eq.s32.totalorder %s20, 0
    %p224 = por %p222, %p223
    %p225 = scmp.ne.s32.totalorder %s213, %s214
    %p226 = scmp.eq.s32.totalorder %s21, 1
    %p227 = por %p225, %p226
    %p229 = scmp.ne.s32.totalorder %s214, %s228
    %p230 = scmp.eq.s32.totalorder %s21, 0
    %p231 = por %p229, %p230
    %s232 = ssub.s32 %s15, %s22
    %p233 = scmp.eq.s32.totalorder %s232, 0
    %s235 = sadd.s32 %s234, 1
    %s236 = scalar_select %p233, %s234, %s235
    %p239 = pneg %p233
    %p240 = scmp.eq.s32.totalorder %s15, 1
    %p241 = por %p239, %p240
    %p242 = scmp.ne.s32.totalorder %s234, %s237
    %p243 = scmp.eq.s32.totalorder %s15, 0
    %p244 = por %p242, %p243
    %p245 = scmp.ne.s32.totalorder %s234, %s237
    %p246 = scmp.eq.s32.totalorder %s20, 1
    %p247 = por %p245, %p246
    %p248 = scmp.ne.s32.totalorder %s237, %s238
    %p249 = scmp.eq.s32.totalorder %s20, 0
    %p250 = por %p248, %p249
    %p251 = scmp.ne.s32.totalorder %s237, %s238
    %p252 = scmp.eq.s32.totalorder %s21, 1
    %p253 = por %p251, %p252
    %p255 = scmp.ne.s32.totalorder %s238, %s254
    %p256 = scmp.eq.s32.totalorder %s21, 0
    %p257 = por %p255, %p256
    %p258 = scmp.le.s32.totalorder 1, %s15
    %p259 = scmp.lt.s32.totalorder %s15, 3
    %p260 = pnand %p258, %p259
    %p261 = pneg %p260
    // Predicated region
    $region9: #{elanb_forward.11} parent=5 // pred_check
      _
    $region10: #{elanb_forward.11} parent=5 // pred_check_branch
      %263 = sbr.rel (%p260) target = $region12
    $region11: #{elanb_forward.11} parent=5 // pred_region
      %s264 = ssub.s32 %s15, 1
      // Predicated region
      $region13: #{elanb_forward.11} parent=11 // pred_check
        %p265 = pneg %p140
      $region14: #{elanb_forward.11} parent=11 // pred_check_branch
        %267 = sbr.rel (%p265) target = $region16
      $region15: #{elanb_forward.11} parent=11 // pred_region
        _
      $region16: #{elanb_forward.11} parent=11 // pred_fallthru
        _
      // Predicated region
      $region17: #{elanb_forward.11} parent=11 // pred_check
        %p268 = pneg %p161
      $region18: #{elanb_forward.11} parent=11 // pred_check_branch
        %270 = sbr.rel (%p268) target = $region20
      $region19: #{elanb_forward.11} parent=11 // pred_region
        _
      $region20: #{elanb_forward.11} parent=11 // pred_fallthru
        _
      // Predicated region
      $region21: #{elanb_forward.11} parent=11 // pred_check
        %p271 = pneg %p182
      $region22: #{elanb_forward.11} parent=11 // pred_check_branch
        %273 = sbr.rel (%p271) target = $region24
      $region23: #{elanb_forward.11} parent=11 // pred_region
        _
      $region24: #{elanb_forward.11} parent=11 // pred_fallthru
        _
      // Predicated region
      $region25: #{elanb_forward.11} parent=11 // pred_check
        %p274 = pneg %p203
      $region26: #{elanb_forward.11} parent=11 // pred_check_branch
        %276 = sbr.rel (%p274) target = $region28
      $region27: #{elanb_forward.11} parent=11 // pred_region
        _
      $region28: #{elanb_forward.11} parent=11 // pred_fallthru
        _
      // Predicated region
      $region29: #{elanb_forward.11} parent=11 // pred_check
        %p277 = pneg %p224
      $region30: #{elanb_forward.11} parent=11 // pred_check_branch
        %279 = sbr.rel (%p277) target = $region32
      $region31: #{elanb_forward.11} parent=11 // pred_region
        _
      $region32: #{elanb_forward.11} parent=11 // pred_fallthru
        _
    $region12: #{elanb_forward.11} parent=5 // pred_fallthru
      _
    %p280 = scmp.lt.s32.totalorder %s15, 2
    // Predicated region
    $region33: #{elanb_forward.11} parent=5 // pred_check
      %p281 = pneg %p280
    $region34: #{elanb_forward.11} parent=5 // pred_check_branch
      %283 = sbr.rel (%p281) target = $region36
    $region35: #{elanb_forward.11} parent=5 // pred_region
      // Predicated region
      $region37: #{elanb_forward.11} parent=35 // pred_check
        %p284 = pneg %p35
      $region38: #{elanb_forward.11} parent=35 // pred_check_branch
        %286 = sbr.rel (%p284) target = $region40
      $region39: #{elanb_forward.11} parent=35 // pred_region
        %s287 = smul.u32 32, %s15
        %p288 = scmp.lt.s32.totalorder %s287, 63
        %s289 = scalar_select %p288, %s287, 63
        %s290 = smul.addr %s289, 8
        %s291 = scalar_lea.vmem %s0, %s290
        %s292 = smul.u32 32, %s15
      $region40: #{elanb_forward.11} parent=35 // pred_fallthru
        _
      // Predicated region
      $region41: #{elanb_forward.11} parent=35 // pred_check
        %p293 = pneg %p61
      $region42: #{elanb_forward.11} parent=35 // pred_check_branch
        %295 = sbr.rel (%p293) target = $region44
      $region43: #{elanb_forward.11} parent=35 // pred_region
        %s296 = smul.u32 32, %s15
        %p297 = scmp.lt.s32.totalorder %s296, 63
        %s298 = scalar_select %p297, %s296, 63
        %s299 = smul.addr %s298, 8
        %s300 = scalar_lea.vmem %s1, %s299
        %s301 = smul.u32 32, %s15
      $region44: #{elanb_forward.11} parent=35 // pred_fallthru
        _
      // Predicated region
      $region45: #{elanb_forward.11} parent=35 // pred_check
        %p302 = pneg %p87
      $region46: #{elanb_forward.11} parent=35 // pred_check_branch
        %304 = sbr.rel (%p302) target = $region48
      $region47: #{elanb_forward.11} parent=35 // pred_region
        %s305 = smul.u32 32, %s15
        %p306 = scmp.lt.s32.totalorder %s305, 63
        %s307 = scalar_select %p306, %s305, 63
        %s308 = smul.addr %s307, 8
        %s309 = scalar_lea.vmem %s2, %s308
        %s310 = smul.u32 32, %s15
      $region48: #{elanb_forward.11} parent=35 // pred_fallthru
        _
      // Predicated region
      $region49: #{elanb_forward.11} parent=35 // pred_check
        %p311 = pneg %p113
      $region50: #{elanb_forward.11} parent=35 // pred_check_branch
        %313 = sbr.rel (%p311) target = $region52
      $region51: #{elanb_forward.11} parent=35 // pred_region
        %s314 = smul.u32 32, %s15
        %p315 = scmp.lt.s32.totalorder %s314, 63
        %s316 = scalar_select %p315, %s314, 63
        %s317 = smul.addr %s316, 8
        %s318 = scalar_lea.vmem %s3, %s317
        %s319 = smul.u32 32, %s15
      $region52: #{elanb_forward.11} parent=35 // pred_fallthru
        _
    $region36: #{elanb_forward.11} parent=5 // pred_fallthru
      _
    %p320 = scmp.le.s32.totalorder 1, %s15
    %p321 = scmp.lt.s32.totalorder %s15, 3
    %p322 = pnand %p320, %p321
    %p323 = pneg %p322
    // Predicated region
    $region53: #{elanb_forward.11} parent=5 // pred_check
      _
    $region54: #{elanb_forward.11} parent=5 // pred_check_branch
      %325 = sbr.rel (%p322) target = $region56
    $region55: #{elanb_forward.11} parent=5 // pred_region
      %s326 = ssub.s32 %s15, 1
      %s327 = smul.u32 32, %s20
      %p328 = scmp.lt.s32.totalorder %s327, 63
      %s329 = scalar_select %p328, %s327, 63
      %s330 = smul.addr %s329, 8
      %s331 = scalar_lea.vmem %s0, %s330
      %p332 = pneg %p41
      %p333 = pneg %p38
      %s334 = smul.u32 32, %s20
      %p335 = scmp.lt.s32.totalorder %s334, 63
      %s336 = scalar_select %p335, %s334, 63
      %s337 = smul.addr %s336, 8
      %s338 = scalar_lea.vmem %s1, %s337
      %p339 = pneg %p67
      %p340 = pneg %p64
      %s341 = smul.u32 32, %s20
      %p342 = scmp.lt.s32.totalorder %s341, 63
      %s343 = scalar_select %p342, %s341, 63
      %s344 = smul.addr %s343, 8
      %s345 = scalar_lea.vmem %s2, %s344
      %p346 = pneg %p93
      %p347 = pneg %p90
      %s348 = smul.u32 32, %s20
      %p349 = scmp.lt.s32.totalorder %s348, 63
      %s350 = scalar_select %p349, %s348, 63
      %s351 = smul.addr %s350, 8
      %s352 = scalar_lea.vmem %s3, %s351
      %p353 = pneg %p119
      %p354 = pneg %p116
      %p355 = pneg %p140
      %p356 = pneg %p137
      %p357 = pneg %p161
      %p358 = pneg %p158
      %p359 = pneg %p182
      %p360 = pneg %p179
      %p361 = pneg %p203
      %p362 = pneg %p200
      %p363 = pneg %p224
      %p364 = pneg %p221
      %p365 = pneg %p250
      %p366 = pneg %p247
      %s367 = smul.u32 32, %s20
      %p368 = scmp.lt.s32.totalorder %s367, 63
      %s369 = scalar_select %p368, %s367, 63
      %s370 = smul.addr %s369, 8
      %s371 = scalar_lea.vmem %s9, %s370
      %s372 = smul.u32 32, %s20
      %p373 = scmp.lt.s32.totalorder %s372, 63
      %s374 = scalar_select %p373, %s372, 63
      %s375 = smul.addr %s374, 8
      %s376 = scalar_lea.vmem %s0, %s375
      %s377 = smul.u32 32, %s20
      %s378 = smul.u32 32, %s20
      %p379 = scmp.lt.s32.totalorder %s378, 63
      %s380 = scalar_select %p379, %s378, 63
      %s381 = smul.addr %s380, 8
      %s382 = scalar_lea.vmem %s1, %s381
      %s383 = smul.u32 32, %s20
      %s384 = smul.u32 32, %s20
      %p385 = scmp.lt.s32.totalorder %s384, 63
      %s386 = scalar_select %p385, %s384, 63
      %s387 = smul.addr %s386, 8
      %s388 = scalar_lea.vmem %s2, %s387
      %s389 = smul.u32 32, %s20
      %s390 = smul.u32 32, %s20
      %p391 = scmp.lt.s32.totalorder %s390, 63
      %s392 = scalar_select %p391, %s390, 63
      %s393 = smul.addr %s392, 8
      %s394 = scalar_lea.vmem %s3, %s393
      %s395 = smul.u32 32, %s20
      %s396 = smul.u32 32, %s20
      %p397 = scmp.lt.s32.totalorder %s396, 63
      %s398 = scalar_select %p397, %s396, 63
      %s399 = smul.addr %s398, 8
      %s400 = scalar_lea.vmem %s9, %s399
      %s401 = smul.u32 32, %s20
      %v402 = vld [vmem:[%s376] sm:$0xff]
      %v403 = vld [vmem:[%s376 + $0x8] sm:$0xff]
      %v404 = vld [vmem:[%s376 + $0x10] sm:$0xff]
      %v405 = vld [vmem:[%s376 + $0x18] sm:$0xff]
      %v406 = vld [vmem:[%s376 + $0x20] sm:$0xff]
      %v407 = vld [vmem:[%s376 + $0x28] sm:$0xff]
      %v408 = vld [vmem:[%s376 + $0x30] sm:$0xff]
      %v409 = vld [vmem:[%s376 + $0x38] sm:$0xff]
      %v410 = vld [vmem:[%s376 + $0x40] sm:$0xff]
      %v411 = vld [vmem:[%s376 + $0x48] sm:$0xff]
      %v412 = vld [vmem:[%s376 + $0x50] sm:$0xff]
      %v413 = vld [vmem:[%s376 + $0x58] sm:$0xff]
      %v414 = vld [vmem:[%s376 + $0x60] sm:$0xff]
      %v415 = vld [vmem:[%s376 + $0x68] sm:$0xff]
      %v416 = vld [vmem:[%s376 + $0x70] sm:$0xff]
      %v417 = vld [vmem:[%s376 + $0x78] sm:$0xff]
      %v418 = vld [vmem:[%s376 + $0x80] sm:$0xff]
      %v419 = vld [vmem:[%s376 + $0x88] sm:$0xff]
      %v420 = vld [vmem:[%s376 + $0x90] sm:$0xff]
      %v421 = vld [vmem:[%s376 + $0x98] sm:$0xff]
      %v422 = vld [vmem:[%s376 + $0xa0] sm:$0xff]
      %v423 = vld [vmem:[%s376 + $0xa8] sm:$0xff]
      %v424 = vld [vmem:[%s376 + $0xb0] sm:$0xff]
      %v425 = vld [vmem:[%s376 + $0xb8] sm:$0xff]
      %v426 = vld [vmem:[%s376 + $0xc0] sm:$0xff]
      %v427 = vld [vmem:[%s376 + $0xc8] sm:$0xff]
      %v428 = vld [vmem:[%s376 + $0xd0] sm:$0xff]
      %v429 = vld [vmem:[%s376 + $0xd8] sm:$0xff]
      %v430 = vld [vmem:[%s376 + $0xe0] sm:$0xff]
      %v431 = vld [vmem:[%s376 + $0xe8] sm:$0xff]
      %v432 = vld [vmem:[%s376 + $0xf0] sm:$0xff]
      %v433 = vld [vmem:[%s376 + $0xf8] sm:$0xff]
      %v434 = vld [vmem:[%s4] sm:$0xf]
      %v435 = vld [vmem:[%s382] sm:$0xff]
      %v436 = vld [vmem:[%s382 + $0x8] sm:$0xff]
      %v437 = vld [vmem:[%s382 + $0x10] sm:$0xff]
      %v438 = vld [vmem:[%s382 + $0x18] sm:$0xff]
      %v439 = vld [vmem:[%s382 + $0x20] sm:$0xff]
      %v440 = vld [vmem:[%s382 + $0x28] sm:$0xff]
      %v441 = vld [vmem:[%s382 + $0x30] sm:$0xff]
      %v442 = vld [vmem:[%s382 + $0x38] sm:$0xff]
      %v443 = vld [vmem:[%s382 + $0x40] sm:$0xff]
      %v444 = vld [vmem:[%s382 + $0x48] sm:$0xff]
      %v445 = vld [vmem:[%s382 + $0x50] sm:$0xff]
      %v446 = vld [vmem:[%s382 + $0x58] sm:$0xff]
      %v447 = vld [vmem:[%s382 + $0x60] sm:$0xff]
      %v448 = vld [vmem:[%s382 + $0x68] sm:$0xff]
      %v449 = vld [vmem:[%s382 + $0x70] sm:$0xff]
      %v450 = vld [vmem:[%s382 + $0x78] sm:$0xff]
      %v451 = vld [vmem:[%s382 + $0x80] sm:$0xff]
      %v452 = vld [vmem:[%s382 + $0x88] sm:$0xff]
      %v453 = vld [vmem:[%s382 + $0x90] sm:$0xff]
      %v454 = vld [vmem:[%s382 + $0x98] sm:$0xff]
      %v455 = vld [vmem:[%s382 + $0xa0] sm:$0xff]
      %v456 = vld [vmem:[%s382 + $0xa8] sm:$0xff]
      %v457 = vld [vmem:[%s382 + $0xb0] sm:$0xff]
      %v458 = vld [vmem:[%s382 + $0xb8] sm:$0xff]
      %v459 = vld [vmem:[%s382 + $0xc0] sm:$0xff]
      %v460 = vld [vmem:[%s382 + $0xc8] sm:$0xff]
      %v461 = vld [vmem:[%s382 + $0xd0] sm:$0xff]
      %v462 = vld [vmem:[%s382 + $0xd8] sm:$0xff]
      %v463 = vld [vmem:[%s382 + $0xe0] sm:$0xff]
      %v464 = vld [vmem:[%s382 + $0xe8] sm:$0xff]
      %v465 = vld [vmem:[%s382 + $0xf0] sm:$0xff]
      %v466 = vld [vmem:[%s382 + $0xf8] sm:$0xff]
      %v467 = vld [vmem:[%s5] sm:$0xf]
      %vm468 = vcmask 31744
      %v470 = vsel %vm468, %v435, 0
      %v473 = vsel %vm468, %v436, 0
      %v476 = vsel %vm468, %v437, 0
      %v479 = vsel %vm468, %v438, 0
      %v482 = vsel %vm468, %v439, 0
      %v485 = vsel %vm468, %v440, 0
      %v488 = vsel %vm468, %v441, 0
      %v491 = vsel %vm468, %v442, 0
      %v494 = vsel %vm468, %v443, 0
      %v497 = vsel %vm468, %v444, 0
      %v500 = vsel %vm468, %v445, 0
      %v503 = vsel %vm468, %v446, 0
      %v506 = vsel %vm468, %v447, 0
      %v509 = vsel %vm468, %v448, 0
      %v512 = vsel %vm468, %v449, 0
      %v515 = vsel %vm468, %v450, 0
      %v518 = vsel %vm468, %v451, 0
      %v521 = vsel %vm468, %v452, 0
      %v524 = vsel %vm468, %v453, 0
      %v527 = vsel %vm468, %v454, 0
      %v530 = vsel %vm468, %v455, 0
      %v533 = vsel %vm468, %v456, 0
      %v536 = vsel %vm468, %v457, 0
      %v539 = vsel %vm468, %v458, 0
      %v542 = vsel %vm468, %v459, 0
      %v545 = vsel %vm468, %v460, 0
      %v548 = vsel %vm468, %v461, 0
      %v551 = vsel %vm468, %v462, 0
      %v554 = vsel %vm468, %v463, 0
      %v557 = vsel %vm468, %v464, 0
      %v560 = vsel %vm468, %v465, 0
      %v563 = vsel %vm468, %v466, 0
      %vm565 = vcmask 1043456
      %v567 = vsel %vm565, %v467, 0
      %569 = vmatpush.msra.mxu0 0.0
      %570 = vmatpush.msra.mxu0 0.0
      %571 = vmatpush.msra.mxu0 0.0
      %572 = vmatpush.msra.mxu0 0.0
      %573 = vmatpush.msra.mxu0 0.0
      %574 = vmatpush.msra.mxu0 0.0
      %575 = vmatpush.msra.mxu0 0.0
      %576 = vmatpush.msra.mxu0 0.0
      %577 = vmatpush.msra.mxu0 0.0
      %578 = vmatpush.msra.mxu0 0.0
      %579 = vmatpush.msra.mxu0 0.0
      %580 = vmatpush.msra.mxu0 0.0
      %581 = vmatpush.msra.mxu0 0.0
      %582 = vmatpush.msra.mxu0 0.0
      %583 = vmatpush.msra.mxu0 0.0
      %584 = vmatpush.msra.mxu0 %v567
      %585 = vmatmul.f32.gmra.mxu0 %v470
      %v586 = vpop.f32.mrf.mxu0
      %v587 = vadd.f32 0.0, %v586
      %588 = vmatmul.f32.gmra.mxu0 %v473
      %v589 = vpop.f32.mrf.mxu0
      %v590 = vadd.f32 0.0, %v589
      %591 = vmatmul.f32.gmra.mxu0 %v476
      %v592 = vpop.f32.mrf.mxu0
      %v593 = vadd.f32 0.0, %v592
      %594 = vmatmul.f32.gmra.mxu0 %v479
      %v595 = vpop.f32.mrf.mxu0
      %v596 = vadd.f32 0.0, %v595
      %597 = vmatmul.f32.gmra.mxu0 %v482
      %v598 = vpop.f32.mrf.mxu0
      %v599 = vadd.f32 0.0, %v598
      %600 = vmatmul.f32.gmra.mxu0 %v485
      %v601 = vpop.f32.mrf.mxu0
      %v602 = vadd.f32 0.0, %v601
      %603 = vmatmul.f32.gmra.mxu0 %v488
      %v604 = vpop.f32.mrf.mxu0
      %v605 = vadd.f32 0.0, %v604
      %606 = vmatmul.f32.gmra.mxu0 %v491
      %v607 = vpop.f32.mrf.mxu0
      %v608 = vadd.f32 0.0, %v607
      %609 = vmatmul.f32.gmra.mxu0 %v494
      %v610 = vpop.f32.mrf.mxu0
      %v611 = vadd.f32 0.0, %v610
      %612 = vmatmul.f32.gmra.mxu0 %v497
      %v613 = vpop.f32.mrf.mxu0
      %v614 = vadd.f32 0.0, %v613
      %615 = vmatmul.f32.gmra.mxu0 %v500
      %v616 = vpop.f32.mrf.mxu0
      %v617 = vadd.f32 0.0, %v616
      %618 = vmatmul.f32.gmra.mxu0 %v503
      %v619 = vpop.f32.mrf.mxu0
      %v620 = vadd.f32 0.0, %v619
      %621 = vmatmul.f32.gmra.mxu0 %v506
      %v622 = vpop.f32.mrf.mxu0
      %v623 = vadd.f32 0.0, %v622
      %624 = vmatmul.f32.gmra.mxu0 %v509
      %v625 = vpop.f32.mrf.mxu0
      %v626 = vadd.f32 0.0, %v625
      %627 = vmatmul.f32.gmra.mxu0 %v512
      %v628 = vpop.f32.mrf.mxu0
      %v629 = vadd.f32 0.0, %v628
      %630 = vmatmul.f32.gmra.mxu0 %v515
      %v631 = vpop.f32.mrf.mxu0
      %v632 = vadd.f32 0.0, %v631
      %633 = vmatmul.f32.gmra.mxu0 %v518
      %v634 = vpop.f32.mrf.mxu0
      %v635 = vadd.f32 0.0, %v634
      %636 = vmatmul.f32.gmra.mxu0 %v521
      %v637 = vpop.f32.mrf.mxu0
      %v638 = vadd.f32 0.0, %v637
      %639 = vmatmul.f32.gmra.mxu0 %v524
      %v640 = vpop.f32.mrf.mxu0
      %v641 = vadd.f32 0.0, %v640
      %642 = vmatmul.f32.gmra.mxu0 %v527
      %v643 = vpop.f32.mrf.mxu0
      %v644 = vadd.f32 0.0, %v643
      %645 = vmatmul.f32.gmra.mxu0 %v530
      %v646 = vpop.f32.mrf.mxu0
      %v647 = vadd.f32 0.0, %v646
      %648 = vmatmul.f32.gmra.mxu0 %v533
      %v649 = vpop.f32.mrf.mxu0
      %v650 = vadd.f32 0.0, %v649
      %651 = vmatmul.f32.gmra.mxu0 %v536
      %v652 = vpop.f32.mrf.mxu0
      %v653 = vadd.f32 0.0, %v652
      %654 = vmatmul.f32.gmra.mxu0 %v539
      %v655 = vpop.f32.mrf.mxu0
      %v656 = vadd.f32 0.0, %v655
      %657 = vmatmul.f32.gmra.mxu0 %v542
      %v658 = vpop.f32.mrf.mxu0
      %v659 = vadd.f32 0.0, %v658
      %660 = vmatmul.f32.gmra.mxu0 %v545
      %v661 = vpop.f32.mrf.mxu0
      %v662 = vadd.f32 0.0, %v661
      %663 = vmatmul.f32.gmra.mxu0 %v548
      %v664 = vpop.f32.mrf.mxu0
      %v665 = vadd.f32 0.0, %v664
      %666 = vmatmul.f32.gmra.mxu0 %v551
      %v667 = vpop.f32.mrf.mxu0
      %v668 = vadd.f32 0.0, %v667
      %669 = vmatmul.f32.gmra.mxu0 %v554
      %v670 = vpop.f32.mrf.mxu0
      %v671 = vadd.f32 0.0, %v670
      %672 = vmatmul.f32.gmra.mxu0 %v557
      %v673 = vpop.f32.mrf.mxu0
      %v674 = vadd.f32 0.0, %v673
      %675 = vmatmul.f32.gmra.mxu0 %v560
      %v676 = vpop.f32.mrf.mxu0
      %v677 = vadd.f32 0.0, %v676
      %678 = vmatmul.f32.gmra.mxu0 %v563
      %v679 = vpop.f32.mrf.mxu0
      %v680 = vadd.f32 0.0, %v679
      %681 = vdwg.mxu0
      %v683 = vsel %vm468, %v402, 0
      %v686 = vsel %vm468, %v403, 0
      %v689 = vsel %vm468, %v404, 0
      %v692 = vsel %vm468, %v405, 0
      %v695 = vsel %vm468, %v406, 0
      %v698 = vsel %vm468, %v407, 0
      %v701 = vsel %vm468, %v408, 0
      %v704 = vsel %vm468, %v409, 0
      %v707 = vsel %vm468, %v410, 0
      %v710 = vsel %vm468, %v411, 0
      %v713 = vsel %vm468, %v412, 0
      %v716 = vsel %vm468, %v413, 0
      %v719 = vsel %vm468, %v414, 0
      %v722 = vsel %vm468, %v415, 0
      %v725 = vsel %vm468, %v416, 0
      %v728 = vsel %vm468, %v417, 0
      %v731 = vsel %vm468, %v418, 0
      %v734 = vsel %vm468, %v419, 0
      %v737 = vsel %vm468, %v420, 0
      %v740 = vsel %vm468, %v421, 0
      %v743 = vsel %vm468, %v422, 0
      %v746 = vsel %vm468, %v423, 0
      %v749 = vsel %vm468, %v424, 0
      %v752 = vsel %vm468, %v425, 0
      %v755 = vsel %vm468, %v426, 0
      %v758 = vsel %vm468, %v427, 0
      %v761 = vsel %vm468, %v428, 0
      %v764 = vsel %vm468, %v429, 0
      %v767 = vsel %vm468, %v430, 0
      %v770 = vsel %vm468, %v431, 0
      %v773 = vsel %vm468, %v432, 0
      %v776 = vsel %vm468, %v433, 0
      %v779 = vsel %vm565, %v434, 0
      %781 = vmatpush.msra.mxu0 0.0
      %782 = vmatpush.msra.mxu0 0.0
      %783 = vmatpush.msra.mxu0 0.0
      %784 = vmatpush.msra.mxu0 0.0
      %785 = vmatpush.msra.mxu0 0.0
      %786 = vmatpush.msra.mxu0 0.0
      %787 = vmatpush.msra.mxu0 0.0
      %788 = vmatpush.msra.mxu0 0.0
      %789 = vmatpush.msra.mxu0 0.0
      %790 = vmatpush.msra.mxu0 0.0
      %791 = vmatpush.msra.mxu0 0.0
      %792 = vmatpush.msra.mxu0 0.0
      %793 = vmatpush.msra.mxu0 0.0
      %794 = vmatpush.msra.mxu0 0.0
      %795 = vmatpush.msra.mxu0 0.0
      %796 = vmatpush.msra.mxu0 %v779
      %797 = vmatmul.f32.gmra.mxu0 %v683
      %v798 = vpop.f32.mrf.mxu0
      %v799 = vadd.f32 %v587, %v798
      %800 = vmatmul.f32.gmra.mxu0 %v686
      %v801 = vpop.f32.mrf.mxu0
      %v802 = vadd.f32 %v590, %v801
      %803 = vmatmul.f32.gmra.mxu0 %v689
      %v804 = vpop.f32.mrf.mxu0
      %v805 = vadd.f32 %v593, %v804
      %806 = vmatmul.f32.gmra.mxu0 %v692
      %v807 = vpop.f32.mrf.mxu0
      %v808 = vadd.f32 %v596, %v807
      %809 = vmatmul.f32.gmra.mxu0 %v695
      %v810 = vpop.f32.mrf.mxu0
      %v811 = vadd.f32 %v599, %v810
      %812 = vmatmul.f32.gmra.mxu0 %v698
      %v813 = vpop.f32.mrf.mxu0
      %v814 = vadd.f32 %v602, %v813
      %815 = vmatmul.f32.gmra.mxu0 %v701
      %v816 = vpop.f32.mrf.mxu0
      %v817 = vadd.f32 %v605, %v816
      %818 = vmatmul.f32.gmra.mxu0 %v704
      %v819 = vpop.f32.mrf.mxu0
      %v820 = vadd.f32 %v608, %v819
      %821 = vmatmul.f32.gmra.mxu0 %v707
      %v822 = vpop.f32.mrf.mxu0
      %v823 = vadd.f32 %v611, %v822
      %824 = vmatmul.f32.gmra.mxu0 %v710
      %v825 = vpop.f32.mrf.mxu0
      %v826 = vadd.f32 %v614, %v825
      %827 = vmatmul.f32.gmra.mxu0 %v713
      %v828 = vpop.f32.mrf.mxu0
      %v829 = vadd.f32 %v617, %v828
      %830 = vmatmul.f32.gmra.mxu0 %v716
      %v831 = vpop.f32.mrf.mxu0
      %v832 = vadd.f32 %v620, %v831
      %833 = vmatmul.f32.gmra.mxu0 %v719
      %v834 = vpop.f32.mrf.mxu0
      %v835 = vadd.f32 %v623, %v834
      %836 = vmatmul.f32.gmra.mxu0 %v722
      %v837 = vpop.f32.mrf.mxu0
      %v838 = vadd.f32 %v626, %v837
      %839 = vmatmul.f32.gmra.mxu0 %v725
      %v840 = vpop.f32.mrf.mxu0
      %v841 = vadd.f32 %v629, %v840
      %842 = vmatmul.f32.gmra.mxu0 %v728
      %v843 = vpop.f32.mrf.mxu0
      %v844 = vadd.f32 %v632, %v843
      %845 = vmatmul.f32.gmra.mxu0 %v731
      %v846 = vpop.f32.mrf.mxu0
      %v847 = vadd.f32 %v635, %v846
      %848 = vmatmul.f32.gmra.mxu0 %v734
      %v849 = vpop.f32.mrf.mxu0
      %v850 = vadd.f32 %v638, %v849
      %851 = vmatmul.f32.gmra.mxu0 %v737
      %v852 = vpop.f32.mrf.mxu0
      %v853 = vadd.f32 %v641, %v852
      %854 = vmatmul.f32.gmra.mxu0 %v740
      %v855 = vpop.f32.mrf.mxu0
      %v856 = vadd.f32 %v644, %v855
      %857 = vmatmul.f32.gmra.mxu0 %v743
      %v858 = vpop.f32.mrf.mxu0
      %v859 = vadd.f32 %v647, %v858
      %860 = vmatmul.f32.gmra.mxu0 %v746
      %v861 = vpop.f32.mrf.mxu0
      %v862 = vadd.f32 %v650, %v861
      %863 = vmatmul.f32.gmra.mxu0 %v749
      %v864 = vpop.f32.mrf.mxu0
      %v865 = vadd.f32 %v653, %v864
      %866 = vmatmul.f32.gmra.mxu0 %v752
      %v867 = vpop.f32.mrf.mxu0
      %v868 = vadd.f32 %v656, %v867
      %869 = vmatmul.f32.gmra.mxu0 %v755
      %v870 = vpop.f32.mrf.mxu0
      %v871 = vadd.f32 %v659, %v870
      %872 = vmatmul.f32.gmra.mxu0 %v758
      %v873 = vpop.f32.mrf.mxu0
      %v874 = vadd.f32 %v662, %v873
      %875 = vmatmul.f32.gmra.mxu0 %v761
      %v876 = vpop.f32.mrf.mxu0
      %v877 = vadd.f32 %v665, %v876
      %878 = vmatmul.f32.gmra.mxu0 %v764
      %v879 = vpop.f32.mrf.mxu0
      %v880 = vadd.f32 %v668, %v879
      %881 = vmatmul.f32.gmra.mxu0 %v767
      %v882 = vpop.f32.mrf.mxu0
      %v883 = vadd.f32 %v671, %v882
      %884 = vmatmul.f32.gmra.mxu0 %v770
      %v885 = vpop.f32.mrf.mxu0
      %v886 = vadd.f32 %v674, %v885
      %887 = vmatmul.f32.gmra.mxu0 %v773
      %v888 = vpop.f32.mrf.mxu0
      %v889 = vadd.f32 %v677, %v888
      %890 = vmatmul.f32.gmra.mxu0 %v776
      %v891 = vpop.f32.mrf.mxu0
      %v892 = vadd.f32 %v680, %v891
      %893 = vdwg.mxu0
      %v894 = vld [vmem:[%s388] sm:$0xff]
      %v895 = vld [vmem:[%s388 + $0x8] sm:$0xff]
      %v896 = vld [vmem:[%s388 + $0x10] sm:$0xff]
      %v897 = vld [vmem:[%s388 + $0x18] sm:$0xff]
      %v898 = vld [vmem:[%s388 + $0x20] sm:$0xff]
      %v899 = vld [vmem:[%s388 + $0x28] sm:$0xff]
      %v900 = vld [vmem:[%s388 + $0x30] sm:$0xff]
      %v901 = vld [vmem:[%s388 + $0x38] sm:$0xff]
      %v902 = vld [vmem:[%s388 + $0x40] sm:$0xff]
      %v903 = vld [vmem:[%s388 + $0x48] sm:$0xff]
      %v904 = vld [vmem:[%s388 + $0x50] sm:$0xff]
      %v905 = vld [vmem:[%s388 + $0x58] sm:$0xff]
      %v906 = vld [vmem:[%s388 + $0x60] sm:$0xff]
      %v907 = vld [vmem:[%s388 + $0x68] sm:$0xff]
      %v908 = vld [vmem:[%s388 + $0x70] sm:$0xff]
      %v909 = vld [vmem:[%s388 + $0x78] sm:$0xff]
      %v910 = vld [vmem:[%s388 + $0x80] sm:$0xff]
      %v911 = vld [vmem:[%s388 + $0x88] sm:$0xff]
      %v912 = vld [vmem:[%s388 + $0x90] sm:$0xff]
      %v913 = vld [vmem:[%s388 + $0x98] sm:$0xff]
      %v914 = vld [vmem:[%s388 + $0xa0] sm:$0xff]
      %v915 = vld [vmem:[%s388 + $0xa8] sm:$0xff]
      %v916 = vld [vmem:[%s388 + $0xb0] sm:$0xff]
      %v917 = vld [vmem:[%s388 + $0xb8] sm:$0xff]
      %v918 = vld [vmem:[%s388 + $0xc0] sm:$0xff]
      %v919 = vld [vmem:[%s388 + $0xc8] sm:$0xff]
      %v920 = vld [vmem:[%s388 + $0xd0] sm:$0xff]
      %v921 = vld [vmem:[%s388 + $0xd8] sm:$0xff]
      %v922 = vld [vmem:[%s388 + $0xe0] sm:$0xff]
      %v923 = vld [vmem:[%s388 + $0xe8] sm:$0xff]
      %v924 = vld [vmem:[%s388 + $0xf0] sm:$0xff]
      %v925 = vld [vmem:[%s388 + $0xf8] sm:$0xff]
      %v926 = vld [vmem:[%s6] sm:$0xf]
      %v928 = vsel %vm468, %v894, 0
      %v931 = vsel %vm468, %v895, 0
      %v934 = vsel %vm468, %v896, 0
      %v937 = vsel %vm468, %v897, 0
      %v940 = vsel %vm468, %v898, 0
      %v943 = vsel %vm468, %v899, 0
      %v946 = vsel %vm468, %v900, 0
      %v949 = vsel %vm468, %v901, 0
      %v952 = vsel %vm468, %v902, 0
      %v955 = vsel %vm468, %v903, 0
      %v958 = vsel %vm468, %v904, 0
      %v961 = vsel %vm468, %v905, 0
      %v964 = vsel %vm468, %v906, 0
      %v967 = vsel %vm468, %v907, 0
      %v970 = vsel %vm468, %v908, 0
      %v973 = vsel %vm468, %v909, 0
      %v976 = vsel %vm468, %v910, 0
      %v979 = vsel %vm468, %v911, 0
      %v982 = vsel %vm468, %v912, 0
      %v985 = vsel %vm468, %v913, 0
      %v988 = vsel %vm468, %v914, 0
      %v991 = vsel %vm468, %v915, 0
      %v994 = vsel %vm468, %v916, 0
      %v997 = vsel %vm468, %v917, 0
      %v1000 = vsel %vm468, %v918, 0
      %v1003 = vsel %vm468, %v919, 0
      %v1006 = vsel %vm468, %v920, 0
      %v1009 = vsel %vm468, %v921, 0
      %v1012 = vsel %vm468, %v922, 0
      %v1015 = vsel %vm468, %v923, 0
      %v1018 = vsel %vm468, %v924, 0
      %v1021 = vsel %vm468, %v925, 0
      %v1024 = vsel %vm565, %v926, 0
      %1026 = vmatpush.msra.mxu0 0.0
      %1027 = vmatpush.msra.mxu0 0.0
      %1028 = vmatpush.msra.mxu0 0.0
      %1029 = vmatpush.msra.mxu0 0.0
      %1030 = vmatpush.msra.mxu0 0.0
      %1031 = vmatpush.msra.mxu0 0.0
      %1032 = vmatpush.msra.mxu0 0.0
      %1033 = vmatpush.msra.mxu0 0.0
      %1034 = vmatpush.msra.mxu0 0.0
      %1035 = vmatpush.msra.mxu0 0.0
      %1036 = vmatpush.msra.mxu0 0.0
      %1037 = vmatpush.msra.mxu0 0.0
      %1038 = vmatpush.msra.mxu0 0.0
      %1039 = vmatpush.msra.mxu0 0.0
      %1040 = vmatpush.msra.mxu0 0.0
      %1041 = vmatpush.msra.mxu0 %v1024
      %1042 = vmatmul.f32.gmra.mxu0 %v928
      %v1043 = vpop.f32.mrf.mxu0
      %v1044 = vadd.f32 0.0, %v1043
      %1045 = vmatmul.f32.gmra.mxu0 %v931
      %v1046 = vpop.f32.mrf.mxu0
      %v1047 = vadd.f32 0.0, %v1046
      %1048 = vmatmul.f32.gmra.mxu0 %v934
      %v1049 = vpop.f32.mrf.mxu0
      %v1050 = vadd.f32 0.0, %v1049
      %1051 = vmatmul.f32.gmra.mxu0 %v937
      %v1052 = vpop.f32.mrf.mxu0
      %v1053 = vadd.f32 0.0, %v1052
      %1054 = vmatmul.f32.gmra.mxu0 %v940
      %v1055 = vpop.f32.mrf.mxu0
      %v1056 = vadd.f32 0.0, %v1055
      %1057 = vmatmul.f32.gmra.mxu0 %v943
      %v1058 = vpop.f32.mrf.mxu0
      %v1059 = vadd.f32 0.0, %v1058
      %1060 = vmatmul.f32.gmra.mxu0 %v946
      %v1061 = vpop.f32.mrf.mxu0
      %v1062 = vadd.f32 0.0, %v1061
      %1063 = vmatmul.f32.gmra.mxu0 %v949
      %v1064 = vpop.f32.mrf.mxu0
      %v1065 = vadd.f32 0.0, %v1064
      %1066 = vmatmul.f32.gmra.mxu0 %v952
      %v1067 = vpop.f32.mrf.mxu0
      %v1068 = vadd.f32 0.0, %v1067
      %1069 = vmatmul.f32.gmra.mxu0 %v955
      %v1070 = vpop.f32.mrf.mxu0
      %v1071 = vadd.f32 0.0, %v1070
      %1072 = vmatmul.f32.gmra.mxu0 %v958
      %v1073 = vpop.f32.mrf.mxu0
      %v1074 = vadd.f32 0.0, %v1073
      %1075 = vmatmul.f32.gmra.mxu0 %v961
      %v1076 = vpop.f32.mrf.mxu0
      %v1077 = vadd.f32 0.0, %v1076
      %1078 = vmatmul.f32.gmra.mxu0 %v964
      %v1079 = vpop.f32.mrf.mxu0
      %v1080 = vadd.f32 0.0, %v1079
      %1081 = vmatmul.f32.gmra.mxu0 %v967
      %v1082 = vpop.f32.mrf.mxu0
      %v1083 = vadd.f32 0.0, %v1082
      %1084 = vmatmul.f32.gmra.mxu0 %v970
      %v1085 = vpop.f32.mrf.mxu0
      %v1086 = vadd.f32 0.0, %v1085
      %1087 = vmatmul.f32.gmra.mxu0 %v973
      %v1088 = vpop.f32.mrf.mxu0
      %v1089 = vadd.f32 0.0, %v1088
      %1090 = vmatmul.f32.gmra.mxu0 %v976
      %v1091 = vpop.f32.mrf.mxu0
      %v1092 = vadd.f32 0.0, %v1091
      %1093 = vmatmul.f32.gmra.mxu0 %v979
      %v1094 = vpop.f32.mrf.mxu0
      %v1095 = vadd.f32 0.0, %v1094
      %1096 = vmatmul.f32.gmra.mxu0 %v982
      %v1097 = vpop.f32.mrf.mxu0
      %v1098 = vadd.f32 0.0, %v1097
      %1099 = vmatmul.f32.gmra.mxu0 %v985
      %v1100 = vpop.f32.mrf.mxu0
      %v1101 = vadd.f32 0.0, %v1100
      %1102 = vmatmul.f32.gmra.mxu0 %v988
      %v1103 = vpop.f32.mrf.mxu0
      %v1104 = vadd.f32 0.0, %v1103
      %1105 = vmatmul.f32.gmra.mxu0 %v991
      %v1106 = vpop.f32.mrf.mxu0
      %v1107 = vadd.f32 0.0, %v1106
      %1108 = vmatmul.f32.gmra.mxu0 %v994
      %v1109 = vpop.f32.mrf.mxu0
      %v1110 = vadd.f32 0.0, %v1109
      %1111 = vmatmul.f32.gmra.mxu0 %v997
      %v1112 = vpop.f32.mrf.mxu0
      %v1113 = vadd.f32 0.0, %v1112
      %1114 = vmatmul.f32.gmra.mxu0 %v1000
      %v1115 = vpop.f32.mrf.mxu0
      %v1116 = vadd.f32 0.0, %v1115
      %1117 = vmatmul.f32.gmra.mxu0 %v1003
      %v1118 = vpop.f32.mrf.mxu0
      %v1119 = vadd.f32 0.0, %v1118
      %1120 = vmatmul.f32.gmra.mxu0 %v1006
      %v1121 = vpop.f32.mrf.mxu0
      %v1122 = vadd.f32 0.0, %v1121
      %1123 = vmatmul.f32.gmra.mxu0 %v1009
      %v1124 = vpop.f32.mrf.mxu0
      %v1125 = vadd.f32 0.0, %v1124
      %1126 = vmatmul.f32.gmra.mxu0 %v1012
      %v1127 = vpop.f32.mrf.mxu0
      %v1128 = vadd.f32 0.0, %v1127
      %1129 = vmatmul.f32.gmra.mxu0 %v1015
      %v1130 = vpop.f32.mrf.mxu0
      %v1131 = vadd.f32 0.0, %v1130
      %1132 = vmatmul.f32.gmra.mxu0 %v1018
      %v1133 = vpop.f32.mrf.mxu0
      %v1134 = vadd.f32 0.0, %v1133
      %1135 = vmatmul.f32.gmra.mxu0 %v1021
      %v1136 = vpop.f32.mrf.mxu0
      %v1137 = vadd.f32 0.0, %v1136
      %1138 = vdwg.mxu0
      %v1139 = vadd.f32 %v799, %v1044
      %v1140 = vadd.f32 %v802, %v1047
      %v1141 = vadd.f32 %v805, %v1050
      %v1142 = vadd.f32 %v808, %v1053
      %v1143 = vadd.f32 %v811, %v1056
      %v1144 = vadd.f32 %v814, %v1059
      %v1145 = vadd.f32 %v817, %v1062
      %v1146 = vadd.f32 %v820, %v1065
      %v1147 = vadd.f32 %v823, %v1068
      %v1148 = vadd.f32 %v826, %v1071
      %v1149 = vadd.f32 %v829, %v1074
      %v1150 = vadd.f32 %v832, %v1077
      %v1151 = vadd.f32 %v835, %v1080
      %v1152 = vadd.f32 %v838, %v1083
      %v1153 = vadd.f32 %v841, %v1086
      %v1154 = vadd.f32 %v844, %v1089
      %v1155 = vadd.f32 %v847, %v1092
      %v1156 = vadd.f32 %v850, %v1095
      %v1157 = vadd.f32 %v853, %v1098
      %v1158 = vadd.f32 %v856, %v1101
      %v1159 = vadd.f32 %v859, %v1104
      %v1160 = vadd.f32 %v862, %v1107
      %v1161 = vadd.f32 %v865, %v1110
      %v1162 = vadd.f32 %v868, %v1113
      %v1163 = vadd.f32 %v871, %v1116
      %v1164 = vadd.f32 %v874, %v1119
      %v1165 = vadd.f32 %v877, %v1122
      %v1166 = vadd.f32 %v880, %v1125
      %v1167 = vadd.f32 %v883, %v1128
      %v1168 = vadd.f32 %v886, %v1131
      %v1169 = vadd.f32 %v889, %v1134
      %v1170 = vadd.f32 %v892, %v1137
      %v1171 = vld [vmem:[%s394] sm:$0xff]
      %v1172 = vld [vmem:[%s394 + $0x8] sm:$0xff]
      %v1173 = vld [vmem:[%s394 + $0x10] sm:$0xff]
      %v1174 = vld [vmem:[%s394 + $0x18] sm:$0xff]
      %v1175 = vld [vmem:[%s394 + $0x20] sm:$0xff]
      %v1176 = vld [vmem:[%s394 + $0x28] sm:$0xff]
      %v1177 = vld [vmem:[%s394 + $0x30] sm:$0xff]
      %v1178 = vld [vmem:[%s394 + $0x38] sm:$0xff]
      %v1179 = vld [vmem:[%s394 + $0x40] sm:$0xff]
      %v1180 = vld [vmem:[%s394 + $0x48] sm:$0xff]
      %v1181 = vld [vmem:[%s394 + $0x50] sm:$0xff]
      %v1182 = vld [vmem:[%s394 + $0x58] sm:$0xff]
      %v1183 = vld [vmem:[%s394 + $0x60] sm:$0xff]
      %v1184 = vld [vmem:[%s394 + $0x68] sm:$0xff]
      %v1185 = vld [vmem:[%s394 + $0x70] sm:$0xff]
      %v1186 = vld [vmem:[%s394 + $0x78] sm:$0xff]
      %v1187 = vld [vmem:[%s394 + $0x80] sm:$0xff]
      %v1188 = vld [vmem:[%s394 + $0x88] sm:$0xff]
      %v1189 = vld [vmem:[%s394 + $0x90] sm:$0xff]
      %v1190 = vld [vmem:[%s394 + $0x98] sm:$0xff]
      %v1191 = vld [vmem:[%s394 + $0xa0] sm:$0xff]
      %v1192 = vld [vmem:[%s394 + $0xa8] sm:$0xff]
      %v1193 = vld [vmem:[%s394 + $0xb0] sm:$0xff]
      %v1194 = vld [vmem:[%s394 + $0xb8] sm:$0xff]
      %v1195 = vld [vmem:[%s394 + $0xc0] sm:$0xff]
      %v1196 = vld [vmem:[%s394 + $0xc8] sm:$0xff]
      %v1197 = vld [vmem:[%s394 + $0xd0] sm:$0xff]
      %v1198 = vld [vmem:[%s394 + $0xd8] sm:$0xff]
      %v1199 = vld [vmem:[%s394 + $0xe0] sm:$0xff]
      %v1200 = vld [vmem:[%s394 + $0xe8] sm:$0xff]
      %v1201 = vld [vmem:[%s394 + $0xf0] sm:$0xff]
      %v1202 = vld [vmem:[%s394 + $0xf8] sm:$0xff]
      %v1203 = vld [vmem:[%s7] sm:$0xf]
      %v1205 = vsel %vm468, %v1171, 0
      %v1208 = vsel %vm468, %v1172, 0
      %v1211 = vsel %vm468, %v1173, 0
      %v1214 = vsel %vm468, %v1174, 0
      %v1217 = vsel %vm468, %v1175, 0
      %v1220 = vsel %vm468, %v1176, 0
      %v1223 = vsel %vm468, %v1177, 0
      %v1226 = vsel %vm468, %v1178, 0
      %v1229 = vsel %vm468, %v1179, 0
      %v1232 = vsel %vm468, %v1180, 0
      %v1235 = vsel %vm468, %v1181, 0
      %v1238 = vsel %vm468, %v1182, 0
      %v1241 = vsel %vm468, %v1183, 0
      %v1244 = vsel %vm468, %v1184, 0
      %v1247 = vsel %vm468, %v1185, 0
      %v1250 = vsel %vm468, %v1186, 0
      %v1253 = vsel %vm468, %v1187, 0
      %v1256 = vsel %vm468, %v1188, 0
      %v1259 = vsel %vm468, %v1189, 0
      %v1262 = vsel %vm468, %v1190, 0
      %v1265 = vsel %vm468, %v1191, 0
      %v1268 = vsel %vm468, %v1192, 0
      %v1271 = vsel %vm468, %v1193, 0
      %v1274 = vsel %vm468, %v1194, 0
      %v1277 = vsel %vm468, %v1195, 0
      %v1280 = vsel %vm468, %v1196, 0
      %v1283 = vsel %vm468, %v1197, 0
      %v1286 = vsel %vm468, %v1198, 0
      %v1289 = vsel %vm468, %v1199, 0
      %v1292 = vsel %vm468, %v1200, 0
      %v1295 = vsel %vm468, %v1201, 0
      %v1298 = vsel %vm468, %v1202, 0
      %v1301 = vsel %vm565, %v1203, 0
      %1303 = vmatpush.msra.mxu0 0.0
      %1304 = vmatpush.msra.mxu0 0.0
      %1305 = vmatpush.msra.mxu0 0.0
      %1306 = vmatpush.msra.mxu0 0.0
      %1307 = vmatpush.msra.mxu0 0.0
      %1308 = vmatpush.msra.mxu0 0.0
      %1309 = vmatpush.msra.mxu0 0.0
      %1310 = vmatpush.msra.mxu0 0.0
      %1311 = vmatpush.msra.mxu0 0.0
      %1312 = vmatpush.msra.mxu0 0.0
      %1313 = vmatpush.msra.mxu0 0.0
      %1314 = vmatpush.msra.mxu0 0.0
      %1315 = vmatpush.msra.mxu0 0.0
      %1316 = vmatpush.msra.mxu0 0.0
      %1317 = vmatpush.msra.mxu0 0.0
      %1318 = vmatpush.msra.mxu0 %v1301
      %1319 = vmatmul.f32.gmra.mxu0 %v1205
      %v1320 = vpop.f32.mrf.mxu0
      %v1321 = vadd.f32 0.0, %v1320
      %1322 = vmatmul.f32.gmra.mxu0 %v1208
      %v1323 = vpop.f32.mrf.mxu0
      %v1324 = vadd.f32 0.0, %v1323
      %1325 = vmatmul.f32.gmra.mxu0 %v1211
      %v1326 = vpop.f32.mrf.mxu0
      %v1327 = vadd.f32 0.0, %v1326
      %1328 = vmatmul.f32.gmra.mxu0 %v1214
      %v1329 = vpop.f32.mrf.mxu0
      %v1330 = vadd.f32 0.0, %v1329
      %1331 = vmatmul.f32.gmra.mxu0 %v1217
      %v1332 = vpop.f32.mrf.mxu0
      %v1333 = vadd.f32 0.0, %v1332
      %1334 = vmatmul.f32.gmra.mxu0 %v1220
      %v1335 = vpop.f32.mrf.mxu0
      %v1336 = vadd.f32 0.0, %v1335
      %1337 = vmatmul.f32.gmra.mxu0 %v1223
      %v1338 = vpop.f32.mrf.mxu0
      %v1339 = vadd.f32 0.0, %v1338
      %1340 = vmatmul.f32.gmra.mxu0 %v1226
      %v1341 = vpop.f32.mrf.mxu0
      %v1342 = vadd.f32 0.0, %v1341
      %1343 = vmatmul.f32.gmra.mxu0 %v1229
      %v1344 = vpop.f32.mrf.mxu0
      %v1345 = vadd.f32 0.0, %v1344
      %1346 = vmatmul.f32.gmra.mxu0 %v1232
      %v1347 = vpop.f32.mrf.mxu0
      %v1348 = vadd.f32 0.0, %v1347
      %1349 = vmatmul.f32.gmra.mxu0 %v1235
      %v1350 = vpop.f32.mrf.mxu0
      %v1351 = vadd.f32 0.0, %v1350
      %1352 = vmatmul.f32.gmra.mxu0 %v1238
      %v1353 = vpop.f32.mrf.mxu0
      %v1354 = vadd.f32 0.0, %v1353
      %1355 = vmatmul.f32.gmra.mxu0 %v1241
      %v1356 = vpop.f32.mrf.mxu0
      %v1357 = vadd.f32 0.0, %v1356
      %1358 = vmatmul.f32.gmra.mxu0 %v1244
      %v1359 = vpop.f32.mrf.mxu0
      %v1360 = vadd.f32 0.0, %v1359
      %1361 = vmatmul.f32.gmra.mxu0 %v1247
      %v1362 = vpop.f32.mrf.mxu0
      %v1363 = vadd.f32 0.0, %v1362
      %1364 = vmatmul.f32.gmra.mxu0 %v1250
      %v1365 = vpop.f32.mrf.mxu0
      %v1366 = vadd.f32 0.0, %v1365
      %1367 = vmatmul.f32.gmra.mxu0 %v1253
      %v1368 = vpop.f32.mrf.mxu0
      %v1369 = vadd.f32 0.0, %v1368
      %1370 = vmatmul.f32.gmra.mxu0 %v1256
      %v1371 = vpop.f32.mrf.mxu0
      %v1372 = vadd.f32 0.0, %v1371
      %1373 = vmatmul.f32.gmra.mxu0 %v1259
      %v1374 = vpop.f32.mrf.mxu0
      %v1375 = vadd.f32 0.0, %v1374
      %1376 = vmatmul.f32.gmra.mxu0 %v1262
      %v1377 = vpop.f32.mrf.mxu0
      %v1378 = vadd.f32 0.0, %v1377
      %1379 = vmatmul.f32.gmra.mxu0 %v1265
      %v1380 = vpop.f32.mrf.mxu0
      %v1381 = vadd.f32 0.0, %v1380
      %1382 = vmatmul.f32.gmra.mxu0 %v1268
      %v1383 = vpop.f32.mrf.mxu0
      %v1384 = vadd.f32 0.0, %v1383
      %1385 = vmatmul.f32.gmra.mxu0 %v1271
      %v1386 = vpop.f32.mrf.mxu0
      %v1387 = vadd.f32 0.0, %v1386
      %1388 = vmatmul.f32.gmra.mxu0 %v1274
      %v1389 = vpop.f32.mrf.mxu0
      %v1390 = vadd.f32 0.0, %v1389
      %1391 = vmatmul.f32.gmra.mxu0 %v1277
      %v1392 = vpop.f32.mrf.mxu0
      %v1393 = vadd.f32 0.0, %v1392
      %1394 = vmatmul.f32.gmra.mxu0 %v1280
      %v1395 = vpop.f32.mrf.mxu0
      %v1396 = vadd.f32 0.0, %v1395
      %1397 = vmatmul.f32.gmra.mxu0 %v1283
      %v1398 = vpop.f32.mrf.mxu0
      %v1399 = vadd.f32 0.0, %v1398
      %1400 = vmatmul.f32.gmra.mxu0 %v1286
      %v1401 = vpop.f32.mrf.mxu0
      %v1402 = vadd.f32 0.0, %v1401
      %1403 = vmatmul.f32.gmra.mxu0 %v1289
      %v1404 = vpop.f32.mrf.mxu0
      %v1405 = vadd.f32 0.0, %v1404
      %1406 = vmatmul.f32.gmra.mxu0 %v1292
      %v1407 = vpop.f32.mrf.mxu0
      %v1408 = vadd.f32 0.0, %v1407
      %1409 = vmatmul.f32.gmra.mxu0 %v1295
      %v1410 = vpop.f32.mrf.mxu0
      %v1411 = vadd.f32 0.0, %v1410
      %1412 = vmatmul.f32.gmra.mxu0 %v1298
      %v1413 = vpop.f32.mrf.mxu0
      %v1414 = vadd.f32 0.0, %v1413
      %1415 = vdwg.mxu0
      %v1416 = vadd.f32 %v1139, %v1321
      %v1417 = vadd.f32 %v1140, %v1324
      %v1418 = vadd.f32 %v1141, %v1327
      %v1419 = vadd.f32 %v1142, %v1330
      %v1420 = vadd.f32 %v1143, %v1333
      %v1421 = vadd.f32 %v1144, %v1336
      %v1422 = vadd.f32 %v1145, %v1339
      %v1423 = vadd.f32 %v1146, %v1342
      %v1424 = vadd.f32 %v1147, %v1345
      %v1425 = vadd.f32 %v1148, %v1348
      %v1426 = vadd.f32 %v1149, %v1351
      %v1427 = vadd.f32 %v1150, %v1354
      %v1428 = vadd.f32 %v1151, %v1357
      %v1429 = vadd.f32 %v1152, %v1360
      %v1430 = vadd.f32 %v1153, %v1363
      %v1431 = vadd.f32 %v1154, %v1366
      %v1432 = vadd.f32 %v1155, %v1369
      %v1433 = vadd.f32 %v1156, %v1372
      %v1434 = vadd.f32 %v1157, %v1375
      %v1435 = vadd.f32 %v1158, %v1378
      %v1436 = vadd.f32 %v1159, %v1381
      %v1437 = vadd.f32 %v1160, %v1384
      %v1438 = vadd.f32 %v1161, %v1387
      %v1439 = vadd.f32 %v1162, %v1390
      %v1440 = vadd.f32 %v1163, %v1393
      %v1441 = vadd.f32 %v1164, %v1396
      %v1442 = vadd.f32 %v1165, %v1399
      %v1443 = vadd.f32 %v1166, %v1402
      %v1444 = vadd.f32 %v1167, %v1405
      %v1445 = vadd.f32 %v1168, %v1408
      %v1446 = vadd.f32 %v1169, %v1411
      %v1447 = vadd.f32 %v1170, %v1414
      %v1448 = vld [vmem:[%s8] sm:$0x1]
      %v1450 = vperm.slane %v1448, 0
      %v1452 = vadd.f32 %v1416, %v1450
      %v1453 = vadd.f32 %v1417, %v1450
      %v1454 = vadd.f32 %v1418, %v1450
      %v1455 = vadd.f32 %v1419, %v1450
      %v1456 = vadd.f32 %v1420, %v1450
      %v1457 = vadd.f32 %v1421, %v1450
      %v1458 = vadd.f32 %v1422, %v1450
      %v1459 = vadd.f32 %v1423, %v1450
      %v1460 = vadd.f32 %v1424, %v1450
      %v1461 = vadd.f32 %v1425, %v1450
      %v1462 = vadd.f32 %v1426, %v1450
      %v1463 = vadd.f32 %v1427, %v1450
      %v1464 = vadd.f32 %v1428, %v1450
      %v1465 = vadd.f32 %v1429, %v1450
      %v1466 = vadd.f32 %v1430, %v1450
      %v1467 = vadd.f32 %v1431, %v1450
      %v1468 = vadd.f32 %v1432, %v1450
      %v1469 = vadd.f32 %v1433, %v1450
      %v1470 = vadd.f32 %v1434, %v1450
      %v1471 = vadd.f32 %v1435, %v1450
      %v1472 = vadd.f32 %v1436, %v1450
      %v1473 = vadd.f32 %v1437, %v1450
      %v1474 = vadd.f32 %v1438, %v1450
      %v1475 = vadd.f32 %v1439, %v1450
      %v1476 = vadd.f32 %v1440, %v1450
      %v1477 = vadd.f32 %v1441, %v1450
      %v1478 = vadd.f32 %v1442, %v1450
      %v1479 = vadd.f32 %v1443, %v1450
      %v1480 = vadd.f32 %v1444, %v1450
      %v1481 = vadd.f32 %v1445, %v1450
      %v1482 = vadd.f32 %v1446, %v1450
      %v1483 = vadd.f32 %v1447, %v1450
      %v1484 = vxor.u32 %v1452, 2147483648
      %v1485 = vxor.u32 %v1453, 2147483648
      %v1486 = vxor.u32 %v1454, 2147483648
      %v1487 = vxor.u32 %v1455, 2147483648
      %v1488 = vxor.u32 %v1456, 2147483648
      %v1489 = vxor.u32 %v1457, 2147483648
      %v1490 = vxor.u32 %v1458, 2147483648
      %v1491 = vxor.u32 %v1459, 2147483648
      %v1492 = vxor.u32 %v1460, 2147483648
      %v1493 = vxor.u32 %v1461, 2147483648
      %v1494 = vxor.u32 %v1462, 2147483648
      %v1495 = vxor.u32 %v1463, 2147483648
      %v1496 = vxor.u32 %v1464, 2147483648
      %v1497 = vxor.u32 %v1465, 2147483648
      %v1498 = vxor.u32 %v1466, 2147483648
      %v1499 = vxor.u32 %v1467, 2147483648
      %v1500 = vxor.u32 %v1468, 2147483648
      %v1501 = vxor.u32 %v1469, 2147483648
      %v1502 = vxor.u32 %v1470, 2147483648
      %v1503 = vxor.u32 %v1471, 2147483648
      %v1504 = vxor.u32 %v1472, 2147483648
      %v1505 = vxor.u32 %v1473, 2147483648
      %v1506 = vxor.u32 %v1474, 2147483648
      %v1507 = vxor.u32 %v1475, 2147483648
      %v1508 = vxor.u32 %v1476, 2147483648
      %v1509 = vxor.u32 %v1477, 2147483648
      %v1510 = vxor.u32 %v1478, 2147483648
      %v1511 = vxor.u32 %v1479, 2147483648
      %v1512 = vxor.u32 %v1480, 2147483648
      %v1513 = vxor.u32 %v1481, 2147483648
      %v1514 = vxor.u32 %v1482, 2147483648
      %v1515 = vxor.u32 %v1483, 2147483648
      %v1516 = vmul.f32 %v1484, 1.442695
      %v1517 = vpow.pop %v1516
      %v1518 = vmul.f32 %v1485, 1.442695
      %v1519 = vpow.pop %v1518
      %v1520 = vmul.f32 %v1486, 1.442695
      %v1521 = vpow.pop %v1520
      %v1522 = vmul.f32 %v1487, 1.442695
      %v1523 = vpow.pop %v1522
      %v1524 = vmul.f32 %v1488, 1.442695
      %v1525 = vpow.pop %v1524
      %v1526 = vmul.f32 %v1489, 1.442695
      %v1527 = vpow.pop %v1526
      %v1528 = vmul.f32 %v1490, 1.442695
      %v1529 = vpow.pop %v1528
      %v1530 = vmul.f32 %v1491, 1.442695
      %v1531 = vpow.pop %v1530
      %v1532 = vmul.f32 %v1492, 1.442695
      %v1533 = vpow.pop %v1532
      %v1534 = vmul.f32 %v1493, 1.442695
      %v1535 = vpow.pop %v1534
      %v1536 = vmul.f32 %v1494, 1.442695
      %v1537 = vpow.pop %v1536
      %v1538 = vmul.f32 %v1495, 1.442695
      %v1539 = vpow.pop %v1538
      %v1540 = vmul.f32 %v1496, 1.442695
      %v1541 = vpow.pop %v1540
      %v1542 = vmul.f32 %v1497, 1.442695
      %v1543 = vpow.pop %v1542
      %v1544 = vmul.f32 %v1498, 1.442695
      %v1545 = vpow.pop %v1544
      %v1546 = vmul.f32 %v1499, 1.442695
      %v1547 = vpow.pop %v1546
      %v1548 = vmul.f32 %v1500, 1.442695
      %v1549 = vpow.pop %v1548
      %v1550 = vmul.f32 %v1501, 1.442695
      %v1551 = vpow.pop %v1550
      %v1552 = vmul.f32 %v1502, 1.442695
      %v1553 = vpow.pop %v1552
      %v1554 = vmul.f32 %v1503, 1.442695
      %v1555 = vpow.pop %v1554
      %v1556 = vmul.f32 %v1504, 1.442695
      %v1557 = vpow.pop %v1556
      %v1558 = vmul.f32 %v1505, 1.442695
      %v1559 = vpow.pop %v1558
      %v1560 = vmul.f32 %v1506, 1.442695
      %v1561 = vpow.pop %v1560
      %v1562 = vmul.f32 %v1507, 1.442695
      %v1563 = vpow.pop %v1562
      %v1564 = vmul.f32 %v1508, 1.442695
      %v1565 = vpow.pop %v1564
      %v1566 = vmul.f32 %v1509, 1.442695
      %v1567 = vpow.pop %v1566
      %v1568 = vmul.f32 %v1510, 1.442695
      %v1569 = vpow.pop %v1568
      %v1570 = vmul.f32 %v1511, 1.442695
      %v1571 = vpow.pop %v1570
      %v1572 = vmul.f32 %v1512, 1.442695
      %v1573 = vpow.pop %v1572
      %v1574 = vmul.f32 %v1513, 1.442695
      %v1575 = vpow.pop %v1574
      %v1576 = vmul.f32 %v1514, 1.442695
      %v1577 = vpow.pop %v1576
      %v1578 = vmul.f32 %v1515, 1.442695
      %v1579 = vpow.pop %v1578
      %v1580 = vadd.f32 %v1517, 1.0
      %v1581 = vadd.f32 %v1519, 1.0
      %v1582 = vadd.f32 %v1521, 1.0
      %v1583 = vadd.f32 %v1523, 1.0
      %v1584 = vadd.f32 %v1525, 1.0
      %v1585 = vadd.f32 %v1527, 1.0
      %v1586 = vadd.f32 %v1529, 1.0
      %v1587 = vadd.f32 %v1531, 1.0
      %v1588 = vadd.f32 %v1533, 1.0
      %v1589 = vadd.f32 %v1535, 1.0
      %v1590 = vadd.f32 %v1537, 1.0
      %v1591 = vadd.f32 %v1539, 1.0
      %v1592 = vadd.f32 %v1541, 1.0
      %v1593 = vadd.f32 %v1543, 1.0
      %v1594 = vadd.f32 %v1545, 1.0
      %v1595 = vadd.f32 %v1547, 1.0
      %v1596 = vadd.f32 %v1549, 1.0
      %v1597 = vadd.f32 %v1551, 1.0
      %v1598 = vadd.f32 %v1553, 1.0
      %v1599 = vadd.f32 %v1555, 1.0
      %v1600 = vadd.f32 %v1557, 1.0
      %v1601 = vadd.f32 %v1559, 1.0
      %v1602 = vadd.f32 %v1561, 1.0
      %v1603 = vadd.f32 %v1563, 1.0
      %v1604 = vadd.f32 %v1565, 1.0
      %v1605 = vadd.f32 %v1567, 1.0
      %v1606 = vadd.f32 %v1569, 1.0
      %v1607 = vadd.f32 %v1571, 1.0
      %v1608 = vadd.f32 %v1573, 1.0
      %v1609 = vadd.f32 %v1575, 1.0
      %v1610 = vadd.f32 %v1577, 1.0
      %v1611 = vadd.f32 %v1579, 1.0
      %v1612 = vrcp.pop %v1580
      %v1613 = vmul.f32 %v1580, %v1612
      %v1614 = vsub.f32 1.0, %v1613
      %v1615 = vmul.f32 %v1612, %v1614
      %v1616 = vadd.f32 %v1612, %v1615
      %vm1617 = vweird.f32 %v1580
      %vm1618 = vweird.f32 %v1612
      %vm1619 = vmor %vm1617, %vm1618
      %v1620 = vsel %vm1619, %v1612, %v1616
      %v1621 = vand.u32 2147483647, %v1580
      %vm1622 = vcmp.eq.f32.partialorder %v1621, 8.507059e+37
      %v1623 = vand.u32 %v1580, 2147483648
      %v1624 = vor.u32 1.1754944e-38, %v1623
      %v1625 = vsel %vm1622, %v1624, %v1620
      %v1626 = vmul.f32 1.0, %v1625
      %v1627 = vrcp.pop %v1581
      %v1628 = vmul.f32 %v1581, %v1627
      %v1629 = vsub.f32 1.0, %v1628
      %v1630 = vmul.f32 %v1627, %v1629
      %v1631 = vadd.f32 %v1627, %v1630
      %vm1632 = vweird.f32 %v1581
      %vm1633 = vweird.f32 %v1627
      %vm1634 = vmor %vm1632, %vm1633
      %v1635 = vsel %vm1634, %v1627, %v1631
      %v1636 = vand.u32 2147483647, %v1581
      %vm1637 = vcmp.eq.f32.partialorder %v1636, 8.507059e+37
      %v1638 = vand.u32 %v1581, 2147483648
      %v1639 = vor.u32 1.1754944e-38, %v1638
      %v1640 = vsel %vm1637, %v1639, %v1635
      %v1641 = vmul.f32 1.0, %v1640
      %v1642 = vrcp.pop %v1582
      %v1643 = vmul.f32 %v1582, %v1642
      %v1644 = vsub.f32 1.0, %v1643
      %v1645 = vmul.f32 %v1642, %v1644
      %v1646 = vadd.f32 %v1642, %v1645
      %vm1647 = vweird.f32 %v1582
      %vm1648 = vweird.f32 %v1642
      %vm1649 = vmor %vm1647, %vm1648
      %v1650 = vsel %vm1649, %v1642, %v1646
      %v1651 = vand.u32 2147483647, %v1582
      %vm1652 = vcmp.eq.f32.partialorder %v1651, 8.507059e+37
      %v1653 = vand.u32 %v1582, 2147483648
      %v1654 = vor.u32 1.1754944e-38, %v1653
      %v1655 = vsel %vm1652, %v1654, %v1650
      %v1656 = vmul.f32 1.0, %v1655
      %v1657 = vrcp.pop %v1583
      %v1658 = vmul.f32 %v1583, %v1657
      %v1659 = vsub.f32 1.0, %v1658
      %v1660 = vmul.f32 %v1657, %v1659
      %v1661 = vadd.f32 %v1657, %v1660
      %vm1662 = vweird.f32 %v1583
      %vm1663 = vweird.f32 %v1657
      %vm1664 = vmor %vm1662, %vm1663
      %v1665 = vsel %vm1664, %v1657, %v1661
      %v1666 = vand.u32 2147483647, %v1583
      %vm1667 = vcmp.eq.f32.partialorder %v1666, 8.507059e+37
      %v1668 = vand.u32 %v1583, 2147483648
      %v1669 = vor.u32 1.1754944e-38, %v1668
      %v1670 = vsel %vm1667, %v1669, %v1665
      %v1671 = vmul.f32 1.0, %v1670
      %v1672 = vrcp.pop %v1584
      %v1673 = vmul.f32 %v1584, %v1672
      %v1674 = vsub.f32 1.0, %v1673
      %v1675 = vmul.f32 %v1672, %v1674
      %v1676 = vadd.f32 %v1672, %v1675
      %vm1677 = vweird.f32 %v1584
      %vm1678 = vweird.f32 %v1672
      %vm1679 = vmor %vm1677, %vm1678
      %v1680 = vsel %vm1679, %v1672, %v1676
      %v1681 = vand.u32 2147483647, %v1584
      %vm1682 = vcmp.eq.f32.partialorder %v1681, 8.507059e+37
      %v1683 = vand.u32 %v1584, 2147483648
      %v1684 = vor.u32 1.1754944e-38, %v1683
      %v1685 = vsel %vm1682, %v1684, %v1680
      %v1686 = vmul.f32 1.0, %v1685
      %v1687 = vrcp.pop %v1585
      %v1688 = vmul.f32 %v1585, %v1687
      %v1689 = vsub.f32 1.0, %v1688
      %v1690 = vmul.f32 %v1687, %v1689
      %v1691 = vadd.f32 %v1687, %v1690
      %vm1692 = vweird.f32 %v1585
      %vm1693 = vweird.f32 %v1687
      %vm1694 = vmor %vm1692, %vm1693
      %v1695 = vsel %vm1694, %v1687, %v1691
      %v1696 = vand.u32 2147483647, %v1585
      %vm1697 = vcmp.eq.f32.partialorder %v1696, 8.507059e+37
      %v1698 = vand.u32 %v1585, 2147483648
      %v1699 = vor.u32 1.1754944e-38, %v1698
      %v1700 = vsel %vm1697, %v1699, %v1695
      %v1701 = vmul.f32 1.0, %v1700
      %v1702 = vrcp.pop %v1586
      %v1703 = vmul.f32 %v1586, %v1702
      %v1704 = vsub.f32 1.0, %v1703
      %v1705 = vmul.f32 %v1702, %v1704
      %v1706 = vadd.f32 %v1702, %v1705
      %vm1707 = vweird.f32 %v1586
      %vm1708 = vweird.f32 %v1702
      %vm1709 = vmor %vm1707, %vm1708
      %v1710 = vsel %vm1709, %v1702, %v1706
      %v1711 = vand.u32 2147483647, %v1586
      %vm1712 = vcmp.eq.f32.partialorder %v1711, 8.507059e+37
      %v1713 = vand.u32 %v1586, 2147483648
      %v1714 = vor.u32 1.1754944e-38, %v1713
      %v1715 = vsel %vm1712, %v1714, %v1710
      %v1716 = vmul.f32 1.0, %v1715
      %v1717 = vrcp.pop %v1587
      %v1718 = vmul.f32 %v1587, %v1717
      %v1719 = vsub.f32 1.0, %v1718
      %v1720 = vmul.f32 %v1717, %v1719
      %v1721 = vadd.f32 %v1717, %v1720
      %vm1722 = vweird.f32 %v1587
      %vm1723 = vweird.f32 %v1717
      %vm1724 = vmor %vm1722, %vm1723
      %v1725 = vsel %vm1724, %v1717, %v1721
      %v1726 = vand.u32 2147483647, %v1587
      %vm1727 = vcmp.eq.f32.partialorder %v1726, 8.507059e+37
      %v1728 = vand.u32 %v1587, 2147483648
      %v1729 = vor.u32 1.1754944e-38, %v1728
      %v1730 = vsel %vm1727, %v1729, %v1725
      %v1731 = vmul.f32 1.0, %v1730
      %v1732 = vrcp.pop %v1588
      %v1733 = vmul.f32 %v1588, %v1732
      %v1734 = vsub.f32 1.0, %v1733
      %v1735 = vmul.f32 %v1732, %v1734
      %v1736 = vadd.f32 %v1732, %v1735
      %vm1737 = vweird.f32 %v1588
      %vm1738 = vweird.f32 %v1732
      %vm1739 = vmor %vm1737, %vm1738
      %v1740 = vsel %vm1739, %v1732, %v1736
      %v1741 = vand.u32 2147483647, %v1588
      %vm1742 = vcmp.eq.f32.partialorder %v1741, 8.507059e+37
      %v1743 = vand.u32 %v1588, 2147483648
      %v1744 = vor.u32 1.1754944e-38, %v1743
      %v1745 = vsel %vm1742, %v1744, %v1740
      %v1746 = vmul.f32 1.0, %v1745
      %v1747 = vrcp.pop %v1589
      %v1748 = vmul.f32 %v1589, %v1747
      %v1749 = vsub.f32 1.0, %v1748
      %v1750 = vmul.f32 %v1747, %v1749
      %v1751 = vadd.f32 %v1747, %v1750
      %vm1752 = vweird.f32 %v1589
      %vm1753 = vweird.f32 %v1747
      %vm1754 = vmor %vm1752, %vm1753
      %v1755 = vsel %vm1754, %v1747, %v1751
      %v1756 = vand.u32 2147483647, %v1589
      %vm1757 = vcmp.eq.f32.partialorder %v1756, 8.507059e+37
      %v1758 = vand.u32 %v1589, 2147483648
      %v1759 = vor.u32 1.1754944e-38, %v1758
      %v1760 = vsel %vm1757, %v1759, %v1755
      %v1761 = vmul.f32 1.0, %v1760
      %v1762 = vrcp.pop %v1590
      %v1763 = vmul.f32 %v1590, %v1762
      %v1764 = vsub.f32 1.0, %v1763
      %v1765 = vmul.f32 %v1762, %v1764
      %v1766 = vadd.f32 %v1762, %v1765
      %vm1767 = vweird.f32 %v1590
      %vm1768 = vweird.f32 %v1762
      %vm1769 = vmor %vm1767, %vm1768
      %v1770 = vsel %vm1769, %v1762, %v1766
      %v1771 = vand.u32 2147483647, %v1590
      %vm1772 = vcmp.eq.f32.partialorder %v1771, 8.507059e+37
      %v1773 = vand.u32 %v1590, 2147483648
      %v1774 = vor.u32 1.1754944e-38, %v1773
      %v1775 = vsel %vm1772, %v1774, %v1770
      %v1776 = vmul.f32 1.0, %v1775
      %v1777 = vrcp.pop %v1591
      %v1778 = vmul.f32 %v1591, %v1777
      %v1779 = vsub.f32 1.0, %v1778
      %v1780 = vmul.f32 %v1777, %v1779
      %v1781 = vadd.f32 %v1777, %v1780
      %vm1782 = vweird.f32 %v1591
      %vm1783 = vweird.f32 %v1777
      %vm1784 = vmor %vm1782, %vm1783
      %v1785 = vsel %vm1784, %v1777, %v1781
      %v1786 = vand.u32 2147483647, %v1591
      %vm1787 = vcmp.eq.f32.partialorder %v1786, 8.507059e+37
      %v1788 = vand.u32 %v1591, 2147483648
      %v1789 = vor.u32 1.1754944e-38, %v1788
      %v1790 = vsel %vm1787, %v1789, %v1785
      %v1791 = vmul.f32 1.0, %v1790
      %v1792 = vrcp.pop %v1592
      %v1793 = vmul.f32 %v1592, %v1792
      %v1794 = vsub.f32 1.0, %v1793
      %v1795 = vmul.f32 %v1792, %v1794
      %v1796 = vadd.f32 %v1792, %v1795
      %vm1797 = vweird.f32 %v1592
      %vm1798 = vweird.f32 %v1792
      %vm1799 = vmor %vm1797, %vm1798
      %v1800 = vsel %vm1799, %v1792, %v1796
      %v1801 = vand.u32 2147483647, %v1592
      %vm1802 = vcmp.eq.f32.partialorder %v1801, 8.507059e+37
      %v1803 = vand.u32 %v1592, 2147483648
      %v1804 = vor.u32 1.1754944e-38, %v1803
      %v1805 = vsel %vm1802, %v1804, %v1800
      %v1806 = vmul.f32 1.0, %v1805
      %v1807 = vrcp.pop %v1593
      %v1808 = vmul.f32 %v1593, %v1807
      %v1809 = vsub.f32 1.0, %v1808
      %v1810 = vmul.f32 %v1807, %v1809
      %v1811 = vadd.f32 %v1807, %v1810
      %vm1812 = vweird.f32 %v1593
      %vm1813 = vweird.f32 %v1807
      %vm1814 = vmor %vm1812, %vm1813
      %v1815 = vsel %vm1814, %v1807, %v1811
      %v1816 = vand.u32 2147483647, %v1593
      %vm1817 = vcmp.eq.f32.partialorder %v1816, 8.507059e+37
      %v1818 = vand.u32 %v1593, 2147483648
      %v1819 = vor.u32 1.1754944e-38, %v1818
      %v1820 = vsel %vm1817, %v1819, %v1815
      %v1821 = vmul.f32 1.0, %v1820
      %v1822 = vrcp.pop %v1594
      %v1823 = vmul.f32 %v1594, %v1822
      %v1824 = vsub.f32 1.0, %v1823
      %v1825 = vmul.f32 %v1822, %v1824
      %v1826 = vadd.f32 %v1822, %v1825
      %vm1827 = vweird.f32 %v1594
      %vm1828 = vweird.f32 %v1822
      %vm1829 = vmor %vm1827, %vm1828
      %v1830 = vsel %vm1829, %v1822, %v1826
      %v1831 = vand.u32 2147483647, %v1594
      %vm1832 = vcmp.eq.f32.partialorder %v1831, 8.507059e+37
      %v1833 = vand.u32 %v1594, 2147483648
      %v1834 = vor.u32 1.1754944e-38, %v1833
      %v1835 = vsel %vm1832, %v1834, %v1830
      %v1836 = vmul.f32 1.0, %v1835
      %v1837 = vrcp.pop %v1595
      %v1838 = vmul.f32 %v1595, %v1837
      %v1839 = vsub.f32 1.0, %v1838
      %v1840 = vmul.f32 %v1837, %v1839
      %v1841 = vadd.f32 %v1837, %v1840
      %vm1842 = vweird.f32 %v1595
      %vm1843 = vweird.f32 %v1837
      %vm1844 = vmor %vm1842, %vm1843
      %v1845 = vsel %vm1844, %v1837, %v1841
      %v1846 = vand.u32 2147483647, %v1595
      %vm1847 = vcmp.eq.f32.partialorder %v1846, 8.507059e+37
      %v1848 = vand.u32 %v1595, 2147483648
      %v1849 = vor.u32 1.1754944e-38, %v1848
      %v1850 = vsel %vm1847, %v1849, %v1845
      %v1851 = vmul.f32 1.0, %v1850
      %v1852 = vrcp.pop %v1596
      %v1853 = vmul.f32 %v1596, %v1852
      %v1854 = vsub.f32 1.0, %v1853
      %v1855 = vmul.f32 %v1852, %v1854
      %v1856 = vadd.f32 %v1852, %v1855
      %vm1857 = vweird.f32 %v1596
      %vm1858 = vweird.f32 %v1852
      %vm1859 = vmor %vm1857, %vm1858
      %v1860 = vsel %vm1859, %v1852, %v1856
      %v1861 = vand.u32 2147483647, %v1596
      %vm1862 = vcmp.eq.f32.partialorder %v1861, 8.507059e+37
      %v1863 = vand.u32 %v1596, 2147483648
      %v1864 = vor.u32 1.1754944e-38, %v1863
      %v1865 = vsel %vm1862, %v1864, %v1860
      %v1866 = vmul.f32 1.0, %v1865
      %v1867 = vrcp.pop %v1597
      %v1868 = vmul.f32 %v1597, %v1867
      %v1869 = vsub.f32 1.0, %v1868
      %v1870 = vmul.f32 %v1867, %v1869
      %v1871 = vadd.f32 %v1867, %v1870
      %vm1872 = vweird.f32 %v1597
      %vm1873 = vweird.f32 %v1867
      %vm1874 = vmor %vm1872, %vm1873
      %v1875 = vsel %vm1874, %v1867, %v1871
      %v1876 = vand.u32 2147483647, %v1597
      %vm1877 = vcmp.eq.f32.partialorder %v1876, 8.507059e+37
      %v1878 = vand.u32 %v1597, 2147483648
      %v1879 = vor.u32 1.1754944e-38, %v1878
      %v1880 = vsel %vm1877, %v1879, %v1875
      %v1881 = vmul.f32 1.0, %v1880
      %v1882 = vrcp.pop %v1598
      %v1883 = vmul.f32 %v1598, %v1882
      %v1884 = vsub.f32 1.0, %v1883
      %v1885 = vmul.f32 %v1882, %v1884
      %v1886 = vadd.f32 %v1882, %v1885
      %vm1887 = vweird.f32 %v1598
      %vm1888 = vweird.f32 %v1882
      %vm1889 = vmor %vm1887, %vm1888
      %v1890 = vsel %vm1889, %v1882, %v1886
      %v1891 = vand.u32 2147483647, %v1598
      %vm1892 = vcmp.eq.f32.partialorder %v1891, 8.507059e+37
      %v1893 = vand.u32 %v1598, 2147483648
      %v1894 = vor.u32 1.1754944e-38, %v1893
      %v1895 = vsel %vm1892, %v1894, %v1890
      %v1896 = vmul.f32 1.0, %v1895
      %v1897 = vrcp.pop %v1599
      %v1898 = vmul.f32 %v1599, %v1897
      %v1899 = vsub.f32 1.0, %v1898
      %v1900 = vmul.f32 %v1897, %v1899
      %v1901 = vadd.f32 %v1897, %v1900
      %vm1902 = vweird.f32 %v1599
      %vm1903 = vweird.f32 %v1897
      %vm1904 = vmor %vm1902, %vm1903
      %v1905 = vsel %vm1904, %v1897, %v1901
      %v1906 = vand.u32 2147483647, %v1599
      %vm1907 = vcmp.eq.f32.partialorder %v1906, 8.507059e+37
      %v1908 = vand.u32 %v1599, 2147483648
      %v1909 = vor.u32 1.1754944e-38, %v1908
      %v1910 = vsel %vm1907, %v1909, %v1905
      %v1911 = vmul.f32 1.0, %v1910
      %v1912 = vrcp.pop %v1600
      %v1913 = vmul.f32 %v1600, %v1912
      %v1914 = vsub.f32 1.0, %v1913
      %v1915 = vmul.f32 %v1912, %v1914
      %v1916 = vadd.f32 %v1912, %v1915
      %vm1917 = vweird.f32 %v1600
      %vm1918 = vweird.f32 %v1912
      %vm1919 = vmor %vm1917, %vm1918
      %v1920 = vsel %vm1919, %v1912, %v1916
      %v1921 = vand.u32 2147483647, %v1600
      %vm1922 = vcmp.eq.f32.partialorder %v1921, 8.507059e+37
      %v1923 = vand.u32 %v1600, 2147483648
      %v1924 = vor.u32 1.1754944e-38, %v1923
      %v1925 = vsel %vm1922, %v1924, %v1920
      %v1926 = vmul.f32 1.0, %v1925
      %v1927 = vrcp.pop %v1601
      %v1928 = vmul.f32 %v1601, %v1927
      %v1929 = vsub.f32 1.0, %v1928
      %v1930 = vmul.f32 %v1927, %v1929
      %v1931 = vadd.f32 %v1927, %v1930
      %vm1932 = vweird.f32 %v1601
      %vm1933 = vweird.f32 %v1927
      %vm1934 = vmor %vm1932, %vm1933
      %v1935 = vsel %vm1934, %v1927, %v1931
      %v1936 = vand.u32 2147483647, %v1601
      %vm1937 = vcmp.eq.f32.partialorder %v1936, 8.507059e+37
      %v1938 = vand.u32 %v1601, 2147483648
      %v1939 = vor.u32 1.1754944e-38, %v1938
      %v1940 = vsel %vm1937, %v1939, %v1935
      %v1941 = vmul.f32 1.0, %v1940
      %v1942 = vrcp.pop %v1602
      %v1943 = vmul.f32 %v1602, %v1942
      %v1944 = vsub.f32 1.0, %v1943
      %v1945 = vmul.f32 %v1942, %v1944
      %v1946 = vadd.f32 %v1942, %v1945
      %vm1947 = vweird.f32 %v1602
      %vm1948 = vweird.f32 %v1942
      %vm1949 = vmor %vm1947, %vm1948
      %v1950 = vsel %vm1949, %v1942, %v1946
      %v1951 = vand.u32 2147483647, %v1602
      %vm1952 = vcmp.eq.f32.partialorder %v1951, 8.507059e+37
      %v1953 = vand.u32 %v1602, 2147483648
      %v1954 = vor.u32 1.1754944e-38, %v1953
      %v1955 = vsel %vm1952, %v1954, %v1950
      %v1956 = vmul.f32 1.0, %v1955
      %v1957 = vrcp.pop %v1603
      %v1958 = vmul.f32 %v1603, %v1957
      %v1959 = vsub.f32 1.0, %v1958
      %v1960 = vmul.f32 %v1957, %v1959
      %v1961 = vadd.f32 %v1957, %v1960
      %vm1962 = vweird.f32 %v1603
      %vm1963 = vweird.f32 %v1957
      %vm1964 = vmor %vm1962, %vm1963
      %v1965 = vsel %vm1964, %v1957, %v1961
      %v1966 = vand.u32 2147483647, %v1603
      %vm1967 = vcmp.eq.f32.partialorder %v1966, 8.507059e+37
      %v1968 = vand.u32 %v1603, 2147483648
      %v1969 = vor.u32 1.1754944e-38, %v1968
      %v1970 = vsel %vm1967, %v1969, %v1965
      %v1971 = vmul.f32 1.0, %v1970
      %v1972 = vrcp.pop %v1604
      %v1973 = vmul.f32 %v1604, %v1972
      %v1974 = vsub.f32 1.0, %v1973
      %v1975 = vmul.f32 %v1972, %v1974
      %v1976 = vadd.f32 %v1972, %v1975
      %vm1977 = vweird.f32 %v1604
      %vm1978 = vweird.f32 %v1972
      %vm1979 = vmor %vm1977, %vm1978
      %v1980 = vsel %vm1979, %v1972, %v1976
      %v1981 = vand.u32 2147483647, %v1604
      %vm1982 = vcmp.eq.f32.partialorder %v1981, 8.507059e+37
      %v1983 = vand.u32 %v1604, 2147483648
      %v1984 = vor.u32 1.1754944e-38, %v1983
      %v1985 = vsel %vm1982, %v1984, %v1980
      %v1986 = vmul.f32 1.0, %v1985
      %v1987 = vrcp.pop %v1605
      %v1988 = vmul.f32 %v1605, %v1987
      %v1989 = vsub.f32 1.0, %v1988
      %v1990 = vmul.f32 %v1987, %v1989
      %v1991 = vadd.f32 %v1987, %v1990
      %vm1992 = vweird.f32 %v1605
      %vm1993 = vweird.f32 %v1987
      %vm1994 = vmor %vm1992, %vm1993
      %v1995 = vsel %vm1994, %v1987, %v1991
      %v1996 = vand.u32 2147483647, %v1605
      %vm1997 = vcmp.eq.f32.partialorder %v1996, 8.507059e+37
      %v1998 = vand.u32 %v1605, 2147483648
      %v1999 = vor.u32 1.1754944e-38, %v1998
      %v2000 = vsel %vm1997, %v1999, %v1995
      %v2001 = vmul.f32 1.0, %v2000
      %v2002 = vrcp.pop %v1606
      %v2003 = vmul.f32 %v1606, %v2002
      %v2004 = vsub.f32 1.0, %v2003
      %v2005 = vmul.f32 %v2002, %v2004
      %v2006 = vadd.f32 %v2002, %v2005
      %vm2007 = vweird.f32 %v1606
      %vm2008 = vweird.f32 %v2002
      %vm2009 = vmor %vm2007, %vm2008
      %v2010 = vsel %vm2009, %v2002, %v2006
      %v2011 = vand.u32 2147483647, %v1606
      %vm2012 = vcmp.eq.f32.partialorder %v2011, 8.507059e+37
      %v2013 = vand.u32 %v1606, 2147483648
      %v2014 = vor.u32 1.1754944e-38, %v2013
      %v2015 = vsel %vm2012, %v2014, %v2010
      %v2016 = vmul.f32 1.0, %v2015
      %v2017 = vrcp.pop %v1607
      %v2018 = vmul.f32 %v1607, %v2017
      %v2019 = vsub.f32 1.0, %v2018
      %v2020 = vmul.f32 %v2017, %v2019
      %v2021 = vadd.f32 %v2017, %v2020
      %vm2022 = vweird.f32 %v1607
      %vm2023 = vweird.f32 %v2017
      %vm2024 = vmor %vm2022, %vm2023
      %v2025 = vsel %vm2024, %v2017, %v2021
      %v2026 = vand.u32 2147483647, %v1607
      %vm2027 = vcmp.eq.f32.partialorder %v2026, 8.507059e+37
      %v2028 = vand.u32 %v1607, 2147483648
      %v2029 = vor.u32 1.1754944e-38, %v2028
      %v2030 = vsel %vm2027, %v2029, %v2025
      %v2031 = vmul.f32 1.0, %v2030
      %v2032 = vrcp.pop %v1608
      %v2033 = vmul.f32 %v1608, %v2032
      %v2034 = vsub.f32 1.0, %v2033
      %v2035 = vmul.f32 %v2032, %v2034
      %v2036 = vadd.f32 %v2032, %v2035
      %vm2037 = vweird.f32 %v1608
      %vm2038 = vweird.f32 %v2032
      %vm2039 = vmor %vm2037, %vm2038
      %v2040 = vsel %vm2039, %v2032, %v2036
      %v2041 = vand.u32 2147483647, %v1608
      %vm2042 = vcmp.eq.f32.partialorder %v2041, 8.507059e+37
      %v2043 = vand.u32 %v1608, 2147483648
      %v2044 = vor.u32 1.1754944e-38, %v2043
      %v2045 = vsel %vm2042, %v2044, %v2040
      %v2046 = vmul.f32 1.0, %v2045
      %v2047 = vrcp.pop %v1609
      %v2048 = vmul.f32 %v1609, %v2047
      %v2049 = vsub.f32 1.0, %v2048
      %v2050 = vmul.f32 %v2047, %v2049
      %v2051 = vadd.f32 %v2047, %v2050
      %vm2052 = vweird.f32 %v1609
      %vm2053 = vweird.f32 %v2047
      %vm2054 = vmor %vm2052, %vm2053
      %v2055 = vsel %vm2054, %v2047, %v2051
      %v2056 = vand.u32 2147483647, %v1609
      %vm2057 = vcmp.eq.f32.partialorder %v2056, 8.507059e+37
      %v2058 = vand.u32 %v1609, 2147483648
      %v2059 = vor.u32 1.1754944e-38, %v2058
      %v2060 = vsel %vm2057, %v2059, %v2055
      %v2061 = vmul.f32 1.0, %v2060
      %v2062 = vrcp.pop %v1610
      %v2063 = vmul.f32 %v1610, %v2062
      %v2064 = vsub.f32 1.0, %v2063
      %v2065 = vmul.f32 %v2062, %v2064
      %v2066 = vadd.f32 %v2062, %v2065
      %vm2067 = vweird.f32 %v1610
      %vm2068 = vweird.f32 %v2062
      %vm2069 = vmor %vm2067, %vm2068
      %v2070 = vsel %vm2069, %v2062, %v2066
      %v2071 = vand.u32 2147483647, %v1610
      %vm2072 = vcmp.eq.f32.partialorder %v2071, 8.507059e+37
      %v2073 = vand.u32 %v1610, 2147483648
      %v2074 = vor.u32 1.1754944e-38, %v2073
      %v2075 = vsel %vm2072, %v2074, %v2070
      %v2076 = vmul.f32 1.0, %v2075
      %v2077 = vrcp.pop %v1611
      %v2078 = vmul.f32 %v1611, %v2077
      %v2079 = vsub.f32 1.0, %v2078
      %v2080 = vmul.f32 %v2077, %v2079
      %v2081 = vadd.f32 %v2077, %v2080
      %vm2082 = vweird.f32 %v1611
      %vm2083 = vweird.f32 %v2077
      %vm2084 = vmor %vm2082, %vm2083
      %v2085 = vsel %vm2084, %v2077, %v2081
      %v2086 = vand.u32 2147483647, %v1611
      %vm2087 = vcmp.eq.f32.partialorder %v2086, 8.507059e+37
      %v2088 = vand.u32 %v1611, 2147483648
      %v2089 = vor.u32 1.1754944e-38, %v2088
      %v2090 = vsel %vm2087, %v2089, %v2085
      %v2091 = vmul.f32 1.0, %v2090
      %v2092 = vmul.f32 %v1452, %v1626
      %v2093 = vmul.f32 %v1453, %v1641
      %v2094 = vmul.f32 %v1454, %v1656
      %v2095 = vmul.f32 %v1455, %v1671
      %v2096 = vmul.f32 %v1456, %v1686
      %v2097 = vmul.f32 %v1457, %v1701
      %v2098 = vmul.f32 %v1458, %v1716
      %v2099 = vmul.f32 %v1459, %v1731
      %v2100 = vmul.f32 %v1460, %v1746
      %v2101 = vmul.f32 %v1461, %v1761
      %v2102 = vmul.f32 %v1462, %v1776
      %v2103 = vmul.f32 %v1463, %v1791
      %v2104 = vmul.f32 %v1464, %v1806
      %v2105 = vmul.f32 %v1465, %v1821
      %v2106 = vmul.f32 %v1466, %v1836
      %v2107 = vmul.f32 %v1467, %v1851
      %v2108 = vmul.f32 %v1468, %v1866
      %v2109 = vmul.f32 %v1469, %v1881
      %v2110 = vmul.f32 %v1470, %v1896
      %v2111 = vmul.f32 %v1471, %v1911
      %v2112 = vmul.f32 %v1472, %v1926
      %v2113 = vmul.f32 %v1473, %v1941
      %v2114 = vmul.f32 %v1474, %v1956
      %v2115 = vmul.f32 %v1475, %v1971
      %v2116 = vmul.f32 %v1476, %v1986
      %v2117 = vmul.f32 %v1477, %v2001
      %v2118 = vmul.f32 %v1478, %v2016
      %v2119 = vmul.f32 %v1479, %v2031
      %v2120 = vmul.f32 %v1480, %v2046
      %v2121 = vmul.f32 %v1481, %v2061
      %v2122 = vmul.f32 %v1482, %v2076
      %v2123 = vmul.f32 %v1483, %v2091
      %vm2124 = vcmask 130048
      %2125 = vst.msk [vmem:[%s400] sm:$0xff] %vm2124, %v2092
      %2126 = vst.msk [vmem:[%s400 + $0x8] sm:$0xff] %vm2124, %v2093
      %2127 = vst.msk [vmem:[%s400 + $0x10] sm:$0xff] %vm2124, %v2094
      %2128 = vst.msk [vmem:[%s400 + $0x18] sm:$0xff] %vm2124, %v2095
      %2129 = vst.msk [vmem:[%s400 + $0x20] sm:$0xff] %vm2124, %v2096
      %2130 = vst.msk [vmem:[%s400 + $0x28] sm:$0xff] %vm2124, %v2097
      %2131 = vst.msk [vmem:[%s400 + $0x30] sm:$0xff] %vm2124, %v2098
      %2132 = vst.msk [vmem:[%s400 + $0x38] sm:$0xff] %vm2124, %v2099
      %2133 = vst.msk [vmem:[%s400 + $0x40] sm:$0xff] %vm2124, %v2100
      %2134 = vst.msk [vmem:[%s400 + $0x48] sm:$0xff] %vm2124, %v2101
      %2135 = vst.msk [vmem:[%s400 + $0x50] sm:$0xff] %vm2124, %v2102
      %2136 = vst.msk [vmem:[%s400 + $0x58] sm:$0xff] %vm2124, %v2103
      %2137 = vst.msk [vmem:[%s400 + $0x60] sm:$0xff] %vm2124, %v2104
      %2138 = vst.msk [vmem:[%s400 + $0x68] sm:$0xff] %vm2124, %v2105
      %2139 = vst.msk [vmem:[%s400 + $0x70] sm:$0xff] %vm2124, %v2106
      %2140 = vst.msk [vmem:[%s400 + $0x78] sm:$0xff] %vm2124, %v2107
      %2141 = vst.msk [vmem:[%s400 + $0x80] sm:$0xff] %vm2124, %v2108
      %2142 = vst.msk [vmem:[%s400 + $0x88] sm:$0xff] %vm2124, %v2109
      %2143 = vst.msk [vmem:[%s400 + $0x90] sm:$0xff] %vm2124, %v2110
      %2144 = vst.msk [vmem:[%s400 + $0x98] sm:$0xff] %vm2124, %v2111
      %2145 = vst.msk [vmem:[%s400 + $0xa0] sm:$0xff] %vm2124, %v2112
      %2146 = vst.msk [vmem:[%s400 + $0xa8] sm:$0xff] %vm2124, %v2113
      %2147 = vst.msk [vmem:[%s400 + $0xb0] sm:$0xff] %vm2124, %v2114
      %2148 = vst.msk [vmem:[%s400 + $0xb8] sm:$0xff] %vm2124, %v2115
      %2149 = vst.msk [vmem:[%s400 + $0xc0] sm:$0xff] %vm2124, %v2116
      %2150 = vst.msk [vmem:[%s400 + $0xc8] sm:$0xff] %vm2124, %v2117
      %2151 = vst.msk [vmem:[%s400 + $0xd0] sm:$0xff] %vm2124, %v2118
      %2152 = vst.msk [vmem:[%s400 + $0xd8] sm:$0xff] %vm2124, %v2119
      %2153 = vst.msk [vmem:[%s400 + $0xe0] sm:$0xff] %vm2124, %v2120
      %2154 = vst.msk [vmem:[%s400 + $0xe8] sm:$0xff] %vm2124, %v2121
      %2155 = vst.msk [vmem:[%s400 + $0xf0] sm:$0xff] %vm2124, %v2122
      %2156 = vst.msk [vmem:[%s400 + $0xf8] sm:$0xff] %vm2124, %v2123
      %s2157 = smul.u32 32, %s20
      %p2158 = scmp.lt.s32.totalorder %s2157, 63
      %s2159 = scalar_select %p2158, %s2157, 63
      %s2160 = smul.addr %s2159, 8
      %s2161 = scalar_lea.vmem %s9, %s2160
      // Predicated region
      $region57: #{elanb_forward.11} parent=55 // pred_check
        %p2162 = pneg %p247
      $region58: #{elanb_forward.11} parent=55 // pred_check_branch
        %2164 = sbr.rel (%p2162) target = $region60
      $region59: #{elanb_forward.11} parent=55 // pred_region
        %s2165 = smul.u32 32, %s20
      $region60: #{elanb_forward.11} parent=55 // pred_fallthru
        _
    $region56: #{elanb_forward.11} parent=5 // pred_fallthru
      _
    %p2166 = scmp.le.s32.totalorder 2, %s15
    // Predicated region
    $region61: #{elanb_forward.11} parent=5 // pred_check
      %p2167 = pneg %p2166
    $region62: #{elanb_forward.11} parent=5 // pred_check_branch
      %2169 = sbr.rel (%p2167) target = $region64
    $region63: #{elanb_forward.11} parent=5 // pred_region
      %s2170 = ssub.s32 %s15, 2
      // Predicated region
      $region65: #{elanb_forward.11} parent=63 // pred_check
        %p2171 = pneg %p253
      $region66: #{elanb_forward.11} parent=63 // pred_check_branch
        %2173 = sbr.rel (%p2171) target = $region68
      $region67: #{elanb_forward.11} parent=63 // pred_region
        %s2174 = smul.u32 32, %s21
        %p2175 = scmp.lt.s32.totalorder %s2174, 63
        %s2176 = scalar_select %p2175, %s2174, 63
        %s2177 = smul.addr %s2176, 8
        %s2178 = scalar_lea.vmem %s9, %s2177
      $region68: #{elanb_forward.11} parent=63 // pred_fallthru
        _
    $region64: #{elanb_forward.11} parent=5 // pred_fallthru
      _
  $region6: #{elanb_forward.11} parent=0 // loop_footer
    %s19 = sadd.s32 1, %s15
  $region7: #{elanb_forward.11} parent=0 // loop_footer_branch
    %14 = sbr.rel target = $region3
  $region8: #{elanb_forward.11} parent=0 // loop_exit
    _

</llo_original>
